<compile_context>
chip_gen: v7x
topology: tpu7x:2x2x1
jax: 0.10.0
libtpu: 0.0.40
codegen_flags: <defaults>
</compile_context>

<pallas_src>
import jax
import jax.numpy as jnp
from jax.experimental import pallas as pl
from jax.experimental.pallas import tpu as pltpu


def _round_up(x, m):
    return (x + m - 1) // m * m


def _pick_time_block(T, Bblk, Din, Hp, budget_bytes=44 * 1024 * 1024):
    """Pick timesteps-per-grid-step from a VMEM budget (v7x-safe; 64 MiB physical)."""
    G = 3 * Hp
    fixed = 2 * (Din * G + Hp * G) * 2          # W_ih / W_hh (bf16), double-buffered
    fixed += 4 * Bblk * Hp * 4                  # h scratch + final-hidden output (f32)
    per_t = 2 * Bblk * (Din + Hp) * 2           # x + y streams (bf16), double-buffered
    per_t += Bblk * G * 4                       # gi scratch (f32, single buffer)
    tt = (budget_bytes - fixed) // max(per_t, 1)
    tt = int(max(8, min(tt, 128, _round_up(T, 8))))
    return (tt // 8) * 8


# ----------------------------- Pallas kernel -------------------------------- #
def gru_fused_kernel(maxlen_ref, lens_ref, x_ref, wih_ref, whh_ref, bias_ref, bhn_ref,
                     y_ref, hfin_ref, gi_scratch, h_scratch):
    """One GRU layer: fused input projection (per time-block GEMM) + sequential recurrence.

    Grid = (batch blocks [parallel], time blocks [arbitrary]).  W_ih / W_hh / biases use
    constant index maps so they stay VMEM-resident; x / y stream per block in bf16.
    """
    tb = pl.program_id(1)
    Tt, Bblk, Din = x_ref.shape
    Hp = whh_ref.shape[0]
    t0 = tb * Tt

    @pl.when(tb == 0)
    def _():
        h_scratch[...] = jnp.zeros_like(h_scratch)

    max_len = maxlen_ref[0]

    @pl.when(t0 < max_len)
    def _():
        # Fused input projection for the whole time block: one lane-dense MXU GEMM,
        # bf16 operands, f32 accumulation; combined bias (b_ih + b_hh[r,z]) added once.
        x2d = x_ref[...].reshape(Tt * Bblk, Din)
        gi = jnp.dot(x2d, wih_ref[...], preferred_element_type=jnp.float32)
        gi_scratch[...] = (gi + bias_ref[...]).reshape(Tt, Bblk, 3 * Hp)

        # Loop-invariant loads hoisted out of the timestep loop.
        lens = lens_ref[...]            # (Bblk, 1) int32
        whh = whh_ref[...]              # (Hp, 3*Hp) bf16
        bhn = bhn_ref[...]              # (1, Hp) f32 : n-gate hidden bias

        def step(tt, h):
            g = gi_scratch[tt]          # (Bblk, 3*Hp) f32
            gh = jnp.dot(h.astype(jnp.bfloat16), whh,
                         preferred_element_type=jnp.float32)
            # PyTorch gate order [r, z, n]; each slice is a 128-aligned lane block.
            r = jax.nn.sigmoid(g[:, :Hp] + gh[:, :Hp])
            z = jax.nn.sigmoid(g[:, Hp:2 * Hp] + gh[:, Hp:2 * Hp])
            n = jnp.tanh(g[:, 2 * Hp:] + r * (gh[:, 2 * Hp:] + bhn))
            h_new = (1.0 - z) * n + z * h
            # packed-sequence semantics: hold hidden once t >= src_lens[b]
            h_upd = jnp.where((t0 + tt) < lens, h_new, h)
            y_ref[tt] = h_upd.astype(y_ref.dtype)       # lane-dense (Bblk, Hp) store
            return h_upd

        h_scratch[...] = jax.lax.fori_loop(0, Tt, step, h_scratch[...], unroll=8)

    @pl.when(t0 >= max_len)
    def _():
        # Block entirely past every sequence: skip all compute; zero-fill y
        # (matches pad_packed_sequence fill); h_scratch carries unchanged.
        y_ref[...] = jnp.zeros(y_ref.shape, y_ref.dtype)

    # Write the final hidden only once, on the last time block of this batch block.
    @pl.when(tb == pl.num_programs(1) - 1)
    def _():
        hfin_ref[...] = h_scratch[...].astype(hfin_ref.dtype)


def gru_layer(max_len_arr, lens_2d, x_tm, wih_p, whh_p, bias_p, bhn_p, tt_block, b_block):
    """x_tm: (Tp, Bp, Din) bf16 time-major layer input.
    Returns y: (Tp, Bp, Hp) bf16, h_final: (Bp, Hp) f32."""
    Tp, Bp, Din = x_tm.shape
    Hp = whh_p.shape[0]
    G = 3 * Hp
    n_tblocks = Tp // tt_block
    n_bblocks = Bp // b_block

    grid_spec = pltpu.PrefetchScalarGridSpec(
        num_scalar_prefetch=1,                       # max(src_lens) in SMEM
        grid=(n_bblocks, n_tblocks),
        in_specs=[
            pl.BlockSpec((b_block, 1), lambda bb, tb, ml: (bb, 0)),               # lens
            pl.BlockSpec((tt_block, b_block, Din), lambda bb, tb, ml: (tb, bb, 0)),  # x block
            pl.BlockSpec((Din, G), lambda bb, tb, ml: (0, 0)),                    # W_ih^T (resident)
            pl.BlockSpec((Hp, G), lambda bb, tb, ml: (0, 0)),                     # W_hh^T (resident)
            pl.BlockSpec((1, G), lambda bb, tb, ml: (0, 0)),                      # combined bias
            pl.BlockSpec((1, Hp), lambda bb, tb, ml: (0, 0)),                     # b_hh (n gate)
        ],
        out_specs=[
            pl.BlockSpec((tt_block, b_block, Hp), lambda bb, tb, ml: (tb, bb, 0)),  # y (next input)
            pl.BlockSpec((b_block, Hp), lambda bb, tb, ml: (bb, 0)),                # final hidden
        ],
        scratch_shapes=[
            pltpu.VMEM((tt_block, b_block, G), jnp.float32),   # gi for the current block
            pltpu.VMEM((b_block, Hp), jnp.float32),            # running hidden state
        ],
    )

    return pl.pallas_call(
        gru_fused_kernel,
        out_shape=(
            jax.ShapeDtypeStruct((Tp, Bp, Hp), jnp.bfloat16),
            jax.ShapeDtypeStruct((Bp, Hp), jnp.float32),
        ),
        grid_spec=grid_spec,
        compiler_params=pltpu.CompilerParams(
            dimension_semantics=("parallel", "arbitrary"),
            vmem_limit_bytes=64 * 1024 * 1024),
    )(max_len_arr, lens_2d, x_tm, wih_p, whh_p, bias_p, bhn_p)


# ------------------------------ padding helpers ------------------------------ #
def _pad_gate_lanes(w, H, Hp):
    """(..., 3*H) -> (..., 3*Hp) with gate g placed at columns [g*Hp, g*Hp + H)."""
    if H == Hp:
        return w
    parts = []
    for g in range(3):
        blk = w[..., g * H:(g + 1) * H]
        parts.append(jnp.pad(blk, [(0, 0)] * (w.ndim - 1) + [(0, Hp - H)]))
    return jnp.concatenate(parts, axis=-1)


# ------------------------------ Encoder wrapper ------------------------------ #
def init_encoder_params(key, input_dim, emb_dim, hidden_dim, num_layers):
    keys = jax.random.split(key, 1 + 4 * num_layers)
    emb = jax.random.normal(keys[0], (input_dim, emb_dim), jnp.float32)
    scale = 1.0 / jnp.sqrt(hidden_dim)
    layers = []
    for l in range(num_layers):
        din = emb_dim if l == 0 else hidden_dim
        k = keys[1 + 4 * l: 1 + 4 * (l + 1)]
        wih_t = jax.random.uniform(k[0], (din, 3 * hidden_dim), jnp.float32, -scale, scale)
        whh_t = jax.random.uniform(k[1], (hidden_dim, 3 * hidden_dim), jnp.float32, -scale, scale)
        bih = jax.random.uniform(k[2], (1, 3 * hidden_dim), jnp.float32, -scale, scale)
        bhh = jax.random.uniform(k[3], (1, 3 * hidden_dim), jnp.float32, -scale, scale)
        layers.append((wih_t, whh_t, bih, bhh))
    return emb, layers


@jax.jit
def encoder_forward(src, src_lens, emb, layers):
    B, T = src.shape
    H = layers[0][1].shape[0]

    n_bblocks = 2 if B > 16 else 1                 # batch split across TCs (v7x); 1 otherwise
    Bp = _round_up(B, 16 * n_bblocks)              # bf16 sublane quantum per batch block
    Bblk = Bp // n_bblocks
    Hp = _round_up(H, 128)                         # lane-dense gates / outputs
    Tt = _pick_time_block(T, Bblk, Hp, Hp)         # timesteps per grid step, VMEM-budgeted
    Tp = _round_up(T, Tt)

    # ---- glue (plain XLA): embedding lookup, time-major layout, padding, bf16 cast ----
    embedded = jnp.take(emb, src, axis=0)                      # (B, T, E)
    x_tm = jnp.transpose(embedded, (1, 0, 2))                  # (T, B, E)
    x_tm = jnp.pad(x_tm, ((0, Tp - T), (0, Bp - B), (0, 0)))   # (Tp, Bp, E)
    x_tm = x_tm.astype(jnp.bfloat16)

    lens_2d = jnp.pad(src_lens.astype(jnp.int32), (0, Bp - B))[:, None]   # (Bp, 1)
    max_len_arr = jnp.max(src_lens).astype(jnp.int32)[None]               # (1,) scalar prefetch

    finals = []
    for (wih_t, whh_t, bih, bhh) in layers:
        din_pad = x_tm.shape[-1]
        if wih_t.shape[0] != din_pad:                          # layers > 0: input is padded Hp
            wih_t = jnp.pad(wih_t, ((0, din_pad - wih_t.shape[0]), (0, 0)))
        wih_p = _pad_gate_lanes(wih_t, H, Hp).astype(jnp.bfloat16)            # (Din_pad, 3*Hp)
        whh_p = _pad_gate_lanes(
            jnp.pad(whh_t, ((0, Hp - H), (0, 0))), H, Hp).astype(jnp.bfloat16)  # (Hp, 3*Hp)
        # Fold b_hh of the r,z gates into the gi bias; keep n-gate b_hh separate
        # (it sits inside the r * (...) term in the GRU cell).
        bias_comb = jnp.concatenate(
            [bih[:, :2 * H] + bhh[:, :2 * H], bih[:, 2 * H:]], axis=-1)       # (1, 3*H) f32
        bias_p = _pad_gate_lanes(bias_comb, H, Hp)                            # (1, 3*Hp) f32
        bhn_p = jnp.pad(bhh[:, 2 * H:], ((0, 0), (0, Hp - H)))                # (1, Hp) f32

        y_tm, h_fin = gru_layer(max_len_arr, lens_2d, x_tm,
                                wih_p, whh_p, bias_p, bhn_p, Tt, Bblk)
        x_tm = y_tm                                            # bf16 inter-layer activations
        finals.append(h_fin)

    hidden = jnp.stack(finals, axis=0)                         # (L, Bp, Hp) f32
    return hidden[:, :B, :H]                                   # (L, B, H)


# ------------------------------ pure-JAX reference --------------------------- #
def encoder_reference(src, src_lens, emb, layers):
    embedded = jnp.take(emb, src, axis=0)               # (B, T, E)
    B, T, _ = embedded.shape
    x = embedded
    finals = []
    for (wih_t, whh_t, bih, bhh) in layers:
        H = whh_t.shape[0]

        def step(h, inp, wih_t=wih_t, whh_t=whh_t, bih=bih, bhh=bhh, H=H):
            xt, t = inp
            gi = xt @ wih_t + bih
            gh = h @ whh_t + bhh
            r = jax.nn.sigmoid(gi[:, :H] + gh[:, :H])
            z = jax.nn.sigmoid(gi[:, H:2 * H] + gh[:, H:2 * H])
            n = jnp.tanh(gi[:, 2 * H:] + r * gh[:, 2 * H:])
            h_new = (1.0 - z) * n + z * h
            h_upd = jnp.where((t < src_lens)[:, None], h_new, h)
            return h_upd, h_upd

        x_tm = jnp.transpose(x, (1, 0, 2))
        h_fin, ys = jax.lax.scan(step, jnp.zeros((B, H), jnp.float32),
                                 (x_tm, jnp.arange(T)))
        x = jnp.transpose(ys, (1, 0, 2))
        finals.append(h_fin)
    return jnp.stack(finals, axis=0)


# ---------------------------------- main ------------------------------------ #
if __name__ == "__main__":
    INPUT_DIM, EMB_DIM, HIDDEN_DIM, NUM_LAYERS = 16, 8, 32, 2
    B, T = 2, 8

    key = jax.random.PRNGKey(0)
    k_param, k_src = jax.random.split(key)
    emb, layers = init_encoder_params(k_param, INPUT_DIM, EMB_DIM, HIDDEN_DIM, NUM_LAYERS)

    src = jax.random.randint(k_src, (B, T), 0, INPUT_DIM, dtype=jnp.int32)
    src_lens = jnp.array([8, 5], dtype=jnp.int32)   # variable lengths (packed semantics)

    hidden = encoder_forward(src, src_lens, emb, layers)
    hidden = jax.block_until_ready(hidden)
    assert hidden.shape == (NUM_LAYERS, B, HIDDEN_DIM)

    # bf16 matmul operands / bf16 inter-layer activations -> loosened tolerance vs f32 ref.
    ref = encoder_reference(src, src_lens, emb, layers)
    assert jnp.allclose(hidden, ref, atol=5e-2, rtol=5e-2), "mismatch vs reference"

    # TODO(synk): if cell_type == "LSTM"/"RNN", gate math differs; this kernel implements GRU.
    print("KERNEL_OK")
</pallas_src>

<mosaic_0001>
module attributes {stable_mosaic.version = 11 : i64} {
  func.func @gru_fused_kernel(%arg0: i32, %arg1: i32, %arg2: memref<1xi32, #tpu.memory_space<smem>>, %arg3: memref<16x1xi32, #tpu.memory_space<vmem>>, %arg4: memref<8x16x8xbf16, #tpu.memory_space<vmem>>, %arg5: memref<8x384xbf16, #tpu.memory_space<vmem>>, %arg6: memref<128x384xbf16, #tpu.memory_space<vmem>>, %arg7: memref<1x384xf32, #tpu.memory_space<vmem>>, %arg8: memref<1x128xf32, #tpu.memory_space<vmem>>, %arg9: memref<8x16x128xbf16, #tpu.memory_space<vmem>>, %arg10: memref<16x128xf32, #tpu.memory_space<vmem>>, %arg11: memref<8x16x384xf32, #tpu.memory_space<vmem>>, %arg12: memref<16x128xf32, #tpu.memory_space<vmem>>) attributes {dimension_semantics = [#tpu.dimension_semantics<parallel>, #tpu.dimension_semantics<arbitrary>], iteration_bounds = array<i64: 1, 1>, scalar_prefetch = 1 : i64, scratch_operands = 2 : i64, tpu.core_type = #tpu.core_type<tc>, window_params = [{transform_indices = @transform_0, window_bounds = array<i64: 16, 1>}, {transform_indices = @transform_1, window_bounds = array<i64: 8, 16, 8>}, {pipeline_mode = #tpu.pipeline_mode<synchronous>, transform_indices = @transform_2, window_bounds = array<i64: 8, 384>}, {pipeline_mode = #tpu.pipeline_mode<synchronous>, transform_indices = @transform_3, window_bounds = array<i64: 128, 384>}, {pipeline_mode = #tpu.pipeline_mode<synchronous>, transform_indices = @transform_4, window_bounds = array<i64: 1, 384>}, {pipeline_mode = #tpu.pipeline_mode<synchronous>, transform_indices = @transform_5, window_bounds = array<i64: 1, 128>}, {transform_indices = @transform_6, window_bounds = array<i64: 8, 16, 128>}, {transform_indices = @transform_7, window_bounds = array<i64: 16, 128>}]} {
    %c8_i32 = arith.constant 8 : i32
    %0 = arith.muli %arg1, %c8_i32 : i32
    %c0_i32 = arith.constant 0 : i32
    %1 = arith.cmpi eq, %arg1, %c0_i32 : i32
    %2 = arith.extui %1 : i1 to i32
    %c0_i32_0 = arith.constant 0 : i32
    %3 = arith.cmpi ne, %2, %c0_i32_0 : i32
    scf.if %3 {
      %cst = arith.constant 0.000000e+00 : f32
      %14 = vector.broadcast %cst : f32 to vector<16x128xf32>
      %c0_5 = arith.constant 0 : index
      %c0_6 = arith.constant 0 : index
      %15 = vector.load %arg12[%c0_5, %c0_6] : memref<16x128xf32, #tpu.memory_space<vmem>>, vector<16x128xf32>
      tpu.vector_store %arg12[%c0_5, %c0_6], %14 {strides = array<i32>} : memref<16x128xf32, #tpu.memory_space<vmem>>, vector<16x128xf32>,
    } else {
    }
    %c0 = arith.constant 0 : index
    %4 = memref.load %arg2[%c0] : memref<1xi32, #tpu.memory_space<smem>>
    %5 = arith.cmpi slt, %0, %4 : i32
    %6 = arith.extui %5 : i1 to i32
    %c0_i32_1 = arith.constant 0 : i32
    %7 = arith.cmpi ne, %6, %c0_i32_1 : i32
    scf.if %7 {
      %c0_5 = arith.constant 0 : index
      %c0_6 = arith.constant 0 : index
      %c0_7 = arith.constant 0 : index
      %14 = vector.load %arg4[%c0_5, %c0_6, %c0_7] : memref<8x16x8xbf16, #tpu.memory_space<vmem>>, vector<8x16x8xbf16>
      %15 = vector.shape_cast %14 : vector<8x16x8xbf16> to vector<128x8xbf16>
      %c0_8 = arith.constant 0 : index
      %c0_9 = arith.constant 0 : index
      %16 = vector.load %arg5[%c0_8, %c0_9] : memref<8x384xbf16, #tpu.memory_space<vmem>>, vector<8x384xbf16>
      %cst = arith.constant dense<0.000000e+00> : vector<128x384xf32>
      %17 = tpu.matmul %15, %16, %cst {dimension_numbers = #tpu.dot_dimension_numbers<[1], [0], [0], [1], [0, 0, 1, 1], [], []>} : vector<128x8xbf16>, vector<8x384xbf16>, vector<128x384xf32> -> vector<128x384xf32>
      %c0_10 = arith.constant 0 : index
      %c0_11 = arith.constant 0 : index
      %18 = vector.load %arg7[%c0_10, %c0_11] : memref<1x384xf32, #tpu.memory_space<vmem>>, vector<1x384xf32>
      %19 = vector.broadcast %18 : vector<1x384xf32> to vector<128x384xf32>
      %20 = arith.addf %17, %19 : vector<128x384xf32>
      %21 = vector.shape_cast %20 : vector<128x384xf32> to vector<8x16x384xf32>
      %c0_12 = arith.constant 0 : index
      %c0_13 = arith.constant 0 : index
      %c0_14 = arith.constant 0 : index
      %22 = vector.load %arg11[%c0_12, %c0_13, %c0_14] : memref<8x16x384xf32, #tpu.memory_space<vmem>>, vector<8x16x384xf32>
      tpu.vector_store %arg11[%c0_12, %c0_13, %c0_14], %21 {strides = array<i32>} : memref<8x16x384xf32, #tpu.memory_space<vmem>>, vector<8x16x384xf32>,
      %c0_15 = arith.constant 0 : index
      %c0_16 = arith.constant 0 : index
      %23 = vector.load %arg3[%c0_15, %c0_16] : memref<16x1xi32, #tpu.memory_space<vmem>>, vector<16x1xi32>
      %c0_17 = arith.constant 0 : index
      %c0_18 = arith.constant 0 : index
      %24 = vector.load %arg6[%c0_17, %c0_18] : memref<128x384xbf16, #tpu.memory_space<vmem>>, vector<128x384xbf16>
      %c0_19 = arith.constant 0 : index
      %c0_20 = arith.constant 0 : index
      %25 = vector.load %arg8[%c0_19, %c0_20] : memref<1x128xf32, #tpu.memory_space<vmem>>, vector<1x128xf32>
      %c0_21 = arith.constant 0 : index
      %c0_22 = arith.constant 0 : index
      %26 = vector.load %arg12[%c0_21, %c0_22] : memref<16x128xf32, #tpu.memory_space<vmem>>, vector<16x128xf32>
      %c0_i32_23 = arith.constant 0 : i32
      %27 = arith.index_cast %c0_i32_23 : i32 to index
      %c0_24 = arith.constant 0 : index
      %c0_25 = arith.constant 0 : index
      %28 = vector.load %arg11[%27, %c0_24, %c0_25] : memref<8x16x384xf32, #tpu.memory_space<vmem>>, vector<1x16x384xf32>
      %29 = vector.shape_cast %28 : vector<1x16x384xf32> to vector<16x384xf32>
      %30 = arith.truncf %26 : vector<16x128xf32> to vector<16x128xbf16>
      %cst_26 = arith.constant dense<0.000000e+00> : vector<16x384xf32>
      %31 = tpu.matmul %30, %24, %cst_26 {dimension_numbers = #tpu.dot_dimension_numbers<[1], [0], [0], [1], [0, 0, 1, 1], [], []>} : vector<16x128xbf16>, vector<128x384xbf16>, vector<16x384xf32> -> vector<16x384xf32>
      %32 = vector.extract_strided_slice %29 {offsets = [0, 0], sizes = [16, 128], strides = [1, 1]} : vector<16x384xf32> to vector<16x128xf32>
      %33 = vector.extract_strided_slice %31 {offsets = [0, 0], sizes = [16, 128], strides = [1, 1]} : vector<16x384xf32> to vector<16x128xf32>
      %34 = arith.addf %32, %33 : vector<16x128xf32>
      %35 = arith.negf %34 : vector<16x128xf32>
      %36 = math.exp %35 : vector<16x128xf32>
      %cst_27 = arith.constant 1.000000e+00 : f32
      %37 = vector.broadcast %cst_27 : f32 to vector<16x128xf32>
      %38 = arith.addf %37, %36 : vector<16x128xf32>
      %39 = arith.divf %37, %38 : vector<16x128xf32>
      %40 = vector.extract_strided_slice %29 {offsets = [0, 128], sizes = [16, 128], strides = [1, 1]} : vector<16x384xf32> to vector<16x128xf32>
      %41 = vector.extract_strided_slice %31 {offsets = [0, 128], sizes = [16, 128], strides = [1, 1]} : vector<16x384xf32> to vector<16x128xf32>
      %42 = arith.addf %40, %41 : vector<16x128xf32>
      %43 = arith.negf %42 : vector<16x128xf32>
      %44 = math.exp %43 : vector<16x128xf32>
      %cst_28 = arith.constant 1.000000e+00 : f32
      %45 = vector.broadcast %cst_28 : f32 to vector<16x128xf32>
      %46 = arith.addf %45, %44 : vector<16x128xf32>
      %47 = arith.divf %45, %46 : vector<16x128xf32>
      %48 = vector.extract_strided_slice %29 {offsets = [0, 256], sizes = [16, 128], strides = [1, 1]} : vector<16x384xf32> to vector<16x128xf32>
      %49 = vector.extract_strided_slice %31 {offsets = [0, 256], sizes = [16, 128], strides = [1, 1]} : vector<16x384xf32> to vector<16x128xf32>
      %50 = vector.broadcast %25 : vector<1x128xf32> to vector<16x128xf32>
      %51 = arith.addf %49, %50 : vector<16x128xf32>
      %52 = arith.mulf %39, %51 : vector<16x128xf32>
      %53 = arith.addf %48, %52 : vector<16x128xf32>
      %54 = math.tanh %53 : vector<16x128xf32>
      %cst_29 = arith.constant 1.000000e+00 : f32
      %55 = vector.broadcast %cst_29 : f32 to vector<16x128xf32>
      %56 = arith.subf %55, %47 : vector<16x128xf32>
      %57 = arith.mulf %56, %54 : vector<16x128xf32>
      %58 = arith.mulf %47, %26 : vector<16x128xf32>
      %59 = arith.addf %57, %58 : vector<16x128xf32>
      %60 = arith.addi %0, %c0_i32_23 : i32
      %61 = vector.broadcast %60 : i32 to vector<16x1xi32>
      %62 = arith.cmpi slt, %61, %23 : vector<16x1xi32>
      %63 = vector.shape_cast %62 : vector<16x1xi1> to vector<16x1xi1>
      %64 = vector.broadcast %63 : vector<16x1xi1> to vector<16x128xi1>
      %65 = arith.select %64, %59, %26 : vector<16x128xi1>, vector<16x128xf32>
      %66 = arith.truncf %65 : vector<16x128xf32> to vector<16x128xbf16>
      %67 = arith.index_cast %c0_i32_23 : i32 to index
      %c0_30 = arith.constant 0 : index
      %c0_31 = arith.constant 0 : index
      %68 = vector.load %arg9[%67, %c0_30, %c0_31] : memref<8x16x128xbf16, #tpu.memory_space<vmem>>, vector<1x16x128xbf16>
      %69 = vector.shape_cast %68 : vector<1x16x128xbf16> to vector<16x128xbf16>
      %70 = vector.shape_cast %66 : vector<16x128xbf16> to vector<1x16x128xbf16>
      tpu.vector_store %arg9[%67, %c0_30, %c0_31], %70 {strides = array<i32>} : memref<8x16x128xbf16, #tpu.memory_space<vmem>>, vector<1x16x128xbf16>,
      %c1_i32 = arith.constant 1 : i32
      %71 = arith.index_cast %c1_i32 : i32 to index
      %c0_32 = arith.constant 0 : index
      %c0_33 = arith.constant 0 : index
      %72 = vector.load %arg11[%71, %c0_32, %c0_33] : memref<8x16x384xf32, #tpu.memory_space<vmem>>, vector<1x16x384xf32>
      %73 = vector.shape_cast %72 : vector<1x16x384xf32> to vector<16x384xf32>
      %74 = arith.truncf %65 : vector<16x128xf32> to vector<16x128xbf16>
      %cst_34 = arith.constant dense<0.000000e+00> : vector<16x384xf32>
      %75 = tpu.matmul %74, %24, %cst_34 {dimension_numbers = #tpu.dot_dimension_numbers<[1], [0], [0], [1], [0, 0, 1, 1], [], []>} : vector<16x128xbf16>, vector<128x384xbf16>, vector<16x384xf32> -> vector<16x384xf32>
      %76 = vector.extract_strided_slice %73 {offsets = [0, 0], sizes = [16, 128], strides = [1, 1]} : vector<16x384xf32> to vector<16x128xf32>
      %77 = vector.extract_strided_slice %75 {offsets = [0, 0], sizes = [16, 128], strides = [1, 1]} : vector<16x384xf32> to vector<16x128xf32>
      %78 = arith.addf %76, %77 : vector<16x128xf32>
      %79 = arith.negf %78 : vector<16x128xf32>
      %80 = math.exp %79 : vector<16x128xf32>
      %cst_35 = arith.constant 1.000000e+00 : f32
      %81 = vector.broadcast %cst_35 : f32 to vector<16x128xf32>
      %82 = arith.addf %81, %80 : vector<16x128xf32>
      %83 = arith.divf %81, %82 : vector<16x128xf32>
      %84 = vector.extract_strided_slice %73 {offsets = [0, 128], sizes = [16, 128], strides = [1, 1]} : vector<16x384xf32> to vector<16x128xf32>
      %85 = vector.extract_strided_slice %75 {offsets = [0, 128], sizes = [16, 128], strides = [1, 1]} : vector<16x384xf32> to vector<16x128xf32>
      %86 = arith.addf %84, %85 : vector<16x128xf32>
      %87 = arith.negf %86 : vector<16x128xf32>
      %88 = math.exp %87 : vector<16x128xf32>
      %cst_36 = arith.constant 1.000000e+00 : f32
      %89 = vector.broadcast %cst_36 : f32 to vector<16x128xf32>
      %90 = arith.addf %89, %88 : vector<16x128xf32>
      %91 = arith.divf %89, %90 : vector<16x128xf32>
      %92 = vector.extract_strided_slice %73 {offsets = [0, 256], sizes = [16, 128], strides = [1, 1]} : vector<16x384xf32> to vector<16x128xf32>
      %93 = vector.extract_strided_slice %75 {offsets = [0, 256], sizes = [16, 128], strides = [1, 1]} : vector<16x384xf32> to vector<16x128xf32>
      %94 = vector.broadcast %25 : vector<1x128xf32> to vector<16x128xf32>
      %95 = arith.addf %93, %94 : vector<16x128xf32>
      %96 = arith.mulf %83, %95 : vector<16x128xf32>
      %97 = arith.addf %92, %96 : vector<16x128xf32>
      %98 = math.tanh %97 : vector<16x128xf32>
      %cst_37 = arith.constant 1.000000e+00 : f32
      %99 = vector.broadcast %cst_37 : f32 to vector<16x128xf32>
      %100 = arith.subf %99, %91 : vector<16x128xf32>
      %101 = arith.mulf %100, %98 : vector<16x128xf32>
      %102 = arith.mulf %91, %65 : vector<16x128xf32>
      %103 = arith.addf %101, %102 : vector<16x128xf32>
      %104 = arith.addi %0, %c1_i32 : i32
      %105 = vector.broadcast %104 : i32 to vector<16x1xi32>
      %106 = arith.cmpi slt, %105, %23 : vector<16x1xi32>
      %107 = vector.shape_cast %106 : vector<16x1xi1> to vector<16x1xi1>
      %108 = vector.broadcast %107 : vector<16x1xi1> to vector<16x128xi1>
      %109 = arith.select %108, %103, %65 : vector<16x128xi1>, vector<16x128xf32>
      %110 = arith.truncf %109 : vector<16x128xf32> to vector<16x128xbf16>
      %111 = arith.index_cast %c1_i32 : i32 to index
      %c0_38 = arith.constant 0 : index
      %c0_39 = arith.constant 0 : index
      %112 = vector.load %arg9[%111, %c0_38, %c0_39] : memref<8x16x128xbf16, #tpu.memory_space<vmem>>, vector<1x16x128xbf16>
      %113 = vector.shape_cast %112 : vector<1x16x128xbf16> to vector<16x128xbf16>
      %114 = vector.shape_cast %110 : vector<16x128xbf16> to vector<1x16x128xbf16>
      tpu.vector_store %arg9[%111, %c0_38, %c0_39], %114 {strides = array<i32>} : memref<8x16x128xbf16, #tpu.memory_space<vmem>>, vector<1x16x128xbf16>,
      %c2_i32 = arith.constant 2 : i32
      %115 = arith.index_cast %c2_i32 : i32 to index
      %c0_40 = arith.constant 0 : index
      %c0_41 = arith.constant 0 : index
      %116 = vector.load %arg11[%115, %c0_40, %c0_41] : memref<8x16x384xf32, #tpu.memory_space<vmem>>, vector<1x16x384xf32>
      %117 = vector.shape_cast %116 : vector<1x16x384xf32> to vector<16x384xf32>
      %118 = arith.truncf %109 : vector<16x128xf32> to vector<16x128xbf16>
      %cst_42 = arith.constant dense<0.000000e+00> : vector<16x384xf32>
      %119 = tpu.matmul %118, %24, %cst_42 {dimension_numbers = #tpu.dot_dimension_numbers<[1], [0], [0], [1], [0, 0, 1, 1], [], []>} : vector<16x128xbf16>, vector<128x384xbf16>, vector<16x384xf32> -> vector<16x384xf32>
      %120 = vector.extract_strided_slice %117 {offsets = [0, 0], sizes = [16, 128], strides = [1, 1]} : vector<16x384xf32> to vector<16x128xf32>
      %121 = vector.extract_strided_slice %119 {offsets = [0, 0], sizes = [16, 128], strides = [1, 1]} : vector<16x384xf32> to vector<16x128xf32>
      %122 = arith.addf %120, %121 : vector<16x128xf32>
      %123 = arith.negf %122 : vector<16x128xf32>
      %124 = math.exp %123 : vector<16x128xf32>
      %cst_43 = arith.constant 1.000000e+00 : f32
      %125 = vector.broadcast %cst_43 : f32 to vector<16x128xf32>
      %126 = arith.addf %125, %124 : vector<16x128xf32>
      %127 = arith.divf %125, %126 : vector<16x128xf32>
      %128 = vector.extract_strided_slice %117 {offsets = [0, 128], sizes = [16, 128], strides = [1, 1]} : vector<16x384xf32> to vector<16x128xf32>
      %129 = vector.extract_strided_slice %119 {offsets = [0, 128], sizes = [16, 128], strides = [1, 1]} : vector<16x384xf32> to vector<16x128xf32>
      %130 = arith.addf %128, %129 : vector<16x128xf32>
      %131 = arith.negf %130 : vector<16x128xf32>
      %132 = math.exp %131 : vector<16x128xf32>
      %cst_44 = arith.constant 1.000000e+00 : f32
      %133 = vector.broadcast %cst_44 : f32 to vector<16x128xf32>
      %134 = arith.addf %133, %132 : vector<16x128xf32>
      %135 = arith.divf %133, %134 : vector<16x128xf32>
      %136 = vector.extract_strided_slice %117 {offsets = [0, 256], sizes = [16, 128], strides = [1, 1]} : vector<16x384xf32> to vector<16x128xf32>
      %137 = vector.extract_strided_slice %119 {offsets = [0, 256], sizes = [16, 128], strides = [1, 1]} : vector<16x384xf32> to vector<16x128xf32>
      %138 = vector.broadcast %25 : vector<1x128xf32> to vector<16x128xf32>
      %139 = arith.addf %137, %138 : vector<16x128xf32>
      %140 = arith.mulf %127, %139 : vector<16x128xf32>
      %141 = arith.addf %136, %140 : vector<16x128xf32>
      %142 = math.tanh %141 : vector<16x128xf32>
      %cst_45 = arith.constant 1.000000e+00 : f32
      %143 = vector.broadcast %cst_45 : f32 to vector<16x128xf32>
      %144 = arith.subf %143, %135 : vector<16x128xf32>
      %145 = arith.mulf %144, %142 : vector<16x128xf32>
      %146 = arith.mulf %135, %109 : vector<16x128xf32>
      %147 = arith.addf %145, %146 : vector<16x128xf32>
      %148 = arith.addi %0, %c2_i32 : i32
      %149 = vector.broadcast %148 : i32 to vector<16x1xi32>
      %150 = arith.cmpi slt, %149, %23 : vector<16x1xi32>
      %151 = vector.shape_cast %150 : vector<16x1xi1> to vector<16x1xi1>
      %152 = vector.broadcast %151 : vector<16x1xi1> to vector<16x128xi1>
      %153 = arith.select %152, %147, %109 : vector<16x128xi1>, vector<16x128xf32>
      %154 = arith.truncf %153 : vector<16x128xf32> to vector<16x128xbf16>
      %155 = arith.index_cast %c2_i32 : i32 to index
      %c0_46 = arith.constant 0 : index
      %c0_47 = arith.constant 0 : index
      %156 = vector.load %arg9[%155, %c0_46, %c0_47] : memref<8x16x128xbf16, #tpu.memory_space<vmem>>, vector<1x16x128xbf16>
      %157 = vector.shape_cast %156 : vector<1x16x128xbf16> to vector<16x128xbf16>
      %158 = vector.shape_cast %154 : vector<16x128xbf16> to vector<1x16x128xbf16>
      tpu.vector_store %arg9[%155, %c0_46, %c0_47], %158 {strides = array<i32>} : memref<8x16x128xbf16, #tpu.memory_space<vmem>>, vector<1x16x128xbf16>,
      %c3_i32 = arith.constant 3 : i32
      %159 = arith.index_cast %c3_i32 : i32 to index
      %c0_48 = arith.constant 0 : index
      %c0_49 = arith.constant 0 : index
      %160 = vector.load %arg11[%159, %c0_48, %c0_49] : memref<8x16x384xf32, #tpu.memory_space<vmem>>, vector<1x16x384xf32>
      %161 = vector.shape_cast %160 : vector<1x16x384xf32> to vector<16x384xf32>
      %162 = arith.truncf %153 : vector<16x128xf32> to vector<16x128xbf16>
      %cst_50 = arith.constant dense<0.000000e+00> : vector<16x384xf32>
      %163 = tpu.matmul %162, %24, %cst_50 {dimension_numbers = #tpu.dot_dimension_numbers<[1], [0], [0], [1], [0, 0, 1, 1], [], []>} : vector<16x128xbf16>, vector<128x384xbf16>, vector<16x384xf32> -> vector<16x384xf32>
      %164 = vector.extract_strided_slice %161 {offsets = [0, 0], sizes = [16, 128], strides = [1, 1]} : vector<16x384xf32> to vector<16x128xf32>
      %165 = vector.extract_strided_slice %163 {offsets = [0, 0], sizes = [16, 128], strides = [1, 1]} : vector<16x384xf32> to vector<16x128xf32>
      %166 = arith.addf %164, %165 : vector<16x128xf32>
      %167 = arith.negf %166 : vector<16x128xf32>
      %168 = math.exp %167 : vector<16x128xf32>
      %cst_51 = arith.constant 1.000000e+00 : f32
      %169 = vector.broadcast %cst_51 : f32 to vector<16x128xf32>
      %170 = arith.addf %169, %168 : vector<16x128xf32>
      %171 = arith.divf %169, %170 : vector<16x128xf32>
      %172 = vector.extract_strided_slice %161 {offsets = [0, 128], sizes = [16, 128], strides = [1, 1]} : vector<16x384xf32> to vector<16x128xf32>
      %173 = vector.extract_strided_slice %163 {offsets = [0, 128], sizes = [16, 128], strides = [1, 1]} : vector<16x384xf32> to vector<16x128xf32>
      %174 = arith.addf %172, %173 : vector<16x128xf32>
      %175 = arith.negf %174 : vector<16x128xf32>
      %176 = math.exp %175 : vector<16x128xf32>
      %cst_52 = arith.constant 1.000000e+00 : f32
      %177 = vector.broadcast %cst_52 : f32 to vector<16x128xf32>
      %178 = arith.addf %177, %176 : vector<16x128xf32>
      %179 = arith.divf %177, %178 : vector<16x128xf32>
      %180 = vector.extract_strided_slice %161 {offsets = [0, 256], sizes = [16, 128], strides = [1, 1]} : vector<16x384xf32> to vector<16x128xf32>
      %181 = vector.extract_strided_slice %163 {offsets = [0, 256], sizes = [16, 128], strides = [1, 1]} : vector<16x384xf32> to vector<16x128xf32>
      %182 = vector.broadcast %25 : vector<1x128xf32> to vector<16x128xf32>
      %183 = arith.addf %181, %182 : vector<16x128xf32>
      %184 = arith.mulf %171, %183 : vector<16x128xf32>
      %185 = arith.addf %180, %184 : vector<16x128xf32>
      %186 = math.tanh %185 : vector<16x128xf32>
      %cst_53 = arith.constant 1.000000e+00 : f32
      %187 = vector.broadcast %cst_53 : f32 to vector<16x128xf32>
      %188 = arith.subf %187, %179 : vector<16x128xf32>
      %189 = arith.mulf %188, %186 : vector<16x128xf32>
      %190 = arith.mulf %179, %153 : vector<16x128xf32>
      %191 = arith.addf %189, %190 : vector<16x128xf32>
      %192 = arith.addi %0, %c3_i32 : i32
      %193 = vector.broadcast %192 : i32 to vector<16x1xi32>
      %194 = arith.cmpi slt, %193, %23 : vector<16x1xi32>
      %195 = vector.shape_cast %194 : vector<16x1xi1> to vector<16x1xi1>
      %196 = vector.broadcast %195 : vector<16x1xi1> to vector<16x128xi1>
      %197 = arith.select %196, %191, %153 : vector<16x128xi1>, vector<16x128xf32>
      %198 = arith.truncf %197 : vector<16x128xf32> to vector<16x128xbf16>
      %199 = arith.index_cast %c3_i32 : i32 to index
      %c0_54 = arith.constant 0 : index
      %c0_55 = arith.constant 0 : index
      %200 = vector.load %arg9[%199, %c0_54, %c0_55] : memref<8x16x128xbf16, #tpu.memory_space<vmem>>, vector<1x16x128xbf16>
      %201 = vector.shape_cast %200 : vector<1x16x128xbf16> to vector<16x128xbf16>
      %202 = vector.shape_cast %198 : vector<16x128xbf16> to vector<1x16x128xbf16>
      tpu.vector_store %arg9[%199, %c0_54, %c0_55], %202 {strides = array<i32>} : memref<8x16x128xbf16, #tpu.memory_space<vmem>>, vector<1x16x128xbf16>,
      %c4_i32 = arith.constant 4 : i32
      %203 = arith.index_cast %c4_i32 : i32 to index
      %c0_56 = arith.constant 0 : index
      %c0_57 = arith.constant 0 : index
      %204 = vector.load %arg11[%203, %c0_56, %c0_57] : memref<8x16x384xf32, #tpu.memory_space<vmem>>, vector<1x16x384xf32>
      %205 = vector.shape_cast %204 : vector<1x16x384xf32> to vector<16x384xf32>
      %206 = arith.truncf %197 : vector<16x128xf32> to vector<16x128xbf16>
      %cst_58 = arith.constant dense<0.000000e+00> : vector<16x384xf32>
      %207 = tpu.matmul %206, %24, %cst_58 {dimension_numbers = #tpu.dot_dimension_numbers<[1], [0], [0], [1], [0, 0, 1, 1], [], []>} : vector<16x128xbf16>, vector<128x384xbf16>, vector<16x384xf32> -> vector<16x384xf32>
      %208 = vector.extract_strided_slice %205 {offsets = [0, 0], sizes = [16, 128], strides = [1, 1]} : vector<16x384xf32> to vector<16x128xf32>
      %209 = vector.extract_strided_slice %207 {offsets = [0, 0], sizes = [16, 128], strides = [1, 1]} : vector<16x384xf32> to vector<16x128xf32>
      %210 = arith.addf %208, %209 : vector<16x128xf32>
      %211 = arith.negf %210 : vector<16x128xf32>
      %212 = math.exp %211 : vector<16x128xf32>
      %cst_59 = arith.constant 1.000000e+00 : f32
      %213 = vector.broadcast %cst_59 : f32 to vector<16x128xf32>
      %214 = arith.addf %213, %212 : vector<16x128xf32>
      %215 = arith.divf %213, %214 : vector<16x128xf32>
      %216 = vector.extract_strided_slice %205 {offsets = [0, 128], sizes = [16, 128], strides = [1, 1]} : vector<16x384xf32> to vector<16x128xf32>
      %217 = vector.extract_strided_slice %207 {offsets = [0, 128], sizes = [16, 128], strides = [1, 1]} : vector<16x384xf32> to vector<16x128xf32>
      %218 = arith.addf %216, %217 : vector<16x128xf32>
      %219 = arith.negf %218 : vector<16x128xf32>
      %220 = math.exp %219 : vector<16x128xf32>
      %cst_60 = arith.constant 1.000000e+00 : f32
      %221 = vector.broadcast %cst_60 : f32 to vector<16x128xf32>
      %222 = arith.addf %221, %220 : vector<16x128xf32>
      %223 = arith.divf %221, %222 : vector<16x128xf32>
      %224 = vector.extract_strided_slice %205 {offsets = [0, 256], sizes = [16, 128], strides = [1, 1]} : vector<16x384xf32> to vector<16x128xf32>
      %225 = vector.extract_strided_slice %207 {offsets = [0, 256], sizes = [16, 128], strides = [1, 1]} : vector<16x384xf32> to vector<16x128xf32>
      %226 = vector.broadcast %25 : vector<1x128xf32> to vector<16x128xf32>
      %227 = arith.addf %225, %226 : vector<16x128xf32>
      %228 = arith.mulf %215, %227 : vector<16x128xf32>
      %229 = arith.addf %224, %228 : vector<16x128xf32>
      %230 = math.tanh %229 : vector<16x128xf32>
      %cst_61 = arith.constant 1.000000e+00 : f32
      %231 = vector.broadcast %cst_61 : f32 to vector<16x128xf32>
      %232 = arith.subf %231, %223 : vector<16x128xf32>
      %233 = arith.mulf %232, %230 : vector<16x128xf32>
      %234 = arith.mulf %223, %197 : vector<16x128xf32>
      %235 = arith.addf %233, %234 : vector<16x128xf32>
      %236 = arith.addi %0, %c4_i32 : i32
      %237 = vector.broadcast %236 : i32 to vector<16x1xi32>
      %238 = arith.cmpi slt, %237, %23 : vector<16x1xi32>
      %239 = vector.shape_cast %238 : vector<16x1xi1> to vector<16x1xi1>
      %240 = vector.broadcast %239 : vector<16x1xi1> to vector<16x128xi1>
      %241 = arith.select %240, %235, %197 : vector<16x128xi1>, vector<16x128xf32>
      %242 = arith.truncf %241 : vector<16x128xf32> to vector<16x128xbf16>
      %243 = arith.index_cast %c4_i32 : i32 to index
      %c0_62 = arith.constant 0 : index
      %c0_63 = arith.constant 0 : index
      %244 = vector.load %arg9[%243, %c0_62, %c0_63] : memref<8x16x128xbf16, #tpu.memory_space<vmem>>, vector<1x16x128xbf16>
      %245 = vector.shape_cast %244 : vector<1x16x128xbf16> to vector<16x128xbf16>
      %246 = vector.shape_cast %242 : vector<16x128xbf16> to vector<1x16x128xbf16>
      tpu.vector_store %arg9[%243, %c0_62, %c0_63], %246 {strides = array<i32>} : memref<8x16x128xbf16, #tpu.memory_space<vmem>>, vector<1x16x128xbf16>,
      %c5_i32 = arith.constant 5 : i32
      %247 = arith.index_cast %c5_i32 : i32 to index
      %c0_64 = arith.constant 0 : index
      %c0_65 = arith.constant 0 : index
      %248 = vector.load %arg11[%247, %c0_64, %c0_65] : memref<8x16x384xf32, #tpu.memory_space<vmem>>, vector<1x16x384xf32>
      %249 = vector.shape_cast %248 : vector<1x16x384xf32> to vector<16x384xf32>
      %250 = arith.truncf %241 : vector<16x128xf32> to vector<16x128xbf16>
      %cst_66 = arith.constant dense<0.000000e+00> : vector<16x384xf32>
      %251 = tpu.matmul %250, %24, %cst_66 {dimension_numbers = #tpu.dot_dimension_numbers<[1], [0], [0], [1], [0, 0, 1, 1], [], []>} : vector<16x128xbf16>, vector<128x384xbf16>, vector<16x384xf32> -> vector<16x384xf32>
      %252 = vector.extract_strided_slice %249 {offsets = [0, 0], sizes = [16, 128], strides = [1, 1]} : vector<16x384xf32> to vector<16x128xf32>
      %253 = vector.extract_strided_slice %251 {offsets = [0, 0], sizes = [16, 128], strides = [1, 1]} : vector<16x384xf32> to vector<16x128xf32>
      %254 = arith.addf %252, %253 : vector<16x128xf32>
      %255 = arith.negf %254 : vector<16x128xf32>
      %256 = math.exp %255 : vector<16x128xf32>
      %cst_67 = arith.constant 1.000000e+00 : f32
      %257 = vector.broadcast %cst_67 : f32 to vector<16x128xf32>
      %258 = arith.addf %257, %256 : vector<16x128xf32>
      %259 = arith.divf %257, %258 : vector<16x128xf32>
      %260 = vector.extract_strided_slice %249 {offsets = [0, 128], sizes = [16, 128], strides = [1, 1]} : vector<16x384xf32> to vector<16x128xf32>
      %261 = vector.extract_strided_slice %251 {offsets = [0, 128], sizes = [16, 128], strides = [1, 1]} : vector<16x384xf32> to vector<16x128xf32>
      %262 = arith.addf %260, %261 : vector<16x128xf32>
      %263 = arith.negf %262 : vector<16x128xf32>
      %264 = math.exp %263 : vector<16x128xf32>
      %cst_68 = arith.constant 1.000000e+00 : f32
      %265 = vector.broadcast %cst_68 : f32 to vector<16x128xf32>
      %266 = arith.addf %265, %264 : vector<16x128xf32>
      %267 = arith.divf %265, %266 : vector<16x128xf32>
      %268 = vector.extract_strided_slice %249 {offsets = [0, 256], sizes = [16, 128], strides = [1, 1]} : vector<16x384xf32> to vector<16x128xf32>
      %269 = vector.extract_strided_slice %251 {offsets = [0, 256], sizes = [16, 128], strides = [1, 1]} : vector<16x384xf32> to vector<16x128xf32>
      %270 = vector.broadcast %25 : vector<1x128xf32> to vector<16x128xf32>
      %271 = arith.addf %269, %270 : vector<16x128xf32>
      %272 = arith.mulf %259, %271 : vector<16x128xf32>
      %273 = arith.addf %268, %272 : vector<16x128xf32>
      %274 = math.tanh %273 : vector<16x128xf32>
      %cst_69 = arith.constant 1.000000e+00 : f32
      %275 = vector.broadcast %cst_69 : f32 to vector<16x128xf32>
      %276 = arith.subf %275, %267 : vector<16x128xf32>
      %277 = arith.mulf %276, %274 : vector<16x128xf32>
      %278 = arith.mulf %267, %241 : vector<16x128xf32>
      %279 = arith.addf %277, %278 : vector<16x128xf32>
      %280 = arith.addi %0, %c5_i32 : i32
      %281 = vector.broadcast %280 : i32 to vector<16x1xi32>
      %282 = arith.cmpi slt, %281, %23 : vector<16x1xi32>
      %283 = vector.shape_cast %282 : vector<16x1xi1> to vector<16x1xi1>
      %284 = vector.broadcast %283 : vector<16x1xi1> to vector<16x128xi1>
      %285 = arith.select %284, %279, %241 : vector<16x128xi1>, vector<16x128xf32>
      %286 = arith.truncf %285 : vector<16x128xf32> to vector<16x128xbf16>
      %287 = arith.index_cast %c5_i32 : i32 to index
      %c0_70 = arith.constant 0 : index
      %c0_71 = arith.constant 0 : index
      %288 = vector.load %arg9[%287, %c0_70, %c0_71] : memref<8x16x128xbf16, #tpu.memory_space<vmem>>, vector<1x16x128xbf16>
      %289 = vector.shape_cast %288 : vector<1x16x128xbf16> to vector<16x128xbf16>
      %290 = vector.shape_cast %286 : vector<16x128xbf16> to vector<1x16x128xbf16>
      tpu.vector_store %arg9[%287, %c0_70, %c0_71], %290 {strides = array<i32>} : memref<8x16x128xbf16, #tpu.memory_space<vmem>>, vector<1x16x128xbf16>,
      %c6_i32 = arith.constant 6 : i32
      %291 = arith.index_cast %c6_i32 : i32 to index
      %c0_72 = arith.constant 0 : index
      %c0_73 = arith.constant 0 : index
      %292 = vector.load %arg11[%291, %c0_72, %c0_73] : memref<8x16x384xf32, #tpu.memory_space<vmem>>, vector<1x16x384xf32>
      %293 = vector.shape_cast %292 : vector<1x16x384xf32> to vector<16x384xf32>
      %294 = arith.truncf %285 : vector<16x128xf32> to vector<16x128xbf16>
      %cst_74 = arith.constant dense<0.000000e+00> : vector<16x384xf32>
      %295 = tpu.matmul %294, %24, %cst_74 {dimension_numbers = #tpu.dot_dimension_numbers<[1], [0], [0], [1], [0, 0, 1, 1], [], []>} : vector<16x128xbf16>, vector<128x384xbf16>, vector<16x384xf32> -> vector<16x384xf32>
      %296 = vector.extract_strided_slice %293 {offsets = [0, 0], sizes = [16, 128], strides = [1, 1]} : vector<16x384xf32> to vector<16x128xf32>
      %297 = vector.extract_strided_slice %295 {offsets = [0, 0], sizes = [16, 128], strides = [1, 1]} : vector<16x384xf32> to vector<16x128xf32>
      %298 = arith.addf %296, %297 : vector<16x128xf32>
      %299 = arith.negf %298 : vector<16x128xf32>
      %300 = math.exp %299 : vector<16x128xf32>
      %cst_75 = arith.constant 1.000000e+00 : f32
      %301 = vector.broadcast %cst_75 : f32 to vector<16x128xf32>
      %302 = arith.addf %301, %300 : vector<16x128xf32>
      %303 = arith.divf %301, %302 : vector<16x128xf32>
      %304 = vector.extract_strided_slice %293 {offsets = [0, 128], sizes = [16, 128], strides = [1, 1]} : vector<16x384xf32> to vector<16x128xf32>
      %305 = vector.extract_strided_slice %295 {offsets = [0, 128], sizes = [16, 128], strides = [1, 1]} : vector<16x384xf32> to vector<16x128xf32>
      %306 = arith.addf %304, %305 : vector<16x128xf32>
      %307 = arith.negf %306 : vector<16x128xf32>
      %308 = math.exp %307 : vector<16x128xf32>
      %cst_76 = arith.constant 1.000000e+00 : f32
      %309 = vector.broadcast %cst_76 : f32 to vector<16x128xf32>
      %310 = arith.addf %309, %308 : vector<16x128xf32>
      %311 = arith.divf %309, %310 : vector<16x128xf32>
      %312 = vector.extract_strided_slice %293 {offsets = [0, 256], sizes = [16, 128], strides = [1, 1]} : vector<16x384xf32> to vector<16x128xf32>
      %313 = vector.extract_strided_slice %295 {offsets = [0, 256], sizes = [16, 128], strides = [1, 1]} : vector<16x384xf32> to vector<16x128xf32>
      %314 = vector.broadcast %25 : vector<1x128xf32> to vector<16x128xf32>
      %315 = arith.addf %313, %314 : vector<16x128xf32>
      %316 = arith.mulf %303, %315 : vector<16x128xf32>
      %317 = arith.addf %312, %316 : vector<16x128xf32>
      %318 = math.tanh %317 : vector<16x128xf32>
      %cst_77 = arith.constant 1.000000e+00 : f32
      %319 = vector.broadcast %cst_77 : f32 to vector<16x128xf32>
      %320 = arith.subf %319, %311 : vector<16x128xf32>
      %321 = arith.mulf %320, %318 : vector<16x128xf32>
      %322 = arith.mulf %311, %285 : vector<16x128xf32>
      %323 = arith.addf %321, %322 : vector<16x128xf32>
      %324 = arith.addi %0, %c6_i32 : i32
      %325 = vector.broadcast %324 : i32 to vector<16x1xi32>
      %326 = arith.cmpi slt, %325, %23 : vector<16x1xi32>
      %327 = vector.shape_cast %326 : vector<16x1xi1> to vector<16x1xi1>
      %328 = vector.broadcast %327 : vector<16x1xi1> to vector<16x128xi1>
      %329 = arith.select %328, %323, %285 : vector<16x128xi1>, vector<16x128xf32>
      %330 = arith.truncf %329 : vector<16x128xf32> to vector<16x128xbf16>
      %331 = arith.index_cast %c6_i32 : i32 to index
      %c0_78 = arith.constant 0 : index
      %c0_79 = arith.constant 0 : index
      %332 = vector.load %arg9[%331, %c0_78, %c0_79] : memref<8x16x128xbf16, #tpu.memory_space<vmem>>, vector<1x16x128xbf16>
      %333 = vector.shape_cast %332 : vector<1x16x128xbf16> to vector<16x128xbf16>
      %334 = vector.shape_cast %330 : vector<16x128xbf16> to vector<1x16x128xbf16>
      tpu.vector_store %arg9[%331, %c0_78, %c0_79], %334 {strides = array<i32>} : memref<8x16x128xbf16, #tpu.memory_space<vmem>>, vector<1x16x128xbf16>,
      %c7_i32 = arith.constant 7 : i32
      %335 = arith.index_cast %c7_i32 : i32 to index
      %c0_80 = arith.constant 0 : index
      %c0_81 = arith.constant 0 : index
      %336 = vector.load %arg11[%335, %c0_80, %c0_81] : memref<8x16x384xf32, #tpu.memory_space<vmem>>, vector<1x16x384xf32>
      %337 = vector.shape_cast %336 : vector<1x16x384xf32> to vector<16x384xf32>
      %338 = arith.truncf %329 : vector<16x128xf32> to vector<16x128xbf16>
      %cst_82 = arith.constant dense<0.000000e+00> : vector<16x384xf32>
      %339 = tpu.matmul %338, %24, %cst_82 {dimension_numbers = #tpu.dot_dimension_numbers<[1], [0], [0], [1], [0, 0, 1, 1], [], []>} : vector<16x128xbf16>, vector<128x384xbf16>, vector<16x384xf32> -> vector<16x384xf32>
      %340 = vector.extract_strided_slice %337 {offsets = [0, 0], sizes = [16, 128], strides = [1, 1]} : vector<16x384xf32> to vector<16x128xf32>
      %341 = vector.extract_strided_slice %339 {offsets = [0, 0], sizes = [16, 128], strides = [1, 1]} : vector<16x384xf32> to vector<16x128xf32>
      %342 = arith.addf %340, %341 : vector<16x128xf32>
      %343 = arith.negf %342 : vector<16x128xf32>
      %344 = math.exp %343 : vector<16x128xf32>
      %cst_83 = arith.constant 1.000000e+00 : f32
      %345 = vector.broadcast %cst_83 : f32 to vector<16x128xf32>
      %346 = arith.addf %345, %344 : vector<16x128xf32>
      %347 = arith.divf %345, %346 : vector<16x128xf32>
      %348 = vector.extract_strided_slice %337 {offsets = [0, 128], sizes = [16, 128], strides = [1, 1]} : vector<16x384xf32> to vector<16x128xf32>
      %349 = vector.extract_strided_slice %339 {offsets = [0, 128], sizes = [16, 128], strides = [1, 1]} : vector<16x384xf32> to vector<16x128xf32>
      %350 = arith.addf %348, %349 : vector<16x128xf32>
      %351 = arith.negf %350 : vector<16x128xf32>
      %352 = math.exp %351 : vector<16x128xf32>
      %cst_84 = arith.constant 1.000000e+00 : f32
      %353 = vector.broadcast %cst_84 : f32 to vector<16x128xf32>
      %354 = arith.addf %353, %352 : vector<16x128xf32>
      %355 = arith.divf %353, %354 : vector<16x128xf32>
      %356 = vector.extract_strided_slice %337 {offsets = [0, 256], sizes = [16, 128], strides = [1, 1]} : vector<16x384xf32> to vector<16x128xf32>
      %357 = vector.extract_strided_slice %339 {offsets = [0, 256], sizes = [16, 128], strides = [1, 1]} : vector<16x384xf32> to vector<16x128xf32>
      %358 = vector.broadcast %25 : vector<1x128xf32> to vector<16x128xf32>
      %359 = arith.addf %357, %358 : vector<16x128xf32>
      %360 = arith.mulf %347, %359 : vector<16x128xf32>
      %361 = arith.addf %356, %360 : vector<16x128xf32>
      %362 = math.tanh %361 : vector<16x128xf32>
      %cst_85 = arith.constant 1.000000e+00 : f32
      %363 = vector.broadcast %cst_85 : f32 to vector<16x128xf32>
      %364 = arith.subf %363, %355 : vector<16x128xf32>
      %365 = arith.mulf %364, %362 : vector<16x128xf32>
      %366 = arith.mulf %355, %329 : vector<16x128xf32>
      %367 = arith.addf %365, %366 : vector<16x128xf32>
      %368 = arith.addi %0, %c7_i32 : i32
      %369 = vector.broadcast %368 : i32 to vector<16x1xi32>
      %370 = arith.cmpi slt, %369, %23 : vector<16x1xi32>
      %371 = vector.shape_cast %370 : vector<16x1xi1> to vector<16x1xi1>
      %372 = vector.broadcast %371 : vector<16x1xi1> to vector<16x128xi1>
      %373 = arith.select %372, %367, %329 : vector<16x128xi1>, vector<16x128xf32>
      %374 = arith.truncf %373 : vector<16x128xf32> to vector<16x128xbf16>
      %375 = arith.index_cast %c7_i32 : i32 to index
      %c0_86 = arith.constant 0 : index
      %c0_87 = arith.constant 0 : index
      %376 = vector.load %arg9[%375, %c0_86, %c0_87] : memref<8x16x128xbf16, #tpu.memory_space<vmem>>, vector<1x16x128xbf16>
      %377 = vector.shape_cast %376 : vector<1x16x128xbf16> to vector<16x128xbf16>
      %378 = vector.shape_cast %374 : vector<16x128xbf16> to vector<1x16x128xbf16>
      tpu.vector_store %arg9[%375, %c0_86, %c0_87], %378 {strides = array<i32>} : memref<8x16x128xbf16, #tpu.memory_space<vmem>>, vector<1x16x128xbf16>,
      %c8_i32_88 = arith.constant 8 : i32
      %c0_89 = arith.constant 0 : index
      %c0_90 = arith.constant 0 : index
      %379 = vector.load %arg12[%c0_89, %c0_90] : memref<16x128xf32, #tpu.memory_space<vmem>>, vector<16x128xf32>
      tpu.vector_store %arg12[%c0_89, %c0_90], %373 {strides = array<i32>} : memref<16x128xf32, #tpu.memory_space<vmem>>, vector<16x128xf32>,
    } else {
    }
    %8 = arith.cmpi sge, %0, %4 : i32
    %9 = arith.extui %8 : i1 to i32
    %c0_i32_2 = arith.constant 0 : i32
    %10 = arith.cmpi ne, %9, %c0_i32_2 : i32
    scf.if %10 {
      %cst = arith.constant 0.000000e+00 : bf16
      %14 = vector.broadcast %cst : bf16 to vector<8x16x128xbf16>
      %c0_5 = arith.constant 0 : index
      %c0_6 = arith.constant 0 : index
      %c0_7 = arith.constant 0 : index
      %15 = vector.load %arg9[%c0_5, %c0_6, %c0_7] : memref<8x16x128xbf16, #tpu.memory_space<vmem>>, vector<8x16x128xbf16>
      tpu.vector_store %arg9[%c0_5, %c0_6, %c0_7], %14 {strides = array<i32>} : memref<8x16x128xbf16, #tpu.memory_space<vmem>>, vector<8x16x128xbf16>,
    } else {
    }
    %c0_i32_3 = arith.constant 0 : i32
    %11 = arith.cmpi eq, %arg1, %c0_i32_3 : i32
    %12 = arith.extui %11 : i1 to i32
    %c0_i32_4 = arith.constant 0 : i32
    %13 = arith.cmpi ne, %12, %c0_i32_4 : i32
    scf.if %13 {
      %c0_5 = arith.constant 0 : index
      %c0_6 = arith.constant 0 : index
      %14 = vector.load %arg12[%c0_5, %c0_6] : memref<16x128xf32, #tpu.memory_space<vmem>>, vector<16x128xf32>
      %c0_7 = arith.constant 0 : index
      %c0_8 = arith.constant 0 : index
      %15 = vector.load %arg10[%c0_7, %c0_8] : memref<16x128xf32, #tpu.memory_space<vmem>>, vector<16x128xf32>
      tpu.vector_store %arg10[%c0_7, %c0_8], %14 {strides = array<i32>} : memref<16x128xf32, #tpu.memory_space<vmem>>, vector<16x128xf32>,
    } else {
    }
    return
  }
  func.func @transform_0(%arg0: i32, %arg1: i32, %arg2: memref<1xi32, #tpu.memory_space<smem>>) -> (i32, i32) {
    %c0_i32 = arith.constant 0 : i32
    %c0_i32_0 = arith.constant 0 : i32
    return %arg0, %c0_i32 : i32, i32
  }
  func.func @transform_1(%arg0: i32, %arg1: i32, %arg2: memref<1xi32, #tpu.memory_space<smem>>) -> (i32, i32, i32) {
    %c0_i32 = arith.constant 0 : i32
    %c0_i32_0 = arith.constant 0 : i32
    return %arg1, %arg0, %c0_i32 : i32, i32, i32
  }
  func.func @transform_2(%arg0: i32, %arg1: i32, %arg2: memref<1xi32, #tpu.memory_space<smem>>) -> (i32, i32) {
    %c0_i32 = arith.constant 0 : i32
    %c0_i32_0 = arith.constant 0 : i32
    %c0_i32_1 = arith.constant 0 : i32
    return %c0_i32, %c0_i32_0 : i32, i32
  }
  func.func @transform_3(%arg0: i32, %arg1: i32, %arg2: memref<1xi32, #tpu.memory_space<smem>>) -> (i32, i32) {
    %c0_i32 = arith.constant 0 : i32
    %c0_i32_0 = arith.constant 0 : i32
    %c0_i32_1 = arith.constant 0 : i32
    return %c0_i32, %c0_i32_0 : i32, i32
  }
  func.func @transform_4(%arg0: i32, %arg1: i32, %arg2: memref<1xi32, #tpu.memory_space<smem>>) -> (i32, i32) {
    %c0_i32 = arith.constant 0 : i32
    %c0_i32_0 = arith.constant 0 : i32
    %c0_i32_1 = arith.constant 0 : i32
    return %c0_i32, %c0_i32_0 : i32, i32
  }
  func.func @transform_5(%arg0: i32, %arg1: i32, %arg2: memref<1xi32, #tpu.memory_space<smem>>) -> (i32, i32) {
    %c0_i32 = arith.constant 0 : i32
    %c0_i32_0 = arith.constant 0 : i32
    %c0_i32_1 = arith.constant 0 : i32
    return %c0_i32, %c0_i32_0 : i32, i32
  }
  func.func @transform_6(%arg0: i32, %arg1: i32, %arg2: memref<1xi32, #tpu.memory_space<smem>>) -> (i32, i32, i32) {
    %c0_i32 = arith.constant 0 : i32
    %c0_i32_0 = arith.constant 0 : i32
    return %arg1, %arg0, %c0_i32 : i32, i32, i32
  }
  func.func @transform_7(%arg0: i32, %arg1: i32, %arg2: memref<1xi32, #tpu.memory_space<smem>>) -> (i32, i32) {
    %c0_i32 = arith.constant 0 : i32
    %c0_i32_0 = arith.constant 0 : i32
    return %arg0, %c0_i32 : i32, i32
  }
}

module attributes {stable_mosaic.version = 11 : i64} {
  func.func @gru_fused_kernel(%arg0: i32, %arg1: i32, %arg2: memref<1xi32, #tpu.memory_space<smem>>, %arg3: memref<16x1xi32, #tpu.memory_space<vmem>>, %arg4: memref<8x16x128xbf16, #tpu.memory_space<vmem>>, %arg5: memref<128x384xbf16, #tpu.memory_space<vmem>>, %arg6: memref<128x384xbf16, #tpu.memory_space<vmem>>, %arg7: memref<1x384xf32, #tpu.memory_space<vmem>>, %arg8: memref<1x128xf32, #tpu.memory_space<vmem>>, %arg9: memref<8x16x128xbf16, #tpu.memory_space<vmem>>, %arg10: memref<16x128xf32, #tpu.memory_space<vmem>>, %arg11: memref<8x16x384xf32, #tpu.memory_space<vmem>>, %arg12: memref<16x128xf32, #tpu.memory_space<vmem>>) attributes {dimension_semantics = [#tpu.dimension_semantics<parallel>, #tpu.dimension_semantics<arbitrary>], iteration_bounds = array<i64: 1, 1>, scalar_prefetch = 1 : i64, scratch_operands = 2 : i64, tpu.core_type = #tpu.core_type<tc>, window_params = [{transform_indices = @transform_0, window_bounds = array<i64: 16, 1>}, {transform_indices = @transform_1, window_bounds = array<i64: 8, 16, 128>}, {pipeline_mode = #tpu.pipeline_mode<synchronous>, transform_indices = @transform_2, window_bounds = array<i64: 128, 384>}, {pipeline_mode = #tpu.pipeline_mode<synchronous>, transform_indices = @transform_3, window_bounds = array<i64: 128, 384>}, {pipeline_mode = #tpu.pipeline_mode<synchronous>, transform_indices = @transform_4, window_bounds = array<i64: 1, 384>}, {pipeline_mode = #tpu.pipeline_mode<synchronous>, transform_indices = @transform_5, window_bounds = array<i64: 1, 128>}, {transform_indices = @transform_6, window_bounds = array<i64: 8, 16, 128>}, {transform_indices = @transform_7, window_bounds = array<i64: 16, 128>}]} {
    %c8_i32 = arith.constant 8 : i32
    %0 = arith.muli %arg1, %c8_i32 : i32
    %c0_i32 = arith.constant 0 : i32
    %1 = arith.cmpi eq, %arg1, %c0_i32 : i32
    %2 = arith.extui %1 : i1 to i32
    %c0_i32_0 = arith.constant 0 : i32
    %3 = arith.cmpi ne, %2, %c0_i32_0 : i32
    scf.if %3 {
      %cst = arith.constant 0.000000e+00 : f32
      %14 = vector.broadcast %cst : f32 to vector<16x128xf32>
      %c0_5 = arith.constant 0 : index
      %c0_6 = arith.constant 0 : index
      %15 = vector.load %arg12[%c0_5, %c0_6] : memref<16x128xf32, #tpu.memory_space<vmem>>, vector<16x128xf32>
      tpu.vector_store %arg12[%c0_5, %c0_6], %14 {strides = array<i32>} : memref<16x128xf32, #tpu.memory_space<vmem>>, vector<16x128xf32>,
    } else {
    }
    %c0 = arith.constant 0 : index
    %4 = memref.load %arg2[%c0] : memref<1xi32, #tpu.memory_space<smem>>
    %5 = arith.cmpi slt, %0, %4 : i32
    %6 = arith.extui %5 : i1 to i32
    %c0_i32_1 = arith.constant 0 : i32
    %7 = arith.cmpi ne, %6, %c0_i32_1 : i32
    scf.if %7 {
      %c0_5 = arith.constant 0 : index
      %c0_6 = arith.constant 0 : index
      %c0_7 = arith.constant 0 : index
      %14 = vector.load %arg4[%c0_5, %c0_6, %c0_7] : memref<8x16x128xbf16, #tpu.memory_space<vmem>>, vector<8x16x128xbf16>
      %15 = vector.shape_cast %14 : vector<8x16x128xbf16> to vector<128x128xbf16>
      %c0_8 = arith.constant 0 : index
      %c0_9 = arith.constant 0 : index
      %16 = vector.load %arg5[%c0_8, %c0_9] : memref<128x384xbf16, #tpu.memory_space<vmem>>, vector<128x384xbf16>
      %cst = arith.constant dense<0.000000e+00> : vector<128x384xf32>
      %17 = tpu.matmul %15, %16, %cst {dimension_numbers = #tpu.dot_dimension_numbers<[1], [0], [0], [1], [0, 0, 1, 1], [], []>} : vector<128x128xbf16>, vector<128x384xbf16>, vector<128x384xf32> -> vector<128x384xf32>
      %c0_10 = arith.constant 0 : index
      %c0_11 = arith.constant 0 : index
      %18 = vector.load %arg7[%c0_10, %c0_11] : memref<1x384xf32, #tpu.memory_space<vmem>>, vector<1x384xf32>
      %19 = vector.broadcast %18 : vector<1x384xf32> to vector<128x384xf32>
      %20 = arith.addf %17, %19 : vector<128x384xf32>
      %21 = vector.shape_cast %20 : vector<128x384xf32> to vector<8x16x384xf32>
      %c0_12 = arith.constant 0 : index
      %c0_13 = arith.constant 0 : index
      %c0_14 = arith.constant 0 : index
      %22 = vector.load %arg11[%c0_12, %c0_13, %c0_14] : memref<8x16x384xf32, #tpu.memory_space<vmem>>, vector<8x16x384xf32>
      tpu.vector_store %arg11[%c0_12, %c0_13, %c0_14], %21 {strides = array<i32>} : memref<8x16x384xf32, #tpu.memory_space<vmem>>, vector<8x16x384xf32>,
      %c0_15 = arith.constant 0 : index
      %c0_16 = arith.constant 0 : index
      %23 = vector.load %arg3[%c0_15, %c0_16] : memref<16x1xi32, #tpu.memory_space<vmem>>, vector<16x1xi32>
      %c0_17 = arith.constant 0 : index
      %c0_18 = arith.constant 0 : index
      %24 = vector.load %arg6[%c0_17, %c0_18] : memref<128x384xbf16, #tpu.memory_space<vmem>>, vector<128x384xbf16>
      %c0_19 = arith.constant 0 : index
      %c0_20 = arith.constant 0 : index
      %25 = vector.load %arg8[%c0_19, %c0_20] : memref<1x128xf32, #tpu.memory_space<vmem>>, vector<1x128xf32>
      %c0_21 = arith.constant 0 : index
      %c0_22 = arith.constant 0 : index
      %26 = vector.load %arg12[%c0_21, %c0_22] : memref<16x128xf32, #tpu.memory_space<vmem>>, vector<16x128xf32>
      %c0_i32_23 = arith.constant 0 : i32
      %27 = arith.index_cast %c0_i32_23 : i32 to index
      %c0_24 = arith.constant 0 : index
      %c0_25 = arith.constant 0 : index
      %28 = vector.load %arg11[%27, %c0_24, %c0_25] : memref<8x16x384xf32, #tpu.memory_space<vmem>>, vector<1x16x384xf32>
      %29 = vector.shape_cast %28 : vector<1x16x384xf32> to vector<16x384xf32>
      %30 = arith.truncf %26 : vector<16x128xf32> to vector<16x128xbf16>
      %cst_26 = arith.constant dense<0.000000e+00> : vector<16x384xf32>
      %31 = tpu.matmul %30, %24, %cst_26 {dimension_numbers = #tpu.dot_dimension_numbers<[1], [0], [0], [1], [0, 0, 1, 1], [], []>} : vector<16x128xbf16>, vector<128x384xbf16>, vector<16x384xf32> -> vector<16x384xf32>
      %32 = vector.extract_strided_slice %29 {offsets = [0, 0], sizes = [16, 128], strides = [1, 1]} : vector<16x384xf32> to vector<16x128xf32>
      %33 = vector.extract_strided_slice %31 {offsets = [0, 0], sizes = [16, 128], strides = [1, 1]} : vector<16x384xf32> to vector<16x128xf32>
      %34 = arith.addf %32, %33 : vector<16x128xf32>
      %35 = arith.negf %34 : vector<16x128xf32>
      %36 = math.exp %35 : vector<16x128xf32>
      %cst_27 = arith.constant 1.000000e+00 : f32
      %37 = vector.broadcast %cst_27 : f32 to vector<16x128xf32>
      %38 = arith.addf %37, %36 : vector<16x128xf32>
      %39 = arith.divf %37, %38 : vector<16x128xf32>
      %40 = vector.extract_strided_slice %29 {offsets = [0, 128], sizes = [16, 128], strides = [1, 1]} : vector<16x384xf32> to vector<16x128xf32>
      %41 = vector.extract_strided_slice %31 {offsets = [0, 128], sizes = [16, 128], strides = [1, 1]} : vector<16x384xf32> to vector<16x128xf32>
      %42 = arith.addf %40, %41 : vector<16x128xf32>
      %43 = arith.negf %42 : vector<16x128xf32>
      %44 = math.exp %43 : vector<16x128xf32>
      %cst_28 = arith.constant 1.000000e+00 : f32
      %45 = vector.broadcast %cst_28 : f32 to vector<16x128xf32>
      %46 = arith.addf %45, %44 : vector<16x128xf32>
      %47 = arith.divf %45, %46 : vector<16x128xf32>
      %48 = vector.extract_strided_slice %29 {offsets = [0, 256], sizes = [16, 128], strides = [1, 1]} : vector<16x384xf32> to vector<16x128xf32>
      %49 = vector.extract_strided_slice %31 {offsets = [0, 256], sizes = [16, 128], strides = [1, 1]} : vector<16x384xf32> to vector<16x128xf32>
      %50 = vector.broadcast %25 : vector<1x128xf32> to vector<16x128xf32>
      %51 = arith.addf %49, %50 : vector<16x128xf32>
      %52 = arith.mulf %39, %51 : vector<16x128xf32>
      %53 = arith.addf %48, %52 : vector<16x128xf32>
      %54 = math.tanh %53 : vector<16x128xf32>
      %cst_29 = arith.constant 1.000000e+00 : f32
      %55 = vector.broadcast %cst_29 : f32 to vector<16x128xf32>
      %56 = arith.subf %55, %47 : vector<16x128xf32>
      %57 = arith.mulf %56, %54 : vector<16x128xf32>
      %58 = arith.mulf %47, %26 : vector<16x128xf32>
      %59 = arith.addf %57, %58 : vector<16x128xf32>
      %60 = arith.addi %0, %c0_i32_23 : i32
      %61 = vector.broadcast %60 : i32 to vector<16x1xi32>
      %62 = arith.cmpi slt, %61, %23 : vector<16x1xi32>
      %63 = vector.shape_cast %62 : vector<16x1xi1> to vector<16x1xi1>
      %64 = vector.broadcast %63 : vector<16x1xi1> to vector<16x128xi1>
      %65 = arith.select %64, %59, %26 : vector<16x128xi1>, vector<16x128xf32>
      %66 = arith.truncf %65 : vector<16x128xf32> to vector<16x128xbf16>
      %67 = arith.index_cast %c0_i32_23 : i32 to index
      %c0_30 = arith.constant 0 : index
      %c0_31 = arith.constant 0 : index
      %68 = vector.load %arg9[%67, %c0_30, %c0_31] : memref<8x16x128xbf16, #tpu.memory_space<vmem>>, vector<1x16x128xbf16>
      %69 = vector.shape_cast %68 : vector<1x16x128xbf16> to vector<16x128xbf16>
      %70 = vector.shape_cast %66 : vector<16x128xbf16> to vector<1x16x128xbf16>
      tpu.vector_store %arg9[%67, %c0_30, %c0_31], %70 {strides = array<i32>} : memref<8x16x128xbf16, #tpu.memory_space<vmem>>, vector<1x16x128xbf16>,
      %c1_i32 = arith.constant 1 : i32
      %71 = arith.index_cast %c1_i32 : i32 to index
      %c0_32 = arith.constant 0 : index
      %c0_33 = arith.constant 0 : index
      %72 = vector.load %arg11[%71, %c0_32, %c0_33] : memref<8x16x384xf32, #tpu.memory_space<vmem>>, vector<1x16x384xf32>
      %73 = vector.shape_cast %72 : vector<1x16x384xf32> to vector<16x384xf32>
      %74 = arith.truncf %65 : vector<16x128xf32> to vector<16x128xbf16>
      %cst_34 = arith.constant dense<0.000000e+00> : vector<16x384xf32>
      %75 = tpu.matmul %74, %24, %cst_34 {dimension_numbers = #tpu.dot_dimension_numbers<[1], [0], [0], [1], [0, 0, 1, 1], [], []>} : vector<16x128xbf16>, vector<128x384xbf16>, vector<16x384xf32> -> vector<16x384xf32>
      %76 = vector.extract_strided_slice %73 {offsets = [0, 0], sizes = [16, 128], strides = [1, 1]} : vector<16x384xf32> to vector<16x128xf32>
      %77 = vector.extract_strided_slice %75 {offsets = [0, 0], sizes = [16, 128], strides = [1, 1]} : vector<16x384xf32> to vector<16x128xf32>
      %78 = arith.addf %76, %77 : vector<16x128xf32>
      %79 = arith.negf %78 : vector<16x128xf32>
      %80 = math.exp %79 : vector<16x128xf32>
      %cst_35 = arith.constant 1.000000e+00 : f32
      %81 = vector.broadcast %cst_35 : f32 to vector<16x128xf32>
      %82 = arith.addf %81, %80 : vector<16x128xf32>
      %83 = arith.divf %81, %82 : vector<16x128xf32>
      %84 = vector.extract_strided_slice %73 {offsets = [0, 128], sizes = [16, 128], strides = [1, 1]} : vector<16x384xf32> to vector<16x128xf32>
      %85 = vector.extract_strided_slice %75 {offsets = [0, 128], sizes = [16, 128], strides = [1, 1]} : vector<16x384xf32> to vector<16x128xf32>
      %86 = arith.addf %84, %85 : vector<16x128xf32>
      %87 = arith.negf %86 : vector<16x128xf32>
      %88 = math.exp %87 : vector<16x128xf32>
      %cst_36 = arith.constant 1.000000e+00 : f32
      %89 = vector.broadcast %cst_36 : f32 to vector<16x128xf32>
      %90 = arith.addf %89, %88 : vector<16x128xf32>
      %91 = arith.divf %89, %90 : vector<16x128xf32>
      %92 = vector.extract_strided_slice %73 {offsets = [0, 256], sizes = [16, 128], strides = [1, 1]} : vector<16x384xf32> to vector<16x128xf32>
      %93 = vector.extract_strided_slice %75 {offsets = [0, 256], sizes = [16, 128], strides = [1, 1]} : vector<16x384xf32> to vector<16x128xf32>
      %94 = vector.broadcast %25 : vector<1x128xf32> to vector<16x128xf32>
      %95 = arith.addf %93, %94 : vector<16x128xf32>
      %96 = arith.mulf %83, %95 : vector<16x128xf32>
      %97 = arith.addf %92, %96 : vector<16x128xf32>
      %98 = math.tanh %97 : vector<16x128xf32>
      %cst_37 = arith.constant 1.000000e+00 : f32
      %99 = vector.broadcast %cst_37 : f32 to vector<16x128xf32>
      %100 = arith.subf %99, %91 : vector<16x128xf32>
      %101 = arith.mulf %100, %98 : vector<16x128xf32>
      %102 = arith.mulf %91, %65 : vector<16x128xf32>
      %103 = arith.addf %101, %102 : vector<16x128xf32>
      %104 = arith.addi %0, %c1_i32 : i32
      %105 = vector.broadcast %104 : i32 to vector<16x1xi32>
      %106 = arith.cmpi slt, %105, %23 : vector<16x1xi32>
      %107 = vector.shape_cast %106 : vector<16x1xi1> to vector<16x1xi1>
      %108 = vector.broadcast %107 : vector<16x1xi1> to vector<16x128xi1>
      %109 = arith.select %108, %103, %65 : vector<16x128xi1>, vector<16x128xf32>
      %110 = arith.truncf %109 : vector<16x128xf32> to vector<16x128xbf16>
      %111 = arith.index_cast %c1_i32 : i32 to index
      %c0_38 = arith.constant 0 : index
      %c0_39 = arith.constant 0 : index
      %112 = vector.load %arg9[%111, %c0_38, %c0_39] : memref<8x16x128xbf16, #tpu.memory_space<vmem>>, vector<1x16x128xbf16>
      %113 = vector.shape_cast %112 : vector<1x16x128xbf16> to vector<16x128xbf16>
      %114 = vector.shape_cast %110 : vector<16x128xbf16> to vector<1x16x128xbf16>
      tpu.vector_store %arg9[%111, %c0_38, %c0_39], %114 {strides = array<i32>} : memref<8x16x128xbf16, #tpu.memory_space<vmem>>, vector<1x16x128xbf16>,
      %c2_i32 = arith.constant 2 : i32
      %115 = arith.index_cast %c2_i32 : i32 to index
      %c0_40 = arith.constant 0 : index
      %c0_41 = arith.constant 0 : index
      %116 = vector.load %arg11[%115, %c0_40, %c0_41] : memref<8x16x384xf32, #tpu.memory_space<vmem>>, vector<1x16x384xf32>
      %117 = vector.shape_cast %116 : vector<1x16x384xf32> to vector<16x384xf32>
      %118 = arith.truncf %109 : vector<16x128xf32> to vector<16x128xbf16>
      %cst_42 = arith.constant dense<0.000000e+00> : vector<16x384xf32>
      %119 = tpu.matmul %118, %24, %cst_42 {dimension_numbers = #tpu.dot_dimension_numbers<[1], [0], [0], [1], [0, 0, 1, 1], [], []>} : vector<16x128xbf16>, vector<128x384xbf16>, vector<16x384xf32> -> vector<16x384xf32>
      %120 = vector.extract_strided_slice %117 {offsets = [0, 0], sizes = [16, 128], strides = [1, 1]} : vector<16x384xf32> to vector<16x128xf32>
      %121 = vector.extract_strided_slice %119 {offsets = [0, 0], sizes = [16, 128], strides = [1, 1]} : vector<16x384xf32> to vector<16x128xf32>
      %122 = arith.addf %120, %121 : vector<16x128xf32>
      %123 = arith.negf %122 : vector<16x128xf32>
      %124 = math.exp %123 : vector<16x128xf32>
      %cst_43 = arith.constant 1.000000e+00 : f32
      %125 = vector.broadcast %cst_43 : f32 to vector<16x128xf32>
      %126 = arith.addf %125, %124 : vector<16x128xf32>
      %127 = arith.divf %125, %126 : vector<16x128xf32>
      %128 = vector.extract_strided_slice %117 {offsets = [0, 128], sizes = [16, 128], strides = [1, 1]} : vector<16x384xf32> to vector<16x128xf32>
      %129 = vector.extract_strided_slice %119 {offsets = [0, 128], sizes = [16, 128], strides = [1, 1]} : vector<16x384xf32> to vector<16x128xf32>
      %130 = arith.addf %128, %129 : vector<16x128xf32>
      %131 = arith.negf %130 : vector<16x128xf32>
      %132 = math.exp %131 : vector<16x128xf32>
      %cst_44 = arith.constant 1.000000e+00 : f32
      %133 = vector.broadcast %cst_44 : f32 to vector<16x128xf32>
      %134 = arith.addf %133, %132 : vector<16x128xf32>
      %135 = arith.divf %133, %134 : vector<16x128xf32>
      %136 = vector.extract_strided_slice %117 {offsets = [0, 256], sizes = [16, 128], strides = [1, 1]} : vector<16x384xf32> to vector<16x128xf32>
      %137 = vector.extract_strided_slice %119 {offsets = [0, 256], sizes = [16, 128], strides = [1, 1]} : vector<16x384xf32> to vector<16x128xf32>
      %138 = vector.broadcast %25 : vector<1x128xf32> to vector<16x128xf32>
      %139 = arith.addf %137, %138 : vector<16x128xf32>
      %140 = arith.mulf %127, %139 : vector<16x128xf32>
      %141 = arith.addf %136, %140 : vector<16x128xf32>
      %142 = math.tanh %141 : vector<16x128xf32>
      %cst_45 = arith.constant 1.000000e+00 : f32
      %143 = vector.broadcast %cst_45 : f32 to vector<16x128xf32>
      %144 = arith.subf %143, %135 : vector<16x128xf32>
      %145 = arith.mulf %144, %142 : vector<16x128xf32>
      %146 = arith.mulf %135, %109 : vector<16x128xf32>
      %147 = arith.addf %145, %146 : vector<16x128xf32>
      %148 = arith.addi %0, %c2_i32 : i32
      %149 = vector.broadcast %148 : i32 to vector<16x1xi32>
      %150 = arith.cmpi slt, %149, %23 : vector<16x1xi32>
      %151 = vector.shape_cast %150 : vector<16x1xi1> to vector<16x1xi1>
      %152 = vector.broadcast %151 : vector<16x1xi1> to vector<16x128xi1>
      %153 = arith.select %152, %147, %109 : vector<16x128xi1>, vector<16x128xf32>
      %154 = arith.truncf %153 : vector<16x128xf32> to vector<16x128xbf16>
      %155 = arith.index_cast %c2_i32 : i32 to index
      %c0_46 = arith.constant 0 : index
      %c0_47 = arith.constant 0 : index
      %156 = vector.load %arg9[%155, %c0_46, %c0_47] : memref<8x16x128xbf16, #tpu.memory_space<vmem>>, vector<1x16x128xbf16>
      %157 = vector.shape_cast %156 : vector<1x16x128xbf16> to vector<16x128xbf16>
      %158 = vector.shape_cast %154 : vector<16x128xbf16> to vector<1x16x128xbf16>
      tpu.vector_store %arg9[%155, %c0_46, %c0_47], %158 {strides = array<i32>} : memref<8x16x128xbf16, #tpu.memory_space<vmem>>, vector<1x16x128xbf16>,
      %c3_i32 = arith.constant 3 : i32
      %159 = arith.index_cast %c3_i32 : i32 to index
      %c0_48 = arith.constant 0 : index
      %c0_49 = arith.constant 0 : index
      %160 = vector.load %arg11[%159, %c0_48, %c0_49] : memref<8x16x384xf32, #tpu.memory_space<vmem>>, vector<1x16x384xf32>
      %161 = vector.shape_cast %160 : vector<1x16x384xf32> to vector<16x384xf32>
      %162 = arith.truncf %153 : vector<16x128xf32> to vector<16x128xbf16>
      %cst_50 = arith.constant dense<0.000000e+00> : vector<16x384xf32>
      %163 = tpu.matmul %162, %24, %cst_50 {dimension_numbers = #tpu.dot_dimension_numbers<[1], [0], [0], [1], [0, 0, 1, 1], [], []>} : vector<16x128xbf16>, vector<128x384xbf16>, vector<16x384xf32> -> vector<16x384xf32>
      %164 = vector.extract_strided_slice %161 {offsets = [0, 0], sizes = [16, 128], strides = [1, 1]} : vector<16x384xf32> to vector<16x128xf32>
      %165 = vector.extract_strided_slice %163 {offsets = [0, 0], sizes = [16, 128], strides = [1, 1]} : vector<16x384xf32> to vector<16x128xf32>
      %166 = arith.addf %164, %165 : vector<16x128xf32>
      %167 = arith.negf %166 : vector<16x128xf32>
      %168 = math.exp %167 : vector<16x128xf32>
      %cst_51 = arith.constant 1.000000e+00 : f32
      %169 = vector.broadcast %cst_51 : f32 to vector<16x128xf32>
      %170 = arith.addf %169, %168 : vector<16x128xf32>
      %171 = arith.divf %169, %170 : vector<16x128xf32>
      %172 = vector.extract_strided_slice %161 {offsets = [0, 128], sizes = [16, 128], strides = [1, 1]} : vector<16x384xf32> to vector<16x128xf32>
      %173 = vector.extract_strided_slice %163 {offsets = [0, 128], sizes = [16, 128], strides = [1, 1]} : vector<16x384xf32> to vector<16x128xf32>
      %174 = arith.addf %172, %173 : vector<16x128xf32>
      %175 = arith.negf %174 : vector<16x128xf32>
      %176 = math.exp %175 : vector<16x128xf32>
      %cst_52 = arith.constant 1.000000e+00 : f32
      %177 = vector.broadcast %cst_52 : f32 to vector<16x128xf32>
      %178 = arith.addf %177, %176 : vector<16x128xf32>
      %179 = arith.divf %177, %178 : vector<16x128xf32>
      %180 = vector.extract_strided_slice %161 {offsets = [0, 256], sizes = [16, 128], strides = [1, 1]} : vector<16x384xf32> to vector<16x128xf32>
      %181 = vector.extract_strided_slice %163 {offsets = [0, 256], sizes = [16, 128], strides = [1, 1]} : vector<16x384xf32> to vector<16x128xf32>
      %182 = vector.broadcast %25 : vector<1x128xf32> to vector<16x128xf32>
      %183 = arith.addf %181, %182 : vector<16x128xf32>
      %184 = arith.mulf %171, %183 : vector<16x128xf32>
      %185 = arith.addf %180, %184 : vector<16x128xf32>
      %186 = math.tanh %185 : vector<16x128xf32>
      %cst_53 = arith.constant 1.000000e+00 : f32
      %187 = vector.broadcast %cst_53 : f32 to vector<16x128xf32>
      %188 = arith.subf %187, %179 : vector<16x128xf32>
      %189 = arith.mulf %188, %186 : vector<16x128xf32>
      %190 = arith.mulf %179, %153 : vector<16x128xf32>
      %191 = arith.addf %189, %190 : vector<16x128xf32>
      %192 = arith.addi %0, %c3_i32 : i32
      %193 = vector.broadcast %192 : i32 to vector<16x1xi32>
      %194 = arith.cmpi slt, %193, %23 : vector<16x1xi32>
      %195 = vector.shape_cast %194 : vector<16x1xi1> to vector<16x1xi1>
      %196 = vector.broadcast %195 : vector<16x1xi1> to vector<16x128xi1>
      %197 = arith.select %196, %191, %153 : vector<16x128xi1>, vector<16x128xf32>
      %198 = arith.truncf %197 : vector<16x128xf32> to vector<16x128xbf16>
      %199 = arith.index_cast %c3_i32 : i32 to index
      %c0_54 = arith.constant 0 : index
      %c0_55 = arith.constant 0 : index
      %200 = vector.load %arg9[%199, %c0_54, %c0_55] : memref<8x16x128xbf16, #tpu.memory_space<vmem>>, vector<1x16x128xbf16>
      %201 = vector.shape_cast %200 : vector<1x16x128xbf16> to vector<16x128xbf16>
      %202 = vector.shape_cast %198 : vector<16x128xbf16> to vector<1x16x128xbf16>
      tpu.vector_store %arg9[%199, %c0_54, %c0_55], %202 {strides = array<i32>} : memref<8x16x128xbf16, #tpu.memory_space<vmem>>, vector<1x16x128xbf16>,
      %c4_i32 = arith.constant 4 : i32
      %203 = arith.index_cast %c4_i32 : i32 to index
      %c0_56 = arith.constant 0 : index
      %c0_57 = arith.constant 0 : index
      %204 = vector.load %arg11[%203, %c0_56, %c0_57] : memref<8x16x384xf32, #tpu.memory_space<vmem>>, vector<1x16x384xf32>
      %205 = vector.shape_cast %204 : vector<1x16x384xf32> to vector<16x384xf32>
      %206 = arith.truncf %197 : vector<16x128xf32> to vector<16x128xbf16>
      %cst_58 = arith.constant dense<0.000000e+00> : vector<16x384xf32>
      %207 = tpu.matmul %206, %24, %cst_58 {dimension_numbers = #tpu.dot_dimension_numbers<[1], [0], [0], [1], [0, 0, 1, 1], [], []>} : vector<16x128xbf16>, vector<128x384xbf16>, vector<16x384xf32> -> vector<16x384xf32>
      %208 = vector.extract_strided_slice %205 {offsets = [0, 0], sizes = [16, 128], strides = [1, 1]} : vector<16x384xf32> to vector<16x128xf32>
      %209 = vector.extract_strided_slice %207 {offsets = [0, 0], sizes = [16, 128], strides = [1, 1]} : vector<16x384xf32> to vector<16x128xf32>
      %210 = arith.addf %208, %209 : vector<16x128xf32>
      %211 = arith.negf %210 : vector<16x128xf32>
      %212 = math.exp %211 : vector<16x128xf32>
      %cst_59 = arith.constant 1.000000e+00 : f32
      %213 = vector.broadcast %cst_59 : f32 to vector<16x128xf32>
      %214 = arith.addf %213, %212 : vector<16x128xf32>
      %215 = arith.divf %213, %214 : vector<16x128xf32>
      %216 = vector.extract_strided_slice %205 {offsets = [0, 128], sizes = [16, 128], strides = [1, 1]} : vector<16x384xf32> to vector<16x128xf32>
      %217 = vector.extract_strided_slice %207 {offsets = [0, 128], sizes = [16, 128], strides = [1, 1]} : vector<16x384xf32> to vector<16x128xf32>
      %218 = arith.addf %216, %217 : vector<16x128xf32>
      %219 = arith.negf %218 : vector<16x128xf32>
      %220 = math.exp %219 : vector<16x128xf32>
      %cst_60 = arith.constant 1.000000e+00 : f32
      %221 = vector.broadcast %cst_60 : f32 to vector<16x128xf32>
      %222 = arith.addf %221, %220 : vector<16x128xf32>
      %223 = arith.divf %221, %222 : vector<16x128xf32>
      %224 = vector.extract_strided_slice %205 {offsets = [0, 256], sizes = [16, 128], strides = [1, 1]} : vector<16x384xf32> to vector<16x128xf32>
      %225 = vector.extract_strided_slice %207 {offsets = [0, 256], sizes = [16, 128], strides = [1, 1]} : vector<16x384xf32> to vector<16x128xf32>
      %226 = vector.broadcast %25 : vector<1x128xf32> to vector<16x128xf32>
      %227 = arith.addf %225, %226 : vector<16x128xf32>
      %228 = arith.mulf %215, %227 : vector<16x128xf32>
      %229 = arith.addf %224, %228 : vector<16x128xf32>
      %230 = math.tanh %229 : vector<16x128xf32>
      %cst_61 = arith.constant 1.000000e+00 : f32
      %231 = vector.broadcast %cst_61 : f32 to vector<16x128xf32>
      %232 = arith.subf %231, %223 : vector<16x128xf32>
      %233 = arith.mulf %232, %230 : vector<16x128xf32>
      %234 = arith.mulf %223, %197 : vector<16x128xf32>
      %235 = arith.addf %233, %234 : vector<16x128xf32>
      %236 = arith.addi %0, %c4_i32 : i32
      %237 = vector.broadcast %236 : i32 to vector<16x1xi32>
      %238 = arith.cmpi slt, %237, %23 : vector<16x1xi32>
      %239 = vector.shape_cast %238 : vector<16x1xi1> to vector<16x1xi1>
      %240 = vector.broadcast %239 : vector<16x1xi1> to vector<16x128xi1>
      %241 = arith.select %240, %235, %197 : vector<16x128xi1>, vector<16x128xf32>
      %242 = arith.truncf %241 : vector<16x128xf32> to vector<16x128xbf16>
      %243 = arith.index_cast %c4_i32 : i32 to index
      %c0_62 = arith.constant 0 : index
      %c0_63 = arith.constant 0 : index
      %244 = vector.load %arg9[%243, %c0_62, %c0_63] : memref<8x16x128xbf16, #tpu.memory_space<vmem>>, vector<1x16x128xbf16>
      %245 = vector.shape_cast %244 : vector<1x16x128xbf16> to vector<16x128xbf16>
      %246 = vector.shape_cast %242 : vector<16x128xbf16> to vector<1x16x128xbf16>
      tpu.vector_store %arg9[%243, %c0_62, %c0_63], %246 {strides = array<i32>} : memref<8x16x128xbf16, #tpu.memory_space<vmem>>, vector<1x16x128xbf16>,
      %c5_i32 = arith.constant 5 : i32
      %247 = arith.index_cast %c5_i32 : i32 to index
      %c0_64 = arith.constant 0 : index
      %c0_65 = arith.constant 0 : index
      %248 = vector.load %arg11[%247, %c0_64, %c0_65] : memref<8x16x384xf32, #tpu.memory_space<vmem>>, vector<1x16x384xf32>
      %249 = vector.shape_cast %248 : vector<1x16x384xf32> to vector<16x384xf32>
      %250 = arith.truncf %241 : vector<16x128xf32> to vector<16x128xbf16>
      %cst_66 = arith.constant dense<0.000000e+00> : vector<16x384xf32>
      %251 = tpu.matmul %250, %24, %cst_66 {dimension_numbers = #tpu.dot_dimension_numbers<[1], [0], [0], [1], [0, 0, 1, 1], [], []>} : vector<16x128xbf16>, vector<128x384xbf16>, vector<16x384xf32> -> vector<16x384xf32>
      %252 = vector.extract_strided_slice %249 {offsets = [0, 0], sizes = [16, 128], strides = [1, 1]} : vector<16x384xf32> to vector<16x128xf32>
      %253 = vector.extract_strided_slice %251 {offsets = [0, 0], sizes = [16, 128], strides = [1, 1]} : vector<16x384xf32> to vector<16x128xf32>
      %254 = arith.addf %252, %253 : vector<16x128xf32>
      %255 = arith.negf %254 : vector<16x128xf32>
      %256 = math.exp %255 : vector<16x128xf32>
      %cst_67 = arith.constant 1.000000e+00 : f32
      %257 = vector.broadcast %cst_67 : f32 to vector<16x128xf32>
      %258 = arith.addf %257, %256 : vector<16x128xf32>
      %259 = arith.divf %257, %258 : vector<16x128xf32>
      %260 = vector.extract_strided_slice %249 {offsets = [0, 128], sizes = [16, 128], strides = [1, 1]} : vector<16x384xf32> to vector<16x128xf32>
      %261 = vector.extract_strided_slice %251 {offsets = [0, 128], sizes = [16, 128], strides = [1, 1]} : vector<16x384xf32> to vector<16x128xf32>
      %262 = arith.addf %260, %261 : vector<16x128xf32>
      %263 = arith.negf %262 : vector<16x128xf32>
      %264 = math.exp %263 : vector<16x128xf32>
      %cst_68 = arith.constant 1.000000e+00 : f32
      %265 = vector.broadcast %cst_68 : f32 to vector<16x128xf32>
      %266 = arith.addf %265, %264 : vector<16x128xf32>
      %267 = arith.divf %265, %266 : vector<16x128xf32>
      %268 = vector.extract_strided_slice %249 {offsets = [0, 256], sizes = [16, 128], strides = [1, 1]} : vector<16x384xf32> to vector<16x128xf32>
      %269 = vector.extract_strided_slice %251 {offsets = [0, 256], sizes = [16, 128], strides = [1, 1]} : vector<16x384xf32> to vector<16x128xf32>
      %270 = vector.broadcast %25 : vector<1x128xf32> to vector<16x128xf32>
      %271 = arith.addf %269, %270 : vector<16x128xf32>
      %272 = arith.mulf %259, %271 : vector<16x128xf32>
      %273 = arith.addf %268, %272 : vector<16x128xf32>
      %274 = math.tanh %273 : vector<16x128xf32>
      %cst_69 = arith.constant 1.000000e+00 : f32
      %275 = vector.broadcast %cst_69 : f32 to vector<16x128xf32>
      %276 = arith.subf %275, %267 : vector<16x128xf32>
      %277 = arith.mulf %276, %274 : vector<16x128xf32>
      %278 = arith.mulf %267, %241 : vector<16x128xf32>
      %279 = arith.addf %277, %278 : vector<16x128xf32>
      %280 = arith.addi %0, %c5_i32 : i32
      %281 = vector.broadcast %280 : i32 to vector<16x1xi32>
      %282 = arith.cmpi slt, %281, %23 : vector<16x1xi32>
      %283 = vector.shape_cast %282 : vector<16x1xi1> to vector<16x1xi1>
      %284 = vector.broadcast %283 : vector<16x1xi1> to vector<16x128xi1>
      %285 = arith.select %284, %279, %241 : vector<16x128xi1>, vector<16x128xf32>
      %286 = arith.truncf %285 : vector<16x128xf32> to vector<16x128xbf16>
      %287 = arith.index_cast %c5_i32 : i32 to index
      %c0_70 = arith.constant 0 : index
      %c0_71 = arith.constant 0 : index
      %288 = vector.load %arg9[%287, %c0_70, %c0_71] : memref<8x16x128xbf16, #tpu.memory_space<vmem>>, vector<1x16x128xbf16>
      %289 = vector.shape_cast %288 : vector<1x16x128xbf16> to vector<16x128xbf16>
      %290 = vector.shape_cast %286 : vector<16x128xbf16> to vector<1x16x128xbf16>
      tpu.vector_store %arg9[%287, %c0_70, %c0_71], %290 {strides = array<i32>} : memref<8x16x128xbf16, #tpu.memory_space<vmem>>, vector<1x16x128xbf16>,
      %c6_i32 = arith.constant 6 : i32
      %291 = arith.index_cast %c6_i32 : i32 to index
      %c0_72 = arith.constant 0 : index
      %c0_73 = arith.constant 0 : index
      %292 = vector.load %arg11[%291, %c0_72, %c0_73] : memref<8x16x384xf32, #tpu.memory_space<vmem>>, vector<1x16x384xf32>
      %293 = vector.shape_cast %292 : vector<1x16x384xf32> to vector<16x384xf32>
      %294 = arith.truncf %285 : vector<16x128xf32> to vector<16x128xbf16>
      %cst_74 = arith.constant dense<0.000000e+00> : vector<16x384xf32>
      %295 = tpu.matmul %294, %24, %cst_74 {dimension_numbers = #tpu.dot_dimension_numbers<[1], [0], [0], [1], [0, 0, 1, 1], [], []>} : vector<16x128xbf16>, vector<128x384xbf16>, vector<16x384xf32> -> vector<16x384xf32>
      %296 = vector.extract_strided_slice %293 {offsets = [0, 0], sizes = [16, 128], strides = [1, 1]} : vector<16x384xf32> to vector<16x128xf32>
      %297 = vector.extract_strided_slice %295 {offsets = [0, 0], sizes = [16, 128], strides = [1, 1]} : vector<16x384xf32> to vector<16x128xf32>
      %298 = arith.addf %296, %297 : vector<16x128xf32>
      %299 = arith.negf %298 : vector<16x128xf32>
      %300 = math.exp %299 : vector<16x128xf32>
      %cst_75 = arith.constant 1.000000e+00 : f32
      %301 = vector.broadcast %cst_75 : f32 to vector<16x128xf32>
      %302 = arith.addf %301, %300 : vector<16x128xf32>
      %303 = arith.divf %301, %302 : vector<16x128xf32>
      %304 = vector.extract_strided_slice %293 {offsets = [0, 128], sizes = [16, 128], strides = [1, 1]} : vector<16x384xf32> to vector<16x128xf32>
      %305 = vector.extract_strided_slice %295 {offsets = [0, 128], sizes = [16, 128], strides = [1, 1]} : vector<16x384xf32> to vector<16x128xf32>
      %306 = arith.addf %304, %305 : vector<16x128xf32>
      %307 = arith.negf %306 : vector<16x128xf32>
      %308 = math.exp %307 : vector<16x128xf32>
      %cst_76 = arith.constant 1.000000e+00 : f32
      %309 = vector.broadcast %cst_76 : f32 to vector<16x128xf32>
      %310 = arith.addf %309, %308 : vector<16x128xf32>
      %311 = arith.divf %309, %310 : vector<16x128xf32>
      %312 = vector.extract_strided_slice %293 {offsets = [0, 256], sizes = [16, 128], strides = [1, 1]} : vector<16x384xf32> to vector<16x128xf32>
      %313 = vector.extract_strided_slice %295 {offsets = [0, 256], sizes = [16, 128], strides = [1, 1]} : vector<16x384xf32> to vector<16x128xf32>
      %314 = vector.broadcast %25 : vector<1x128xf32> to vector<16x128xf32>
      %315 = arith.addf %313, %314 : vector<16x128xf32>
      %316 = arith.mulf %303, %315 : vector<16x128xf32>
      %317 = arith.addf %312, %316 : vector<16x128xf32>
      %318 = math.tanh %317 : vector<16x128xf32>
      %cst_77 = arith.constant 1.000000e+00 : f32
      %319 = vector.broadcast %cst_77 : f32 to vector<16x128xf32>
      %320 = arith.subf %319, %311 : vector<16x128xf32>
      %321 = arith.mulf %320, %318 : vector<16x128xf32>
      %322 = arith.mulf %311, %285 : vector<16x128xf32>
      %323 = arith.addf %321, %322 : vector<16x128xf32>
      %324 = arith.addi %0, %c6_i32 : i32
      %325 = vector.broadcast %324 : i32 to vector<16x1xi32>
      %326 = arith.cmpi slt, %325, %23 : vector<16x1xi32>
      %327 = vector.shape_cast %326 : vector<16x1xi1> to vector<16x1xi1>
      %328 = vector.broadcast %327 : vector<16x1xi1> to vector<16x128xi1>
      %329 = arith.select %328, %323, %285 : vector<16x128xi1>, vector<16x128xf32>
      %330 = arith.truncf %329 : vector<16x128xf32> to vector<16x128xbf16>
      %331 = arith.index_cast %c6_i32 : i32 to index
      %c0_78 = arith.constant 0 : index
      %c0_79 = arith.constant 0 : index
      %332 = vector.load %arg9[%331, %c0_78, %c0_79] : memref<8x16x128xbf16, #tpu.memory_space<vmem>>, vector<1x16x128xbf16>
      %333 = vector.shape_cast %332 : vector<1x16x128xbf16> to vector<16x128xbf16>
      %334 = vector.shape_cast %330 : vector<16x128xbf16> to vector<1x16x128xbf16>
      tpu.vector_store %arg9[%331, %c0_78, %c0_79], %334 {strides = array<i32>} : memref<8x16x128xbf16, #tpu.memory_space<vmem>>, vector<1x16x128xbf16>,
      %c7_i32 = arith.constant 7 : i32
      %335 = arith.index_cast %c7_i32 : i32 to index
      %c0_80 = arith.constant 0 : index
      %c0_81 = arith.constant 0 : index
      %336 = vector.load %arg11[%335, %c0_80, %c0_81] : memref<8x16x384xf32, #tpu.memory_space<vmem>>, vector<1x16x384xf32>
      %337 = vector.shape_cast %336 : vector<1x16x384xf32> to vector<16x384xf32>
      %338 = arith.truncf %329 : vector<16x128xf32> to vector<16x128xbf16>
      %cst_82 = arith.constant dense<0.000000e+00> : vector<16x384xf32>
      %339 = tpu.matmul %338, %24, %cst_82 {dimension_numbers = #tpu.dot_dimension_numbers<[1], [0], [0], [1], [0, 0, 1, 1], [], []>} : vector<16x128xbf16>, vector<128x384xbf16>, vector<16x384xf32> -> vector<16x384xf32>
      %340 = vector.extract_strided_slice %337 {offsets = [0, 0], sizes = [16, 128], strides = [1, 1]} : vector<16x384xf32> to vector<16x128xf32>
      %341 = vector.extract_strided_slice %339 {offsets = [0, 0], sizes = [16, 128], strides = [1, 1]} : vector<16x384xf32> to vector<16x128xf32>
      %342 = arith.addf %340, %341 : vector<16x128xf32>
      %343 = arith.negf %342 : vector<16x128xf32>
      %344 = math.exp %343 : vector<16x128xf32>
      %cst_83 = arith.constant 1.000000e+00 : f32
      %345 = vector.broadcast %cst_83 : f32 to vector<16x128xf32>
      %346 = arith.addf %345, %344 : vector<16x128xf32>
      %347 = arith.divf %345, %346 : vector<16x128xf32>
      %348 = vector.extract_strided_slice %337 {offsets = [0, 128], sizes = [16, 128], strides = [1, 1]} : vector<16x384xf32> to vector<16x128xf32>
      %349 = vector.extract_strided_slice %339 {offsets = [0, 128], sizes = [16, 128], strides = [1, 1]} : vector<16x384xf32> to vector<16x128xf32>
      %350 = arith.addf %348, %349 : vector<16x128xf32>
      %351 = arith.negf %350 : vector<16x128xf32>
      %352 = math.exp %351 : vector<16x128xf32>
      %cst_84 = arith.constant 1.000000e+00 : f32
      %353 = vector.broadcast %cst_84 : f32 to vector<16x128xf32>
      %354 = arith.addf %353, %352 : vector<16x128xf32>
      %355 = arith.divf %353, %354 : vector<16x128xf32>
      %356 = vector.extract_strided_slice %337 {offsets = [0, 256], sizes = [16, 128], strides = [1, 1]} : vector<16x384xf32> to vector<16x128xf32>
      %357 = vector.extract_strided_slice %339 {offsets = [0, 256], sizes = [16, 128], strides = [1, 1]} : vector<16x384xf32> to vector<16x128xf32>
      %358 = vector.broadcast %25 : vector<1x128xf32> to vector<16x128xf32>
      %359 = arith.addf %357, %358 : vector<16x128xf32>
      %360 = arith.mulf %347, %359 : vector<16x128xf32>
      %361 = arith.addf %356, %360 : vector<16x128xf32>
      %362 = math.tanh %361 : vector<16x128xf32>
      %cst_85 = arith.constant 1.000000e+00 : f32
      %363 = vector.broadcast %cst_85 : f32 to vector<16x128xf32>
      %364 = arith.subf %363, %355 : vector<16x128xf32>
      %365 = arith.mulf %364, %362 : vector<16x128xf32>
      %366 = arith.mulf %355, %329 : vector<16x128xf32>
      %367 = arith.addf %365, %366 : vector<16x128xf32>
      %368 = arith.addi %0, %c7_i32 : i32
      %369 = vector.broadcast %368 : i32 to vector<16x1xi32>
      %370 = arith.cmpi slt, %369, %23 : vector<16x1xi32>
      %371 = vector.shape_cast %370 : vector<16x1xi1> to vector<16x1xi1>
      %372 = vector.broadcast %371 : vector<16x1xi1> to vector<16x128xi1>
      %373 = arith.select %372, %367, %329 : vector<16x128xi1>, vector<16x128xf32>
      %374 = arith.truncf %373 : vector<16x128xf32> to vector<16x128xbf16>
      %375 = arith.index_cast %c7_i32 : i32 to index
      %c0_86 = arith.constant 0 : index
      %c0_87 = arith.constant 0 : index
      %376 = vector.load %arg9[%375, %c0_86, %c0_87] : memref<8x16x128xbf16, #tpu.memory_space<vmem>>, vector<1x16x128xbf16>
      %377 = vector.shape_cast %376 : vector<1x16x128xbf16> to vector<16x128xbf16>
      %378 = vector.shape_cast %374 : vector<16x128xbf16> to vector<1x16x128xbf16>
      tpu.vector_store %arg9[%375, %c0_86, %c0_87], %378 {strides = array<i32>} : memref<8x16x128xbf16, #tpu.memory_space<vmem>>, vector<1x16x128xbf16>,
      %c8_i32_88 = arith.constant 8 : i32
      %c0_89 = arith.constant 0 : index
      %c0_90 = arith.constant 0 : index
      %379 = vector.load %arg12[%c0_89, %c0_90] : memref<16x128xf32, #tpu.memory_space<vmem>>, vector<16x128xf32>
      tpu.vector_store %arg12[%c0_89, %c0_90], %373 {strides = array<i32>} : memref<16x128xf32, #tpu.memory_space<vmem>>, vector<16x128xf32>,
    } else {
    }
    %8 = arith.cmpi sge, %0, %4 : i32
    %9 = arith.extui %8 : i1 to i32
    %c0_i32_2 = arith.constant 0 : i32
    %10 = arith.cmpi ne, %9, %c0_i32_2 : i32
    scf.if %10 {
      %cst = arith.constant 0.000000e+00 : bf16
      %14 = vector.broadcast %cst : bf16 to vector<8x16x128xbf16>
      %c0_5 = arith.constant 0 : index
      %c0_6 = arith.constant 0 : index
      %c0_7 = arith.constant 0 : index
      %15 = vector.load %arg9[%c0_5, %c0_6, %c0_7] : memref<8x16x128xbf16, #tpu.memory_space<vmem>>, vector<8x16x128xbf16>
      tpu.vector_store %arg9[%c0_5, %c0_6, %c0_7], %14 {strides = array<i32>} : memref<8x16x128xbf16, #tpu.memory_space<vmem>>, vector<8x16x128xbf16>,
    } else {
    }
    %c0_i32_3 = arith.constant 0 : i32
    %11 = arith.cmpi eq, %arg1, %c0_i32_3 : i32
    %12 = arith.extui %11 : i1 to i32
    %c0_i32_4 = arith.constant 0 : i32
    %13 = arith.cmpi ne, %12, %c0_i32_4 : i32
    scf.if %13 {
      %c0_5 = arith.constant 0 : index
      %c0_6 = arith.constant 0 : index
      %14 = vector.load %arg12[%c0_5, %c0_6] : memref<16x128xf32, #tpu.memory_space<vmem>>, vector<16x128xf32>
      %c0_7 = arith.constant 0 : index
      %c0_8 = arith.constant 0 : index
      %15 = vector.load %arg10[%c0_7, %c0_8] : memref<16x128xf32, #tpu.memory_space<vmem>>, vector<16x128xf32>
      tpu.vector_store %arg10[%c0_7, %c0_8], %14 {strides = array<i32>} : memref<16x128xf32, #tpu.memory_space<vmem>>, vector<16x128xf32>,
    } else {
    }
    return
  }
  func.func @transform_0(%arg0: i32, %arg1: i32, %arg2: memref<1xi32, #tpu.memory_space<smem>>) -> (i32, i32) {
    %c0_i32 = arith.constant 0 : i32
    %c0_i32_0 = arith.constant 0 : i32
    return %arg0, %c0_i32 : i32, i32
  }
  func.func @transform_1(%arg0: i32, %arg1: i32, %arg2: memref<1xi32, #tpu.memory_space<smem>>) -> (i32, i32, i32) {
    %c0_i32 = arith.constant 0 : i32
    %c0_i32_0 = arith.constant 0 : i32
    return %arg1, %arg0, %c0_i32 : i32, i32, i32
  }
  func.func @transform_2(%arg0: i32, %arg1: i32, %arg2: memref<1xi32, #tpu.memory_space<smem>>) -> (i32, i32) {
    %c0_i32 = arith.constant 0 : i32
    %c0_i32_0 = arith.constant 0 : i32
    %c0_i32_1 = arith.constant 0 : i32
    return %c0_i32, %c0_i32_0 : i32, i32
  }
  func.func @transform_3(%arg0: i32, %arg1: i32, %arg2: memref<1xi32, #tpu.memory_space<smem>>) -> (i32, i32) {
    %c0_i32 = arith.constant 0 : i32
    %c0_i32_0 = arith.constant 0 : i32
    %c0_i32_1 = arith.constant 0 : i32
    return %c0_i32, %c0_i32_0 : i32, i32
  }
  func.func @transform_4(%arg0: i32, %arg1: i32, %arg2: memref<1xi32, #tpu.memory_space<smem>>) -> (i32, i32) {
    %c0_i32 = arith.constant 0 : i32
    %c0_i32_0 = arith.constant 0 : i32
    %c0_i32_1 = arith.constant 0 : i32
    return %c0_i32, %c0_i32_0 : i32, i32
  }
  func.func @transform_5(%arg0: i32, %arg1: i32, %arg2: memref<1xi32, #tpu.memory_space<smem>>) -> (i32, i32) {
    %c0_i32 = arith.constant 0 : i32
    %c0_i32_0 = arith.constant 0 : i32
    %c0_i32_1 = arith.constant 0 : i32
    return %c0_i32, %c0_i32_0 : i32, i32
  }
  func.func @transform_6(%arg0: i32, %arg1: i32, %arg2: memref<1xi32, #tpu.memory_space<smem>>) -> (i32, i32, i32) {
    %c0_i32 = arith.constant 0 : i32
    %c0_i32_0 = arith.constant 0 : i32
    return %arg1, %arg0, %c0_i32 : i32, i32, i32
  }
  func.func @transform_7(%arg0: i32, %arg1: i32, %arg2: memref<1xi32, #tpu.memory_space<smem>>) -> (i32, i32) {
    %c0_i32 = arith.constant 0 : i32
    %c0_i32_0 = arith.constant 0 : i32
    return %arg0, %c0_i32 : i32, i32
  }
}

</mosaic_0001>

<llo_original>
// kernel: encoder_forward.2
$region0: #{encoder_forward.2}
  #allocation0 [shape = 'u32[]', space=smem, size = 0x4, offset = 0x4, fixed_abs, tag = 'smem constant byte address 0x4 - core index']
  #allocation1 [shape = 'u32[144,128]{1,0:T(1,128)}', space=vmem, size = 0x12000, scoped, tag = 'internal scratch']
  #allocation2 [shape = 'f32[8,16,384]{2,1,0:T(8,128)}', space=vmem, size = 0x30000, scoped, tag = 'scratch operand']
  #allocation3 [shape = 'f32[16,128]{1,0:T(8,128)}', space=vmem, size = 0x2000, scoped, tag = 'scratch operand']
  #allocation4 [shape = 's32[1]{0}', space=sflag, size = 0x4, scoped, tag = 'scoped memory for encoder_forward.2']
  #allocation5 [shape = 's32[1]{0:T(128)S(6)}', space=smem, size = 0x200, scoped, tag = 'prefetched SMEM operand 0']
  %s0 = inlined_call_operand.<no memory space> [shape: s32[1], index: 0, kind: input, shape index: {}]
  %s1 = inlined_call_operand.hbm [shape: s32[16,1], index: 1, kind: input, shape index: {}]
  %s2 = inlined_call_operand.hbm [shape: bf16[8,16,8], index: 2, kind: input, shape index: {}]
  %s3 = inlined_call_operand.hbm [shape: bf16[8,384], index: 3, kind: input, shape index: {}]
  %s4 = inlined_call_operand.hbm [shape: bf16[128,384], index: 4, kind: input, shape index: {}]
  %s5 = inlined_call_operand.hbm [shape: f32[1,384], index: 5, kind: input, shape index: {}]
  %s6 = inlined_call_operand.hbm [shape: f32[1,128], index: 6, kind: input, shape index: {}]
  %s7 = inlined_call_operand.hbm [shape: bf16[8,16,128], index: 7, kind: output, shape index: {0}]
  %s8 = inlined_call_operand.hbm [shape: f32[16,128], index: 8, kind: output, shape index: {1}]
  %9 = xla_tuple %s7, %s8
  %s10 = sld [smem:[#allocation0]]
  $region82: #{encoder_forward.2} parent=0
    _
  %s12 = ssub.s32 1, %s10
  %s13 = scalar_select 0, %s12, %s10
  %14 = sst [smem:[#allocation5]] %s0
  $region1: #{encoder_forward.2} parent=0
    #allocation6 [shape = 'u8[8192]{0}', space=vmem, size = 0x2000, scoped, tag = 'input window, operand 1, single buffered']
    #allocation7 [shape = 's32[1]{0}', space=sflag, size = 0x4, scoped, tag = 'scoped memory for encoder_forward.2']
    #allocation8 [shape = 's32[1]{0}', space=sflag, size = 0x4, scoped, tag = 'scoped memory for encoder_forward.2']
    #allocation9 [shape = 'u8[32768]{0}', space=vmem, size = 0x8000, scoped, tag = 'input window, operand 2, single buffered']
    #allocation10 [shape = 's32[1]{0}', space=sflag, size = 0x4, scoped, tag = 'scoped memory for encoder_forward.2']
    #allocation11 [shape = 'u8[6144]{0}', space=vmem, size = 0x1800, scoped, tag = 'input window, operand 3, single buffered']
    #allocation12 [shape = 'u8[98304]{0}', space=vmem, size = 0x18000, scoped, tag = 'input window, operand 4, single buffered']
    #allocation13 [shape = 's32[1]{0}', space=sflag, size = 0x4, scoped, tag = 'scoped memory for encoder_forward.2']
    #allocation14 [shape = 'u8[1536]{0}', space=vmem, size = 0x800, scoped, tag = 'input window, operand 5, single buffered']
    #allocation15 [shape = 'u8[512]{0}', space=vmem, size = 0x400, scoped, tag = 'input window, operand 6, single buffered']
    #allocation16 [shape = 's32[1]{0}', space=sflag, size = 0x4, scoped, tag = 'scoped memory for encoder_forward.2']
    #allocation17 [shape = 'u8[32768]{0}', space=vmem, size = 0x8000, scoped, tag = 'output window, operand 0, single buffered']
    #allocation18 [shape = 'u8[8192]{0}', space=vmem, size = 0x2000, scoped, tag = 'output window, operand 1, single buffered']
    #allocation19 [shape = 's32[1]{0}', space=sflag, size = 0x4, scoped, tag = 'scoped memory for encoder_forward.2']
    %15 = vsyncpa [#allocation7], 0
    %16 = vsyncpa [#allocation10], 0
    %17 = vsyncpa [#allocation13], 0
    %18 = vsyncpa [#allocation16], 0
    %19 = vsyncpa [#allocation8], 0
    %20 = vsyncpa [#allocation19], 0
    // Predicated region
    $region2: #{encoder_forward.2} parent=1 // pred_check
      _
    $region3: #{encoder_forward.2} parent=1 // pred_check_branch
      %22 = sbr.rel (0) target = $region5
    $region4: #{encoder_forward.2} parent=1 // pred_region
      %s24 = ssub.s32 256, 256
      %25 = vsyncadd [#allocation7], %s24
      %s26 = sshll.u32 [#allocation6], 4
      %s27 = int_to_ptr.vmem [resolvable:$true] %s26
      %32 = dma.hbm_to_vmem [thread:$0]  %s1, 256, %s27, [#allocation7], 128, 128, 8
    $region5: #{encoder_forward.2} parent=1 // pred_fallthru
      _
    // Predicated region
    $region6: #{encoder_forward.2} parent=1 // pred_check
      _
    $region7: #{encoder_forward.2} parent=1 // pred_check_branch
      %34 = sbr.rel (0) target = $region9
    $region8: #{encoder_forward.2} parent=1 // pred_region
      %s36 = ssub.s32 1024, 1024
      %37 = vsyncadd [#allocation10], %s36
      %s38 = sshll.u32 [#allocation9], 4
      %s39 = int_to_ptr.vmem [resolvable:$true] %s38
      %44 = dma.hbm_to_vmem [thread:$0]  %s2, 1024, %s39, [#allocation10], 64, 64, 4
    $region9: #{encoder_forward.2} parent=1 // pred_fallthru
      _
    // Predicated region
    $region10: #{encoder_forward.2} parent=1 // pred_check
      _
    $region11: #{encoder_forward.2} parent=1 // pred_check_branch
      %46 = sbr.rel (0) target = $region13
    $region12: #{encoder_forward.2} parent=1 // pred_region
      %s48 = ssub.s32 192, 192
      %49 = vsyncadd [#allocation10], %s48
      %s51 = sshll.u32 [#allocation11], 4
      %s52 = int_to_ptr.vmem [resolvable:$true] %s51
      %54 = dma.hbm_to_vmem [thread:$0]  %s3, 192, %s52, [#allocation10]
    $region13: #{encoder_forward.2} parent=1 // pred_fallthru
      _
    // Predicated region
    $region14: #{encoder_forward.2} parent=1 // pred_check
      _
    $region15: #{encoder_forward.2} parent=1 // pred_check_branch
      %56 = sbr.rel (0) target = $region17
    $region16: #{encoder_forward.2} parent=1 // pred_region
      %s58 = ssub.s32 3072, 3072
      %59 = vsyncadd [#allocation13], %s58
      %s60 = sshll.u32 [#allocation12], 4
      %s61 = int_to_ptr.vmem [resolvable:$true] %s60
      %66 = dma.hbm_to_vmem [thread:$0]  %s4, 3072, %s61, [#allocation13], 192, 192, 12
    $region17: #{encoder_forward.2} parent=1 // pred_fallthru
      _
    // Predicated region
    $region18: #{encoder_forward.2} parent=1 // pred_check
      _
    $region19: #{encoder_forward.2} parent=1 // pred_check_branch
      %68 = sbr.rel (0) target = $region21
    $region20: #{encoder_forward.2} parent=1 // pred_region
      %s70 = ssub.s32 48, 48
      %71 = vsyncadd [#allocation13], %s70
      %s73 = sshll.u32 [#allocation14], 4
      %s74 = int_to_ptr.vmem [resolvable:$true] %s73
      %76 = dma.hbm_to_vmem [thread:$0]  %s5, 48, %s74, [#allocation13]
    $region21: #{encoder_forward.2} parent=1 // pred_fallthru
      _
    // Predicated region
    $region22: #{encoder_forward.2} parent=1 // pred_check
      _
    $region23: #{encoder_forward.2} parent=1 // pred_check_branch
      %78 = sbr.rel (0) target = $region25
    $region24: #{encoder_forward.2} parent=1 // pred_region
      %s80 = ssub.s32 16, 16
      %81 = vsyncadd [#allocation16], %s80
      %s83 = sshll.u32 [#allocation15], 4
      %s84 = int_to_ptr.vmem [resolvable:$true] %s83
      %86 = dma.hbm_to_vmem [thread:$0]  %s6, 16, %s84, [#allocation16]
    $region25: #{encoder_forward.2} parent=1 // pred_fallthru
      _
    // Predicated region
    $region26: #{encoder_forward.2} parent=1 // pred_check
      _
    $region27: #{encoder_forward.2} parent=1 // pred_check_branch
      %88 = sbr.rel (0) target = $region29
    $region28: #{encoder_forward.2} parent=1 // pred_region
      %89 = dma.done [#allocation7], 256
    $region29: #{encoder_forward.2} parent=1 // pred_fallthru
      _
    // Predicated region
    $region30: #{encoder_forward.2} parent=1 // pred_check
      _
    $region31: #{encoder_forward.2} parent=1 // pred_check_branch
      %91 = sbr.rel (0) target = $region33
    $region32: #{encoder_forward.2} parent=1 // pred_region
      %92 = dma.done [#allocation10], 1024
    $region33: #{encoder_forward.2} parent=1 // pred_fallthru
      _
    // Predicated region
    $region34: #{encoder_forward.2} parent=1 // pred_check
      _
    $region35: #{encoder_forward.2} parent=1 // pred_check_branch
      %94 = sbr.rel (0) target = $region37
    $region36: #{encoder_forward.2} parent=1 // pred_region
      %95 = dma.done [#allocation10], 192
    $region37: #{encoder_forward.2} parent=1 // pred_fallthru
      _
    // Predicated region
    $region38: #{encoder_forward.2} parent=1 // pred_check
      _
    $region39: #{encoder_forward.2} parent=1 // pred_check_branch
      %97 = sbr.rel (0) target = $region41
    $region40: #{encoder_forward.2} parent=1 // pred_region
      %98 = dma.done [#allocation13], 3072
    $region41: #{encoder_forward.2} parent=1 // pred_fallthru
      _
    // Predicated region
    $region42: #{encoder_forward.2} parent=1 // pred_check
      _
    $region43: #{encoder_forward.2} parent=1 // pred_check_branch
      %100 = sbr.rel (0) target = $region45
    $region44: #{encoder_forward.2} parent=1 // pred_region
      %101 = dma.done [#allocation13], 48
    $region45: #{encoder_forward.2} parent=1 // pred_fallthru
      _
    // Predicated region
    $region46: #{encoder_forward.2} parent=1 // pred_check
      _
    $region47: #{encoder_forward.2} parent=1 // pred_check_branch
      %103 = sbr.rel (0) target = $region49
    $region48: #{encoder_forward.2} parent=1 // pred_region
      %104 = dma.done [#allocation16], 16
    $region49: #{encoder_forward.2} parent=1 // pred_fallthru
      _
    %s106 = smul.u32 0, 8
    %p107 = scmp.eq.s32.totalorder 0, 0
    // Predicated region
    $region50: #{encoder_forward.2} parent=1 // pred_check
      %p108 = pneg %p107
    $region51: #{encoder_forward.2} parent=1 // pred_check_branch
      %110 = sbr.rel (%p108) target = $region53
    $region52: #{encoder_forward.2} parent=1 // pred_region
      %111 = vst [vmem:[#allocation3] sm:$0xff] 0.0
      %112 = vst [vmem:[#allocation3 + $0x8] sm:$0xff] 0.0
    $region53: #{encoder_forward.2} parent=1 // pred_fallthru
      _
    %s113 = sld [smem:[#allocation5]]
    %p114 = scmp.lt.s32.totalorder %s106, %s113
    // Predicated region
    $region54: #{encoder_forward.2} parent=1 // pred_check
      %p115 = pneg %p114
    $region55: #{encoder_forward.2} parent=1 // pred_check_branch
      %117 = sbr.rel (%p115) target = $region57
    $region56: #{encoder_forward.2} parent=1 // pred_region
      %v118 = vld [vmem:[#allocation9] sm:$0xf]
      %v119 = vld [vmem:[#allocation9 + $0x4] sm:$0xf]
      %v120 = vld [vmem:[#allocation9 + $0x8] sm:$0xf]
      %v121 = vld [vmem:[#allocation9 + $0xc] sm:$0xf]
      %v122 = vld [vmem:[#allocation9 + $0x10] sm:$0xf]
      %v123 = vld [vmem:[#allocation9 + $0x14] sm:$0xf]
      %v124 = vld [vmem:[#allocation9 + $0x18] sm:$0xf]
      %v125 = vld [vmem:[#allocation9 + $0x1c] sm:$0xf]
      %v126 = vld [vmem:[#allocation9 + $0x20] sm:$0xf]
      %v127 = vld [vmem:[#allocation9 + $0x24] sm:$0xf]
      %v128 = vld [vmem:[#allocation9 + $0x28] sm:$0xf]
      %v129 = vld [vmem:[#allocation9 + $0x2c] sm:$0xf]
      %v130 = vld [vmem:[#allocation9 + $0x30] sm:$0xf]
      %v131 = vld [vmem:[#allocation9 + $0x34] sm:$0xf]
      %v132 = vld [vmem:[#allocation9 + $0x38] sm:$0xf]
      %v133 = vld [vmem:[#allocation9 + $0x3c] sm:$0xf]
      %v134 = vld [vmem:[#allocation11] sm:$0xff]
      %v135 = vld [vmem:[#allocation11 + $0x8] sm:$0xf]
      %v136 = vld [vmem:[#allocation14] sm:$0x7]
      %v138 = vlaneseq
      %v139 = vshrl.u32 %v138, 7
      %v140 = vsub.s32 0, %v139
      %v141 = vrot.slane %v136, %v140
      %v142 = vlaneseq
      %v143 = vshrl.u32 %v142, 7
      %v144 = vsub.s32 1, %v143
      %v145 = vrot.slane %v136, %v144
      %v146 = vlaneseq
      %v147 = vshrl.u32 %v146, 7
      %v148 = vsub.s32 2, %v147
      %v149 = vrot.slane %v136, %v148
      %v169 = vunpack.c.l.b16 %v118
      %v170 = vunpack.c.l.b16 %v119
      %v171 = vunpack.c.l.b16 %v120
      %v172 = vunpack.c.l.b16 %v121
      %v173 = vunpack.c.l.b16 %v122
      %v174 = vunpack.c.l.b16 %v123
      %v175 = vunpack.c.l.b16 %v124
      %v176 = vunpack.c.l.b16 %v125
      %v177 = vunpack.c.l.b16 %v126
      %v178 = vunpack.c.l.b16 %v127
      %v179 = vunpack.c.l.b16 %v128
      %v180 = vunpack.c.l.b16 %v129
      %v181 = vunpack.c.l.b16 %v130
      %v182 = vunpack.c.l.b16 %v131
      %v183 = vunpack.c.l.b16 %v132
      %v184 = vunpack.c.l.b16 %v133
      %v185 = vpack.c.b16 %v170, %v169
      %v186 = vpack.c.b16 %v172, %v171
      %v187 = vpack.c.b16 %v174, %v173
      %v188 = vpack.c.b16 %v176, %v175
      %v189 = vpack.c.b16 %v178, %v177
      %v190 = vpack.c.b16 %v180, %v179
      %v191 = vpack.c.b16 %v182, %v181
      %v192 = vpack.c.b16 %v184, %v183
      %v195 = vunpack.c.l.b16 %v134
      %v196 = vunpack.c.h.b16 %v134
      %v197 = vunpack.c.l.b16 %v135
      %v198 = vpack.c.b16 %v195, %v195
      %v199 = vpack.c.b16 %v196, %v196
      %v200 = vpack.c.b16 %v197, %v197
      %vm201 = vcmask 64512
      %v203 = vsel %vm201, %v185, 0
      %v206 = vsel %vm201, %v186, 0
      %v209 = vsel %vm201, %v187, 0
      %v212 = vsel %vm201, %v188, 0
      %v215 = vsel %vm201, %v189, 0
      %v218 = vsel %vm201, %v190, 0
      %v221 = vsel %vm201, %v191, 0
      %v224 = vsel %vm201, %v192, 0
      %vm226 = vcmask 1043456
      %v228 = vsel %vm226, %v198, 0
      %v231 = vsel %vm226, %v199, 0
      %v234 = vsel %vm226, %v200, 0
      %236 = vmatprep.subr.bf16.mxu0 %v231
      %237 = vmatpush1.bf16.msra.mxu0 %v228
      %238 = vmatprep.subr.bf16.mxu0 0
      %239 = vmatpush1.bf16.msra.mxu0 0
      %240 = vmatprep.subr.bf16.mxu0 0
      %241 = vmatpush1.bf16.msra.mxu0 0
      %242 = vmatprep.subr.bf16.mxu0 0
      %243 = vmatpush1.bf16.msra.mxu0 0
      %244 = vmatprep.subr.bf16.mxu0 0
      %245 = vmatpush1.bf16.msra.mxu0 0
      %246 = vmatprep.subr.bf16.mxu0 0
      %247 = vmatpush1.bf16.msra.mxu0 0
      %248 = vmatprep.subr.bf16.mxu0 0
      %249 = vmatpush1.bf16.msra.mxu0 0
      %250 = vmatprep.subr.bf16.mxu0 0
      %251 = vmatpush1.bf16.msra.mxu0 0
      %252 = vmatprep.subr.bf16.mxu0 0
      %253 = vmatpush1.bf16.msra.mxu0 0
      %254 = vmatprep.subr.bf16.mxu0 0
      %255 = vmatpush1.bf16.msra.mxu0 0
      %256 = vmatprep.subr.bf16.mxu0 0
      %257 = vmatpush1.bf16.msra.mxu0 0
      %258 = vmatprep.subr.bf16.mxu0 0
      %259 = vmatpush1.bf16.msra.mxu0 0
      %260 = vmatprep.subr.bf16.mxu0 0
      %261 = vmatpush1.bf16.msra.mxu0 0
      %262 = vmatprep.subr.bf16.mxu0 0
      %263 = vmatpush1.bf16.msra.mxu0 0
      %264 = vmatprep.subr.bf16.mxu0 0
      %265 = vmatpush1.bf16.msra.mxu0 0
      %266 = vmatprep.subr.bf16.mxu0 0
      %267 = vmatpush1.bf16.msra.mxu0 0
      %268 = vmatprep.mubr.bf16.mxu0 0
      %269 = vmatmul.mubr.bf16.gmra.mrb[0].mxu0 %v203
      %v270 = vpop.f32.mrb[0].mxu0
      %v271 = vadd.f32 %v141, %v270
      %v272 = vpop.f32.mrb[0].mxu0
      %v273 = vadd.f32 %v145, %v272
      %v274 = vpop.f32.mrb[0].mxu0
      %v275 = vadd.f32 %v141, %v274
      %v276 = vpop.f32.mrb[0].mxu0
      %v277 = vadd.f32 %v145, %v276
      %278 = vmatprep.mubr.bf16.mxu0 0
      %279 = vmatmul.mubr.bf16.gmra.mrb[0].mxu0 %v206
      %v280 = vpop.f32.mrb[0].mxu0
      %v281 = vadd.f32 %v141, %v280
      %v282 = vpop.f32.mrb[0].mxu0
      %v283 = vadd.f32 %v145, %v282
      %v284 = vpop.f32.mrb[0].mxu0
      %v285 = vadd.f32 %v141, %v284
      %v286 = vpop.f32.mrb[0].mxu0
      %v287 = vadd.f32 %v145, %v286
      %288 = vmatprep.mubr.bf16.mxu0 0
      %289 = vmatmul.mubr.bf16.gmra.mrb[0].mxu0 %v209
      %v290 = vpop.f32.mrb[0].mxu0
      %v291 = vadd.f32 %v141, %v290
      %v292 = vpop.f32.mrb[0].mxu0
      %v293 = vadd.f32 %v145, %v292
      %v294 = vpop.f32.mrb[0].mxu0
      %v295 = vadd.f32 %v141, %v294
      %v296 = vpop.f32.mrb[0].mxu0
      %v297 = vadd.f32 %v145, %v296
      %298 = vmatprep.mubr.bf16.mxu0 0
      %299 = vmatmul.mubr.bf16.gmra.mrb[0].mxu0 %v212
      %v300 = vpop.f32.mrb[0].mxu0
      %v301 = vadd.f32 %v141, %v300
      %v302 = vpop.f32.mrb[0].mxu0
      %v303 = vadd.f32 %v145, %v302
      %v304 = vpop.f32.mrb[0].mxu0
      %v305 = vadd.f32 %v141, %v304
      %v306 = vpop.f32.mrb[0].mxu0
      %v307 = vadd.f32 %v145, %v306
      %308 = vmatprep.mubr.bf16.mxu0 0
      %309 = vmatmul.mubr.bf16.gmra.mrb[0].mxu0 %v215
      %v310 = vpop.f32.mrb[0].mxu0
      %v311 = vadd.f32 %v141, %v310
      %v312 = vpop.f32.mrb[0].mxu0
      %v313 = vadd.f32 %v145, %v312
      %v314 = vpop.f32.mrb[0].mxu0
      %v315 = vadd.f32 %v141, %v314
      %v316 = vpop.f32.mrb[0].mxu0
      %v317 = vadd.f32 %v145, %v316
      %318 = vmatprep.mubr.bf16.mxu0 0
      %319 = vmatmul.mubr.bf16.gmra.mrb[0].mxu0 %v218
      %v320 = vpop.f32.mrb[0].mxu0
      %v321 = vadd.f32 %v141, %v320
      %v322 = vpop.f32.mrb[0].mxu0
      %v323 = vadd.f32 %v145, %v322
      %v324 = vpop.f32.mrb[0].mxu0
      %v325 = vadd.f32 %v141, %v324
      %v326 = vpop.f32.mrb[0].mxu0
      %v327 = vadd.f32 %v145, %v326
      %328 = vmatprep.mubr.bf16.mxu0 0
      %329 = vmatmul.mubr.bf16.gmra.mrb[0].mxu0 %v221
      %v330 = vpop.f32.mrb[0].mxu0
      %v331 = vadd.f32 %v141, %v330
      %v332 = vpop.f32.mrb[0].mxu0
      %v333 = vadd.f32 %v145, %v332
      %v334 = vpop.f32.mrb[0].mxu0
      %v335 = vadd.f32 %v141, %v334
      %v336 = vpop.f32.mrb[0].mxu0
      %v337 = vadd.f32 %v145, %v336
      %338 = vmatprep.mubr.bf16.mxu0 0
      %339 = vmatmul.mubr.bf16.gmra.mrb[0].mxu0 %v224
      %v340 = vpop.f32.mrb[0].mxu0
      %v341 = vadd.f32 %v141, %v340
      %v342 = vpop.f32.mrb[0].mxu0
      %v343 = vadd.f32 %v145, %v342
      %v344 = vpop.f32.mrb[0].mxu0
      %v345 = vadd.f32 %v141, %v344
      %v346 = vpop.f32.mrb[0].mxu0
      %v347 = vadd.f32 %v145, %v346
      %348 = vdwg.mxu0
      %349 = vmatprep.subr.bf16.mxu0 0
      %350 = vmatpush1.bf16.msra.mxu0 %v234
      %351 = vmatprep.subr.bf16.mxu0 0
      %352 = vmatpush1.bf16.msra.mxu0 0
      %353 = vmatprep.subr.bf16.mxu0 0
      %354 = vmatpush1.bf16.msra.mxu0 0
      %355 = vmatprep.subr.bf16.mxu0 0
      %356 = vmatpush1.bf16.msra.mxu0 0
      %357 = vmatprep.subr.bf16.mxu0 0
      %358 = vmatpush1.bf16.msra.mxu0 0
      %359 = vmatprep.subr.bf16.mxu0 0
      %360 = vmatpush1.bf16.msra.mxu0 0
      %361 = vmatprep.subr.bf16.mxu0 0
      %362 = vmatpush1.bf16.msra.mxu0 0
      %363 = vmatprep.subr.bf16.mxu0 0
      %364 = vmatpush1.bf16.msra.mxu0 0
      %365 = vmatprep.subr.bf16.mxu0 0
      %366 = vmatpush1.bf16.msra.mxu0 0
      %367 = vmatprep.subr.bf16.mxu0 0
      %368 = vmatpush1.bf16.msra.mxu0 0
      %369 = vmatprep.subr.bf16.mxu0 0
      %370 = vmatpush1.bf16.msra.mxu0 0
      %371 = vmatprep.subr.bf16.mxu0 0
      %372 = vmatpush1.bf16.msra.mxu0 0
      %373 = vmatprep.subr.bf16.mxu0 0
      %374 = vmatpush1.bf16.msra.mxu0 0
      %375 = vmatprep.subr.bf16.mxu0 0
      %376 = vmatpush1.bf16.msra.mxu0 0
      %377 = vmatprep.subr.bf16.mxu0 0
      %378 = vmatpush1.bf16.msra.mxu0 0
      %379 = vmatprep.subr.bf16.mxu0 0
      %380 = vmatpush1.bf16.msra.mxu0 0
      %381 = vmatprep.mubr.bf16.mxu0 0
      %382 = vmatmul.mubr.bf16.gmra.mrb[0].mxu0 %v203
      %v383 = vpop.f32.mrb[0].mxu0
      %v384 = vadd.f32 %v149, %v383
      %v385 = vpop.f32.mrb[0].mxu0
      %v386 = vpop.f32.mrb[0].mxu0
      %v387 = vadd.f32 %v149, %v386
      %v388 = vpop.f32.mrb[0].mxu0
      %389 = vmatprep.mubr.bf16.mxu0 0
      %390 = vmatmul.mubr.bf16.gmra.mrb[0].mxu0 %v206
      %v391 = vpop.f32.mrb[0].mxu0
      %v392 = vadd.f32 %v149, %v391
      %v393 = vpop.f32.mrb[0].mxu0
      %v394 = vpop.f32.mrb[0].mxu0
      %v395 = vadd.f32 %v149, %v394
      %v396 = vpop.f32.mrb[0].mxu0
      %397 = vmatprep.mubr.bf16.mxu0 0
      %398 = vmatmul.mubr.bf16.gmra.mrb[0].mxu0 %v209
      %v399 = vpop.f32.mrb[0].mxu0
      %v400 = vadd.f32 %v149, %v399
      %v401 = vpop.f32.mrb[0].mxu0
      %v402 = vpop.f32.mrb[0].mxu0
      %v403 = vadd.f32 %v149, %v402
      %v404 = vpop.f32.mrb[0].mxu0
      %405 = vmatprep.mubr.bf16.mxu0 0
      %406 = vmatmul.mubr.bf16.gmra.mrb[0].mxu0 %v212
      %v407 = vpop.f32.mrb[0].mxu0
      %v408 = vadd.f32 %v149, %v407
      %v409 = vpop.f32.mrb[0].mxu0
      %v410 = vpop.f32.mrb[0].mxu0
      %v411 = vadd.f32 %v149, %v410
      %v412 = vpop.f32.mrb[0].mxu0
      %413 = vmatprep.mubr.bf16.mxu0 0
      %414 = vmatmul.mubr.bf16.gmra.mrb[0].mxu0 %v215
      %v415 = vpop.f32.mrb[0].mxu0
      %v416 = vadd.f32 %v149, %v415
      %v417 = vpop.f32.mrb[0].mxu0
      %v418 = vpop.f32.mrb[0].mxu0
      %v419 = vadd.f32 %v149, %v418
      %v420 = vpop.f32.mrb[0].mxu0
      %421 = vmatprep.mubr.bf16.mxu0 0
      %422 = vmatmul.mubr.bf16.gmra.mrb[0].mxu0 %v218
      %v423 = vpop.f32.mrb[0].mxu0
      %v424 = vadd.f32 %v149, %v423
      %v425 = vpop.f32.mrb[0].mxu0
      %v426 = vpop.f32.mrb[0].mxu0
      %v427 = vadd.f32 %v149, %v426
      %v428 = vpop.f32.mrb[0].mxu0
      %429 = vmatprep.mubr.bf16.mxu0 0
      %430 = vmatmul.mubr.bf16.gmra.mrb[0].mxu0 %v221
      %v431 = vpop.f32.mrb[0].mxu0
      %v432 = vadd.f32 %v149, %v431
      %v433 = vpop.f32.mrb[0].mxu0
      %v434 = vpop.f32.mrb[0].mxu0
      %v435 = vadd.f32 %v149, %v434
      %v436 = vpop.f32.mrb[0].mxu0
      %437 = vmatprep.mubr.bf16.mxu0 0
      %438 = vmatmul.mubr.bf16.gmra.mrb[0].mxu0 %v224
      %v439 = vpop.f32.mrb[0].mxu0
      %v440 = vadd.f32 %v149, %v439
      %v441 = vpop.f32.mrb[0].mxu0
      %v442 = vpop.f32.mrb[0].mxu0
      %v443 = vadd.f32 %v149, %v442
      %v444 = vpop.f32.mrb[0].mxu0
      %445 = vdwg.mxu0
      %446 = vst [vmem:[#allocation2] sm:$0xff] %v271
      %447 = vst [vmem:[#allocation2 + $0x8] sm:$0xff] %v273
      %448 = vst [vmem:[#allocation2 + $0x10] sm:$0xff] %v384
      %449 = vst [vmem:[#allocation2 + $0x18] sm:$0xff] %v275
      %450 = vst [vmem:[#allocation2 + $0x20] sm:$0xff] %v277
      %451 = vst [vmem:[#allocation2 + $0x28] sm:$0xff] %v387
      %452 = vst [vmem:[#allocation2 + $0x30] sm:$0xff] %v281
      %453 = vst [vmem:[#allocation2 + $0x38] sm:$0xff] %v283
      %454 = vst [vmem:[#allocation2 + $0x40] sm:$0xff] %v392
      %455 = vst [vmem:[#allocation2 + $0x48] sm:$0xff] %v285
      %456 = vst [vmem:[#allocation2 + $0x50] sm:$0xff] %v287
      %457 = vst [vmem:[#allocation2 + $0x58] sm:$0xff] %v395
      %458 = vst [vmem:[#allocation2 + $0x60] sm:$0xff] %v291
      %459 = vst [vmem:[#allocation2 + $0x68] sm:$0xff] %v293
      %460 = vst [vmem:[#allocation2 + $0x70] sm:$0xff] %v400
      %461 = vst [vmem:[#allocation2 + $0x78] sm:$0xff] %v295
      %462 = vst [vmem:[#allocation2 + $0x80] sm:$0xff] %v297
      %463 = vst [vmem:[#allocation2 + $0x88] sm:$0xff] %v403
      %464 = vst [vmem:[#allocation2 + $0x90] sm:$0xff] %v301
      %465 = vst [vmem:[#allocation2 + $0x98] sm:$0xff] %v303
      %466 = vst [vmem:[#allocation2 + $0xa0] sm:$0xff] %v408
      %467 = vst [vmem:[#allocation2 + $0xa8] sm:$0xff] %v305
      %468 = vst [vmem:[#allocation2 + $0xb0] sm:$0xff] %v307
      %469 = vst [vmem:[#allocation2 + $0xb8] sm:$0xff] %v411
      %470 = vst [vmem:[#allocation2 + $0xc0] sm:$0xff] %v311
      %471 = vst [vmem:[#allocation2 + $0xc8] sm:$0xff] %v313
      %472 = vst [vmem:[#allocation2 + $0xd0] sm:$0xff] %v416
      %473 = vst [vmem:[#allocation2 + $0xd8] sm:$0xff] %v315
      %474 = vst [vmem:[#allocation2 + $0xe0] sm:$0xff] %v317
      %475 = vst [vmem:[#allocation2 + $0xe8] sm:$0xff] %v419
      %476 = vst [vmem:[#allocation2 + $0xf0] sm:$0xff] %v321
      %477 = vst [vmem:[#allocation2 + $0xf8] sm:$0xff] %v323
      %478 = vst [vmem:[#allocation2 + $0x100] sm:$0xff] %v424
      %479 = vst [vmem:[#allocation2 + $0x108] sm:$0xff] %v325
      %480 = vst [vmem:[#allocation2 + $0x110] sm:$0xff] %v327
      %481 = vst [vmem:[#allocation2 + $0x118] sm:$0xff] %v427
      %482 = vst [vmem:[#allocation2 + $0x120] sm:$0xff] %v331
      %483 = vst [vmem:[#allocation2 + $0x128] sm:$0xff] %v333
      %484 = vst [vmem:[#allocation2 + $0x130] sm:$0xff] %v432
      %485 = vst [vmem:[#allocation2 + $0x138] sm:$0xff] %v335
      %486 = vst [vmem:[#allocation2 + $0x140] sm:$0xff] %v337
      %487 = vst [vmem:[#allocation2 + $0x148] sm:$0xff] %v435
      %488 = vst [vmem:[#allocation2 + $0x150] sm:$0xff] %v341
      %489 = vst [vmem:[#allocation2 + $0x158] sm:$0xff] %v343
      %490 = vst [vmem:[#allocation2 + $0x160] sm:$0xff] %v440
      %491 = vst [vmem:[#allocation2 + $0x168] sm:$0xff] %v345
      %492 = vst [vmem:[#allocation2 + $0x170] sm:$0xff] %v347
      %493 = vst [vmem:[#allocation2 + $0x178] sm:$0xff] %v443
      %v494 = vld [vmem:[#allocation6] sm:$0xff]
      %v495 = vld [vmem:[#allocation6 + $0x8] sm:$0xff]
      %v496 = vld [vmem:[#allocation12] sm:$0xff]
      %v497 = vld [vmem:[#allocation12 + $0x8] sm:$0xf]
      %v498 = vld [vmem:[#allocation12 + $0xc] sm:$0xff]
      %v499 = vld [vmem:[#allocation12 + $0x14] sm:$0xf]
      %v500 = vld [vmem:[#allocation12 + $0x18] sm:$0xff]
      %v501 = vld [vmem:[#allocation12 + $0x20] sm:$0xf]
      %v502 = vld [vmem:[#allocation12 + $0x24] sm:$0xff]
      %v503 = vld [vmem:[#allocation12 + $0x2c] sm:$0xf]
      %v504 = vld [vmem:[#allocation12 + $0x30] sm:$0xff]
      %v505 = vld [vmem:[#allocation12 + $0x38] sm:$0xf]
      %v506 = vld [vmem:[#allocation12 + $0x3c] sm:$0xff]
      %v507 = vld [vmem:[#allocation12 + $0x44] sm:$0xf]
      %v508 = vld [vmem:[#allocation12 + $0x48] sm:$0xff]
      %v509 = vld [vmem:[#allocation12 + $0x50] sm:$0xf]
      %v510 = vld [vmem:[#allocation12 + $0x54] sm:$0xff]
      %v511 = vld [vmem:[#allocation12 + $0x5c] sm:$0xf]
      %v512 = vld [vmem:[#allocation12 + $0x60] sm:$0xff]
      %v513 = vld [vmem:[#allocation12 + $0x68] sm:$0xf]
      %v514 = vld [vmem:[#allocation12 + $0x6c] sm:$0xff]
      %v515 = vld [vmem:[#allocation12 + $0x74] sm:$0xf]
      %v516 = vld [vmem:[#allocation12 + $0x78] sm:$0xff]
      %v517 = vld [vmem:[#allocation12 + $0x80] sm:$0xf]
      %v518 = vld [vmem:[#allocation12 + $0x84] sm:$0xff]
      %v519 = vld [vmem:[#allocation12 + $0x8c] sm:$0xf]
      %v520 = vld [vmem:[#allocation12 + $0x90] sm:$0xff]
      %v521 = vld [vmem:[#allocation12 + $0x98] sm:$0xf]
      %v522 = vld [vmem:[#allocation12 + $0x9c] sm:$0xff]
      %v523 = vld [vmem:[#allocation12 + $0xa4] sm:$0xf]
      %v524 = vld [vmem:[#allocation12 + $0xa8] sm:$0xff]
      %v525 = vld [vmem:[#allocation12 + $0xb0] sm:$0xf]
      %v526 = vld [vmem:[#allocation12 + $0xb4] sm:$0xff]
      %v527 = vld [vmem:[#allocation12 + $0xbc] sm:$0xf]
      %v528 = vld [vmem:[#allocation15] sm:$0x1]
      %v529 = vld [vmem:[#allocation3] sm:$0xff]
      %v530 = vld [vmem:[#allocation3 + $0x8] sm:$0xff]
      %v531 = vld [vmem:[#allocation2] sm:$0xff]
      %v532 = vld [vmem:[#allocation2 + $0x8] sm:$0xff]
      %v533 = vld [vmem:[#allocation2 + $0x10] sm:$0xff]
      %v534 = vld [vmem:[#allocation2 + $0x18] sm:$0xff]
      %v535 = vld [vmem:[#allocation2 + $0x20] sm:$0xff]
      %v536 = vld [vmem:[#allocation2 + $0x28] sm:$0xff]
      %v537 = vpack.c.bf16 %v530, %v529
      %v570 = vunpack.c.l.b16 %v496
      %v571 = vunpack.c.h.b16 %v496
      %v572 = vunpack.c.l.b16 %v497
      %v573 = vunpack.c.l.b16 %v498
      %v574 = vunpack.c.h.b16 %v498
      %v575 = vunpack.c.l.b16 %v499
      %v576 = vunpack.c.l.b16 %v500
      %v577 = vunpack.c.h.b16 %v500
      %v578 = vunpack.c.l.b16 %v501
      %v579 = vunpack.c.l.b16 %v502
      %v580 = vunpack.c.h.b16 %v502
      %v581 = vunpack.c.l.b16 %v503
      %v582 = vunpack.c.l.b16 %v504
      %v583 = vunpack.c.h.b16 %v504
      %v584 = vunpack.c.l.b16 %v505
      %v585 = vunpack.c.l.b16 %v506
      %v586 = vunpack.c.h.b16 %v506
      %v587 = vunpack.c.l.b16 %v507
      %v588 = vunpack.c.l.b16 %v508
      %v589 = vunpack.c.h.b16 %v508
      %v590 = vunpack.c.l.b16 %v509
      %v591 = vunpack.c.l.b16 %v510
      %v592 = vunpack.c.h.b16 %v510
      %v593 = vunpack.c.l.b16 %v511
      %v594 = vunpack.c.l.b16 %v512
      %v595 = vunpack.c.h.b16 %v512
      %v596 = vunpack.c.l.b16 %v513
      %v597 = vunpack.c.l.b16 %v514
      %v598 = vunpack.c.h.b16 %v514
      %v599 = vunpack.c.l.b16 %v515
      %v600 = vunpack.c.l.b16 %v516
      %v601 = vunpack.c.h.b16 %v516
      %v602 = vunpack.c.l.b16 %v517
      %v603 = vunpack.c.l.b16 %v518
      %v604 = vunpack.c.h.b16 %v518
      %v605 = vunpack.c.l.b16 %v519
      %v606 = vunpack.c.l.b16 %v520
      %v607 = vunpack.c.h.b16 %v520
      %v608 = vunpack.c.l.b16 %v521
      %v609 = vunpack.c.l.b16 %v522
      %v610 = vunpack.c.h.b16 %v522
      %v611 = vunpack.c.l.b16 %v523
      %v612 = vunpack.c.l.b16 %v524
      %v613 = vunpack.c.h.b16 %v524
      %v614 = vunpack.c.l.b16 %v525
      %v615 = vunpack.c.l.b16 %v526
      %v616 = vunpack.c.h.b16 %v526
      %v617 = vunpack.c.l.b16 %v527
      %v618 = vpack.c.b16 %v573, %v570
      %v619 = vpack.c.b16 %v574, %v571
      %v620 = vpack.c.b16 %v575, %v572
      %v621 = vpack.c.b16 %v579, %v576
      %v622 = vpack.c.b16 %v580, %v577
      %v623 = vpack.c.b16 %v581, %v578
      %v624 = vpack.c.b16 %v585, %v582
      %v625 = vpack.c.b16 %v586, %v583
      %v626 = vpack.c.b16 %v587, %v584
      %v627 = vpack.c.b16 %v591, %v588
      %v628 = vpack.c.b16 %v592, %v589
      %v629 = vpack.c.b16 %v593, %v590
      %v630 = vpack.c.b16 %v597, %v594
      %v631 = vpack.c.b16 %v598, %v595
      %v632 = vpack.c.b16 %v599, %v596
      %v633 = vpack.c.b16 %v603, %v600
      %v634 = vpack.c.b16 %v604, %v601
      %v635 = vpack.c.b16 %v605, %v602
      %v636 = vpack.c.b16 %v609, %v606
      %v637 = vpack.c.b16 %v610, %v607
      %v638 = vpack.c.b16 %v611, %v608
      %v639 = vpack.c.b16 %v615, %v612
      %v640 = vpack.c.b16 %v616, %v613
      %v641 = vpack.c.b16 %v617, %v614
      %666 = vmatprep.subr.bf16.mxu0 %v619
      %667 = vmatpush1.bf16.msra.mxu0 %v618
      %668 = vmatprep.subr.bf16.mxu0 %v622
      %669 = vmatpush1.bf16.msra.mxu0 %v621
      %670 = vmatprep.subr.bf16.mxu0 %v625
      %671 = vmatpush1.bf16.msra.mxu0 %v624
      %672 = vmatprep.subr.bf16.mxu0 %v628
      %673 = vmatpush1.bf16.msra.mxu0 %v627
      %674 = vmatprep.subr.bf16.mxu0 %v631
      %675 = vmatpush1.bf16.msra.mxu0 %v630
      %676 = vmatprep.subr.bf16.mxu0 %v634
      %677 = vmatpush1.bf16.msra.mxu0 %v633
      %678 = vmatprep.subr.bf16.mxu0 %v637
      %679 = vmatpush1.bf16.msra.mxu0 %v636
      %680 = vmatprep.subr.bf16.mxu0 %v640
      %681 = vmatpush1.bf16.msra.mxu0 %v639
      %682 = vmatprep.subr.bf16.mxu0 0
      %683 = vmatpush1.bf16.msra.mxu0 0
      %684 = vmatprep.subr.bf16.mxu0 0
      %685 = vmatpush1.bf16.msra.mxu0 0
      %686 = vmatprep.subr.bf16.mxu0 0
      %687 = vmatpush1.bf16.msra.mxu0 0
      %688 = vmatprep.subr.bf16.mxu0 0
      %689 = vmatpush1.bf16.msra.mxu0 0
      %690 = vmatprep.subr.bf16.mxu0 0
      %691 = vmatpush1.bf16.msra.mxu0 0
      %692 = vmatprep.subr.bf16.mxu0 0
      %693 = vmatpush1.bf16.msra.mxu0 0
      %694 = vmatprep.subr.bf16.mxu0 0
      %695 = vmatpush1.bf16.msra.mxu0 0
      %696 = vmatprep.subr.bf16.mxu0 0
      %697 = vmatpush1.bf16.msra.mxu0 0
      %698 = vmatprep.mubr.bf16.mxu0 0
      %699 = vmatmul.mubr.bf16.gmra.mrb[0].mxu0 %v537
      %v700 = vpop.f32.mrb[0].mxu0
      %v701 = vadd.f32 0.0, %v700
      %v702 = vpop.f32.mrb[0].mxu0
      %v703 = vadd.f32 0.0, %v702
      %v704 = vpop.f32.mrb[0].mxu0
      %v705 = vadd.f32 0.0, %v704
      %v706 = vpop.f32.mrb[0].mxu0
      %v707 = vadd.f32 0.0, %v706
      %708 = vdwg.mxu0
      %709 = vmatprep.subr.bf16.mxu0 0
      %710 = vmatpush1.bf16.msra.mxu0 %v620
      %711 = vmatprep.subr.bf16.mxu0 0
      %712 = vmatpush1.bf16.msra.mxu0 %v623
      %713 = vmatprep.subr.bf16.mxu0 0
      %714 = vmatpush1.bf16.msra.mxu0 %v626
      %715 = vmatprep.subr.bf16.mxu0 0
      %716 = vmatpush1.bf16.msra.mxu0 %v629
      %717 = vmatprep.subr.bf16.mxu0 0
      %718 = vmatpush1.bf16.msra.mxu0 %v632
      %719 = vmatprep.subr.bf16.mxu0 0
      %720 = vmatpush1.bf16.msra.mxu0 %v635
      %721 = vmatprep.subr.bf16.mxu0 0
      %722 = vmatpush1.bf16.msra.mxu0 %v638
      %723 = vmatprep.subr.bf16.mxu0 0
      %724 = vmatpush1.bf16.msra.mxu0 %v641
      %725 = vmatprep.subr.bf16.mxu0 0
      %726 = vmatpush1.bf16.msra.mxu0 0
      %727 = vmatprep.subr.bf16.mxu0 0
      %728 = vmatpush1.bf16.msra.mxu0 0
      %729 = vmatprep.subr.bf16.mxu0 0
      %730 = vmatpush1.bf16.msra.mxu0 0
      %731 = vmatprep.subr.bf16.mxu0 0
      %732 = vmatpush1.bf16.msra.mxu0 0
      %733 = vmatprep.subr.bf16.mxu0 0
      %734 = vmatpush1.bf16.msra.mxu0 0
      %735 = vmatprep.subr.bf16.mxu0 0
      %736 = vmatpush1.bf16.msra.mxu0 0
      %737 = vmatprep.subr.bf16.mxu0 0
      %738 = vmatpush1.bf16.msra.mxu0 0
      %739 = vmatprep.subr.bf16.mxu0 0
      %740 = vmatpush1.bf16.msra.mxu0 0
      %741 = vmatprep.mubr.bf16.mxu0 0
      %742 = vmatmul.mubr.bf16.gmra.mrb[0].mxu0 %v537
      %v743 = vpop.f32.mrb[0].mxu0
      %v744 = vadd.f32 0.0, %v743
      %v745 = vpop.f32.mrb[0].mxu0
      %v746 = vpop.f32.mrb[0].mxu0
      %v747 = vadd.f32 0.0, %v746
      %v748 = vpop.f32.mrb[0].mxu0
      %749 = vdwg.mxu0
      %v750 = vadd.f32 %v531, %v701
      %v751 = vadd.f32 %v534, %v705
      %v752 = vxor.u32 %v750, 2147483648
      %v753 = vxor.u32 %v751, 2147483648
      %v754 = vmul.f32 %v752, 1.442695
      %v755 = vpow.pop %v754
      %v756 = vmul.f32 %v753, 1.442695
      %v757 = vpow.pop %v756
      %v758 = vadd.f32 %v755, 1.0
      %v759 = vadd.f32 %v757, 1.0
      %v760 = vrcp.pop %v758
      %v761 = vmul.f32 1.0, %v760
      %v762 = vrcp.pop %v759
      %v763 = vmul.f32 1.0, %v762
      %v764 = vadd.f32 %v532, %v703
      %v765 = vadd.f32 %v535, %v707
      %v766 = vxor.u32 %v764, 2147483648
      %v767 = vxor.u32 %v765, 2147483648
      %v768 = vmul.f32 %v766, 1.442695
      %v769 = vpow.pop %v768
      %v770 = vmul.f32 %v767, 1.442695
      %v771 = vpow.pop %v770
      %v772 = vadd.f32 %v769, 1.0
      %v773 = vadd.f32 %v771, 1.0
      %v774 = vrcp.pop %v772
      %v775 = vmul.f32 1.0, %v774
      %v776 = vrcp.pop %v773
      %v777 = vmul.f32 1.0, %v776
      %v779 = vlaneseq
      %v780 = vshrl.u32 %v779, 7
      %v781 = vsub.s32 0, %v780
      %v782 = vrot.slane %v528, %v781
      %v784 = vadd.f32 %v744, %v782
      %v785 = vadd.f32 %v747, %v782
      %v786 = vmul.f32 %v761, %v784
      %v787 = vmul.f32 %v763, %v785
      %v788 = vadd.f32 %v533, %v786
      %v789 = vadd.f32 %v536, %v787
      %v790 = vtanh.pop %v788
      %v791 = vtanh.pop %v789
      %v792 = vsub.f32 1.0, %v775
      %v793 = vsub.f32 1.0, %v777
      %v794 = vmul.f32 %v792, %v790
      %v795 = vmul.f32 %v793, %v791
      %v796 = vmul.f32 %v775, %v529
      %v797 = vmul.f32 %v777, %v530
      %v798 = vadd.f32 %v794, %v796
      %v799 = vadd.f32 %v795, %v797
      %v800 = vstv %s106
      %vm801 = vcmp.lt.s32.totalorder %v800, %v494
      %vm802 = vcmp.lt.s32.totalorder %v800, %v495
      %v803 = vsel %vm801, 1, 0
      %v804 = vsel %vm802, 1, 0
      %805 = vset.pattern.permute.xlu0 0
      %806 = vperm.xlu0 %805, %v803
      %v807 = vpop.permute.xlu0 %806
      %808 = vset.pattern.permute.xlu0 0
      %809 = vperm.xlu0 %808, %v804
      %v810 = vpop.permute.xlu0 %809
      %vm811 = vcmp.eq.s32.totalorder %v807, 1
      %vm812 = vcmp.eq.s32.totalorder %v810, 1
      %v813 = vsel %vm811, %v798, %v529
      %v814 = vsel %vm812, %v799, %v530
      %v815 = vpack.c.bf16 %v814, %v813
      %v817 = vunpack.c.l.b16 %v815
      %v818 = vunpack.c.h.b16 %v815
      %v819 = vpack.c.b16 %v817, %v817
      %v820 = vpack.c.b16 %v818, %v818
      %823 = vst [vmem:[#allocation17] sm:$0xf] %v819
      %824 = vst [vmem:[#allocation17 + $0x4] sm:$0xf] %v820
      %s825 = scalar_lea.vmem [#allocation2], 48
      %v826 = vld [vmem:[%s825] sm:$0xff]
      %v827 = vld [vmem:[%s825 + $0x8] sm:$0xff]
      %v828 = vld [vmem:[%s825 + $0x10] sm:$0xff]
      %v829 = vld [vmem:[%s825 + $0x18] sm:$0xff]
      %v830 = vld [vmem:[%s825 + $0x20] sm:$0xff]
      %v831 = vld [vmem:[%s825 + $0x28] sm:$0xff]
      %832 = vmatprep.subr.bf16.mxu0 %v619
      %833 = vmatpush1.bf16.msra.mxu0 %v618
      %834 = vmatprep.subr.bf16.mxu0 %v622
      %835 = vmatpush1.bf16.msra.mxu0 %v621
      %836 = vmatprep.subr.bf16.mxu0 %v625
      %837 = vmatpush1.bf16.msra.mxu0 %v624
      %838 = vmatprep.subr.bf16.mxu0 %v628
      %839 = vmatpush1.bf16.msra.mxu0 %v627
      %840 = vmatprep.subr.bf16.mxu0 %v631
      %841 = vmatpush1.bf16.msra.mxu0 %v630
      %842 = vmatprep.subr.bf16.mxu0 %v634
      %843 = vmatpush1.bf16.msra.mxu0 %v633
      %844 = vmatprep.subr.bf16.mxu0 %v637
      %845 = vmatpush1.bf16.msra.mxu0 %v636
      %846 = vmatprep.subr.bf16.mxu0 %v640
      %847 = vmatpush1.bf16.msra.mxu0 %v639
      %848 = vmatprep.subr.bf16.mxu0 0
      %849 = vmatpush1.bf16.msra.mxu0 0
      %850 = vmatprep.subr.bf16.mxu0 0
      %851 = vmatpush1.bf16.msra.mxu0 0
      %852 = vmatprep.subr.bf16.mxu0 0
      %853 = vmatpush1.bf16.msra.mxu0 0
      %854 = vmatprep.subr.bf16.mxu0 0
      %855 = vmatpush1.bf16.msra.mxu0 0
      %856 = vmatprep.subr.bf16.mxu0 0
      %857 = vmatpush1.bf16.msra.mxu0 0
      %858 = vmatprep.subr.bf16.mxu0 0
      %859 = vmatpush1.bf16.msra.mxu0 0
      %860 = vmatprep.subr.bf16.mxu0 0
      %861 = vmatpush1.bf16.msra.mxu0 0
      %862 = vmatprep.subr.bf16.mxu0 0
      %863 = vmatpush1.bf16.msra.mxu0 0
      %864 = vmatprep.mubr.bf16.mxu0 0
      %865 = vmatmul.mubr.bf16.gmra.mrb[0].mxu0 %v815
      %v866 = vpop.f32.mrb[0].mxu0
      %v867 = vadd.f32 0.0, %v866
      %v868 = vpop.f32.mrb[0].mxu0
      %v869 = vadd.f32 0.0, %v868
      %v870 = vpop.f32.mrb[0].mxu0
      %v871 = vadd.f32 0.0, %v870
      %v872 = vpop.f32.mrb[0].mxu0
      %v873 = vadd.f32 0.0, %v872
      %874 = vdwg.mxu0
      %875 = vmatprep.subr.bf16.mxu0 0
      %876 = vmatpush1.bf16.msra.mxu0 %v620
      %877 = vmatprep.subr.bf16.mxu0 0
      %878 = vmatpush1.bf16.msra.mxu0 %v623
      %879 = vmatprep.subr.bf16.mxu0 0
      %880 = vmatpush1.bf16.msra.mxu0 %v626
      %881 = vmatprep.subr.bf16.mxu0 0
      %882 = vmatpush1.bf16.msra.mxu0 %v629
      %883 = vmatprep.subr.bf16.mxu0 0
      %884 = vmatpush1.bf16.msra.mxu0 %v632
      %885 = vmatprep.subr.bf16.mxu0 0
      %886 = vmatpush1.bf16.msra.mxu0 %v635
      %887 = vmatprep.subr.bf16.mxu0 0
      %888 = vmatpush1.bf16.msra.mxu0 %v638
      %889 = vmatprep.subr.bf16.mxu0 0
      %890 = vmatpush1.bf16.msra.mxu0 %v641
      %891 = vmatprep.subr.bf16.mxu0 0
      %892 = vmatpush1.bf16.msra.mxu0 0
      %893 = vmatprep.subr.bf16.mxu0 0
      %894 = vmatpush1.bf16.msra.mxu0 0
      %895 = vmatprep.subr.bf16.mxu0 0
      %896 = vmatpush1.bf16.msra.mxu0 0
      %897 = vmatprep.subr.bf16.mxu0 0
      %898 = vmatpush1.bf16.msra.mxu0 0
      %899 = vmatprep.subr.bf16.mxu0 0
      %900 = vmatpush1.bf16.msra.mxu0 0
      %901 = vmatprep.subr.bf16.mxu0 0
      %902 = vmatpush1.bf16.msra.mxu0 0
      %903 = vmatprep.subr.bf16.mxu0 0
      %904 = vmatpush1.bf16.msra.mxu0 0
      %905 = vmatprep.subr.bf16.mxu0 0
      %906 = vmatpush1.bf16.msra.mxu0 0
      %907 = vmatprep.mubr.bf16.mxu0 0
      %908 = vmatmul.mubr.bf16.gmra.mrb[0].mxu0 %v815
      %v909 = vpop.f32.mrb[0].mxu0
      %v910 = vadd.f32 0.0, %v909
      %v911 = vpop.f32.mrb[0].mxu0
      %v912 = vpop.f32.mrb[0].mxu0
      %v913 = vadd.f32 0.0, %v912
      %v914 = vpop.f32.mrb[0].mxu0
      %915 = vdwg.mxu0
      %v916 = vadd.f32 %v826, %v867
      %v917 = vadd.f32 %v829, %v871
      %v918 = vxor.u32 %v916, 2147483648
      %v919 = vxor.u32 %v917, 2147483648
      %v920 = vmul.f32 %v918, 1.442695
      %v921 = vpow.pop %v920
      %v922 = vmul.f32 %v919, 1.442695
      %v923 = vpow.pop %v922
      %v924 = vadd.f32 %v921, 1.0
      %v925 = vadd.f32 %v923, 1.0
      %v926 = vrcp.pop %v924
      %v927 = vmul.f32 1.0, %v926
      %v928 = vrcp.pop %v925
      %v929 = vmul.f32 1.0, %v928
      %v930 = vadd.f32 %v827, %v869
      %v931 = vadd.f32 %v830, %v873
      %v932 = vxor.u32 %v930, 2147483648
      %v933 = vxor.u32 %v931, 2147483648
      %v934 = vmul.f32 %v932, 1.442695
      %v935 = vpow.pop %v934
      %v936 = vmul.f32 %v933, 1.442695
      %v937 = vpow.pop %v936
      %v938 = vadd.f32 %v935, 1.0
      %v939 = vadd.f32 %v937, 1.0
      %v940 = vrcp.pop %v938
      %v941 = vmul.f32 1.0, %v940
      %v942 = vrcp.pop %v939
      %v943 = vmul.f32 1.0, %v942
      %v944 = vadd.f32 %v910, %v782
      %v945 = vadd.f32 %v913, %v782
      %v946 = vmul.f32 %v927, %v944
      %v947 = vmul.f32 %v929, %v945
      %v948 = vadd.f32 %v828, %v946
      %v949 = vadd.f32 %v831, %v947
      %v950 = vtanh.pop %v948
      %v951 = vtanh.pop %v949
      %v952 = vsub.f32 1.0, %v941
      %v953 = vsub.f32 1.0, %v943
      %v954 = vmul.f32 %v952, %v950
      %v955 = vmul.f32 %v953, %v951
      %v956 = vmul.f32 %v941, %v813
      %v957 = vmul.f32 %v943, %v814
      %v958 = vadd.f32 %v954, %v956
      %v959 = vadd.f32 %v955, %v957
      %s960 = sadd.s32 %s106, 1
      %v961 = vstv %s960
      %vm962 = vcmp.lt.s32.totalorder %v961, %v494
      %vm963 = vcmp.lt.s32.totalorder %v961, %v495
      %v964 = vsel %vm962, 1, 0
      %v965 = vsel %vm963, 1, 0
      %966 = vset.pattern.permute.xlu0 0
      %967 = vperm.xlu0 %966, %v964
      %v968 = vpop.permute.xlu0 %967
      %969 = vset.pattern.permute.xlu0 0
      %970 = vperm.xlu0 %969, %v965
      %v971 = vpop.permute.xlu0 %970
      %vm972 = vcmp.eq.s32.totalorder %v968, 1
      %vm973 = vcmp.eq.s32.totalorder %v971, 1
      %v974 = vsel %vm972, %v958, %v813
      %v975 = vsel %vm973, %v959, %v814
      %v976 = vpack.c.bf16 %v975, %v974
      %v978 = vunpack.c.l.b16 %v976
      %v979 = vunpack.c.h.b16 %v976
      %v980 = vpack.c.b16 %v978, %v978
      %v981 = vpack.c.b16 %v979, %v979
      %s984 = scalar_lea.vmem [#allocation17], 8
      %985 = vst [vmem:[%s984] sm:$0xf] %v980
      %986 = vst [vmem:[%s984 + $0x4] sm:$0xf] %v981
      %s987 = scalar_lea.vmem [#allocation2], 96
      %v988 = vld [vmem:[%s987] sm:$0xff]
      %v989 = vld [vmem:[%s987 + $0x8] sm:$0xff]
      %v990 = vld [vmem:[%s987 + $0x10] sm:$0xff]
      %v991 = vld [vmem:[%s987 + $0x18] sm:$0xff]
      %v992 = vld [vmem:[%s987 + $0x20] sm:$0xff]
      %v993 = vld [vmem:[%s987 + $0x28] sm:$0xff]
      %994 = vmatprep.subr.bf16.mxu0 %v619
      %995 = vmatpush1.bf16.msra.mxu0 %v618
      %996 = vmatprep.subr.bf16.mxu0 %v622
      %997 = vmatpush1.bf16.msra.mxu0 %v621
      %998 = vmatprep.subr.bf16.mxu0 %v625
      %999 = vmatpush1.bf16.msra.mxu0 %v624
      %1000 = vmatprep.subr.bf16.mxu0 %v628
      %1001 = vmatpush1.bf16.msra.mxu0 %v627
      %1002 = vmatprep.subr.bf16.mxu0 %v631
      %1003 = vmatpush1.bf16.msra.mxu0 %v630
      %1004 = vmatprep.subr.bf16.mxu0 %v634
      %1005 = vmatpush1.bf16.msra.mxu0 %v633
      %1006 = vmatprep.subr.bf16.mxu0 %v637
      %1007 = vmatpush1.bf16.msra.mxu0 %v636
      %1008 = vmatprep.subr.bf16.mxu0 %v640
      %1009 = vmatpush1.bf16.msra.mxu0 %v639
      %1010 = vmatprep.subr.bf16.mxu0 0
      %1011 = vmatpush1.bf16.msra.mxu0 0
      %1012 = vmatprep.subr.bf16.mxu0 0
      %1013 = vmatpush1.bf16.msra.mxu0 0
      %1014 = vmatprep.subr.bf16.mxu0 0
      %1015 = vmatpush1.bf16.msra.mxu0 0
      %1016 = vmatprep.subr.bf16.mxu0 0
      %1017 = vmatpush1.bf16.msra.mxu0 0
      %1018 = vmatprep.subr.bf16.mxu0 0
      %1019 = vmatpush1.bf16.msra.mxu0 0
      %1020 = vmatprep.subr.bf16.mxu0 0
      %1021 = vmatpush1.bf16.msra.mxu0 0
      %1022 = vmatprep.subr.bf16.mxu0 0
      %1023 = vmatpush1.bf16.msra.mxu0 0
      %1024 = vmatprep.subr.bf16.mxu0 0
      %1025 = vmatpush1.bf16.msra.mxu0 0
      %1026 = vmatprep.mubr.bf16.mxu0 0
      %1027 = vmatmul.mubr.bf16.gmra.mrb[0].mxu0 %v976
      %v1028 = vpop.f32.mrb[0].mxu0
      %v1029 = vadd.f32 0.0, %v1028
      %v1030 = vpop.f32.mrb[0].mxu0
      %v1031 = vadd.f32 0.0, %v1030
      %v1032 = vpop.f32.mrb[0].mxu0
      %v1033 = vadd.f32 0.0, %v1032
      %v1034 = vpop.f32.mrb[0].mxu0
      %v1035 = vadd.f32 0.0, %v1034
      %1036 = vdwg.mxu0
      %1037 = vmatprep.subr.bf16.mxu0 0
      %1038 = vmatpush1.bf16.msra.mxu0 %v620
      %1039 = vmatprep.subr.bf16.mxu0 0
      %1040 = vmatpush1.bf16.msra.mxu0 %v623
      %1041 = vmatprep.subr.bf16.mxu0 0
      %1042 = vmatpush1.bf16.msra.mxu0 %v626
      %1043 = vmatprep.subr.bf16.mxu0 0
      %1044 = vmatpush1.bf16.msra.mxu0 %v629
      %1045 = vmatprep.subr.bf16.mxu0 0
      %1046 = vmatpush1.bf16.msra.mxu0 %v632
      %1047 = vmatprep.subr.bf16.mxu0 0
      %1048 = vmatpush1.bf16.msra.mxu0 %v635
      %1049 = vmatprep.subr.bf16.mxu0 0
      %1050 = vmatpush1.bf16.msra.mxu0 %v638
      %1051 = vmatprep.subr.bf16.mxu0 0
      %1052 = vmatpush1.bf16.msra.mxu0 %v641
      %1053 = vmatprep.subr.bf16.mxu0 0
      %1054 = vmatpush1.bf16.msra.mxu0 0
      %1055 = vmatprep.subr.bf16.mxu0 0
      %1056 = vmatpush1.bf16.msra.mxu0 0
      %1057 = vmatprep.subr.bf16.mxu0 0
      %1058 = vmatpush1.bf16.msra.mxu0 0
      %1059 = vmatprep.subr.bf16.mxu0 0
      %1060 = vmatpush1.bf16.msra.mxu0 0
      %1061 = vmatprep.subr.bf16.mxu0 0
      %1062 = vmatpush1.bf16.msra.mxu0 0
      %1063 = vmatprep.subr.bf16.mxu0 0
      %1064 = vmatpush1.bf16.msra.mxu0 0
      %1065 = vmatprep.subr.bf16.mxu0 0
      %1066 = vmatpush1.bf16.msra.mxu0 0
      %1067 = vmatprep.subr.bf16.mxu0 0
      %1068 = vmatpush1.bf16.msra.mxu0 0
      %1069 = vmatprep.mubr.bf16.mxu0 0
      %1070 = vmatmul.mubr.bf16.gmra.mrb[0].mxu0 %v976
      %v1071 = vpop.f32.mrb[0].mxu0
      %v1072 = vadd.f32 0.0, %v1071
      %v1073 = vpop.f32.mrb[0].mxu0
      %v1074 = vpop.f32.mrb[0].mxu0
      %v1075 = vadd.f32 0.0, %v1074
      %v1076 = vpop.f32.mrb[0].mxu0
      %1077 = vdwg.mxu0
      %v1078 = vadd.f32 %v988, %v1029
      %v1079 = vadd.f32 %v991, %v1033
      %v1080 = vxor.u32 %v1078, 2147483648
      %v1081 = vxor.u32 %v1079, 2147483648
      %v1082 = vmul.f32 %v1080, 1.442695
      %v1083 = vpow.pop %v1082
      %v1084 = vmul.f32 %v1081, 1.442695
      %v1085 = vpow.pop %v1084
      %v1086 = vadd.f32 %v1083, 1.0
      %v1087 = vadd.f32 %v1085, 1.0
      %v1088 = vrcp.pop %v1086
      %v1089 = vmul.f32 1.0, %v1088
      %v1090 = vrcp.pop %v1087
      %v1091 = vmul.f32 1.0, %v1090
      %v1092 = vadd.f32 %v989, %v1031
      %v1093 = vadd.f32 %v992, %v1035
      %v1094 = vxor.u32 %v1092, 2147483648
      %v1095 = vxor.u32 %v1093, 2147483648
      %v1096 = vmul.f32 %v1094, 1.442695
      %v1097 = vpow.pop %v1096
      %v1098 = vmul.f32 %v1095, 1.442695
      %v1099 = vpow.pop %v1098
      %v1100 = vadd.f32 %v1097, 1.0
      %v1101 = vadd.f32 %v1099, 1.0
      %v1102 = vrcp.pop %v1100
      %v1103 = vmul.f32 1.0, %v1102
      %v1104 = vrcp.pop %v1101
      %v1105 = vmul.f32 1.0, %v1104
      %v1106 = vadd.f32 %v1072, %v782
      %v1107 = vadd.f32 %v1075, %v782
      %v1108 = vmul.f32 %v1089, %v1106
      %v1109 = vmul.f32 %v1091, %v1107
      %v1110 = vadd.f32 %v990, %v1108
      %v1111 = vadd.f32 %v993, %v1109
      %v1112 = vtanh.pop %v1110
      %v1113 = vtanh.pop %v1111
      %v1114 = vsub.f32 1.0, %v1103
      %v1115 = vsub.f32 1.0, %v1105
      %v1116 = vmul.f32 %v1114, %v1112
      %v1117 = vmul.f32 %v1115, %v1113
      %v1118 = vmul.f32 %v1103, %v974
      %v1119 = vmul.f32 %v1105, %v975
      %v1120 = vadd.f32 %v1116, %v1118
      %v1121 = vadd.f32 %v1117, %v1119
      %s1122 = sadd.s32 %s106, 2
      %v1123 = vstv %s1122
      %vm1124 = vcmp.lt.s32.totalorder %v1123, %v494
      %vm1125 = vcmp.lt.s32.totalorder %v1123, %v495
      %v1126 = vsel %vm1124, 1, 0
      %v1127 = vsel %vm1125, 1, 0
      %1128 = vset.pattern.permute.xlu0 0
      %1129 = vperm.xlu0 %1128, %v1126
      %v1130 = vpop.permute.xlu0 %1129
      %1131 = vset.pattern.permute.xlu0 0
      %1132 = vperm.xlu0 %1131, %v1127
      %v1133 = vpop.permute.xlu0 %1132
      %vm1134 = vcmp.eq.s32.totalorder %v1130, 1
      %vm1135 = vcmp.eq.s32.totalorder %v1133, 1
      %v1136 = vsel %vm1134, %v1120, %v974
      %v1137 = vsel %vm1135, %v1121, %v975
      %v1138 = vpack.c.bf16 %v1137, %v1136
      %v1140 = vunpack.c.l.b16 %v1138
      %v1141 = vunpack.c.h.b16 %v1138
      %v1142 = vpack.c.b16 %v1140, %v1140
      %v1143 = vpack.c.b16 %v1141, %v1141
      %s1146 = scalar_lea.vmem [#allocation17], 16
      %1147 = vst [vmem:[%s1146] sm:$0xf] %v1142
      %1148 = vst [vmem:[%s1146 + $0x4] sm:$0xf] %v1143
      %s1149 = scalar_lea.vmem [#allocation2], 144
      %v1150 = vld [vmem:[%s1149] sm:$0xff]
      %v1151 = vld [vmem:[%s1149 + $0x8] sm:$0xff]
      %v1152 = vld [vmem:[%s1149 + $0x10] sm:$0xff]
      %v1153 = vld [vmem:[%s1149 + $0x18] sm:$0xff]
      %v1154 = vld [vmem:[%s1149 + $0x20] sm:$0xff]
      %v1155 = vld [vmem:[%s1149 + $0x28] sm:$0xff]
      %1156 = vmatprep.subr.bf16.mxu0 %v619
      %1157 = vmatpush1.bf16.msra.mxu0 %v618
      %1158 = vmatprep.subr.bf16.mxu0 %v622
      %1159 = vmatpush1.bf16.msra.mxu0 %v621
      %1160 = vmatprep.subr.bf16.mxu0 %v625
      %1161 = vmatpush1.bf16.msra.mxu0 %v624
      %1162 = vmatprep.subr.bf16.mxu0 %v628
      %1163 = vmatpush1.bf16.msra.mxu0 %v627
      %1164 = vmatprep.subr.bf16.mxu0 %v631
      %1165 = vmatpush1.bf16.msra.mxu0 %v630
      %1166 = vmatprep.subr.bf16.mxu0 %v634
      %1167 = vmatpush1.bf16.msra.mxu0 %v633
      %1168 = vmatprep.subr.bf16.mxu0 %v637
      %1169 = vmatpush1.bf16.msra.mxu0 %v636
      %1170 = vmatprep.subr.bf16.mxu0 %v640
      %1171 = vmatpush1.bf16.msra.mxu0 %v639
      %1172 = vmatprep.subr.bf16.mxu0 0
      %1173 = vmatpush1.bf16.msra.mxu0 0
      %1174 = vmatprep.subr.bf16.mxu0 0
      %1175 = vmatpush1.bf16.msra.mxu0 0
      %1176 = vmatprep.subr.bf16.mxu0 0
      %1177 = vmatpush1.bf16.msra.mxu0 0
      %1178 = vmatprep.subr.bf16.mxu0 0
      %1179 = vmatpush1.bf16.msra.mxu0 0
      %1180 = vmatprep.subr.bf16.mxu0 0
      %1181 = vmatpush1.bf16.msra.mxu0 0
      %1182 = vmatprep.subr.bf16.mxu0 0
      %1183 = vmatpush1.bf16.msra.mxu0 0
      %1184 = vmatprep.subr.bf16.mxu0 0
      %1185 = vmatpush1.bf16.msra.mxu0 0
      %1186 = vmatprep.subr.bf16.mxu0 0
      %1187 = vmatpush1.bf16.msra.mxu0 0
      %1188 = vmatprep.mubr.bf16.mxu0 0
      %1189 = vmatmul.mubr.bf16.gmra.mrb[0].mxu0 %v1138
      %v1190 = vpop.f32.mrb[0].mxu0
      %v1191 = vadd.f32 0.0, %v1190
      %v1192 = vpop.f32.mrb[0].mxu0
      %v1193 = vadd.f32 0.0, %v1192
      %v1194 = vpop.f32.mrb[0].mxu0
      %v1195 = vadd.f32 0.0, %v1194
      %v1196 = vpop.f32.mrb[0].mxu0
      %v1197 = vadd.f32 0.0, %v1196
      %1198 = vdwg.mxu0
      %1199 = vmatprep.subr.bf16.mxu0 0
      %1200 = vmatpush1.bf16.msra.mxu0 %v620
      %1201 = vmatprep.subr.bf16.mxu0 0
      %1202 = vmatpush1.bf16.msra.mxu0 %v623
      %1203 = vmatprep.subr.bf16.mxu0 0
      %1204 = vmatpush1.bf16.msra.mxu0 %v626
      %1205 = vmatprep.subr.bf16.mxu0 0
      %1206 = vmatpush1.bf16.msra.mxu0 %v629
      %1207 = vmatprep.subr.bf16.mxu0 0
      %1208 = vmatpush1.bf16.msra.mxu0 %v632
      %1209 = vmatprep.subr.bf16.mxu0 0
      %1210 = vmatpush1.bf16.msra.mxu0 %v635
      %1211 = vmatprep.subr.bf16.mxu0 0
      %1212 = vmatpush1.bf16.msra.mxu0 %v638
      %1213 = vmatprep.subr.bf16.mxu0 0
      %1214 = vmatpush1.bf16.msra.mxu0 %v641
      %1215 = vmatprep.subr.bf16.mxu0 0
      %1216 = vmatpush1.bf16.msra.mxu0 0
      %1217 = vmatprep.subr.bf16.mxu0 0
      %1218 = vmatpush1.bf16.msra.mxu0 0
      %1219 = vmatprep.subr.bf16.mxu0 0
      %1220 = vmatpush1.bf16.msra.mxu0 0
      %1221 = vmatprep.subr.bf16.mxu0 0
      %1222 = vmatpush1.bf16.msra.mxu0 0
      %1223 = vmatprep.subr.bf16.mxu0 0
      %1224 = vmatpush1.bf16.msra.mxu0 0
      %1225 = vmatprep.subr.bf16.mxu0 0
      %1226 = vmatpush1.bf16.msra.mxu0 0
      %1227 = vmatprep.subr.bf16.mxu0 0
      %1228 = vmatpush1.bf16.msra.mxu0 0
      %1229 = vmatprep.subr.bf16.mxu0 0
      %1230 = vmatpush1.bf16.msra.mxu0 0
      %1231 = vmatprep.mubr.bf16.mxu0 0
      %1232 = vmatmul.mubr.bf16.gmra.mrb[0].mxu0 %v1138
      %v1233 = vpop.f32.mrb[0].mxu0
      %v1234 = vadd.f32 0.0, %v1233
      %v1235 = vpop.f32.mrb[0].mxu0
      %v1236 = vpop.f32.mrb[0].mxu0
      %v1237 = vadd.f32 0.0, %v1236
      %v1238 = vpop.f32.mrb[0].mxu0
      %1239 = vdwg.mxu0
      %v1240 = vadd.f32 %v1150, %v1191
      %v1241 = vadd.f32 %v1153, %v1195
      %v1242 = vxor.u32 %v1240, 2147483648
      %v1243 = vxor.u32 %v1241, 2147483648
      %v1244 = vmul.f32 %v1242, 1.442695
      %v1245 = vpow.pop %v1244
      %v1246 = vmul.f32 %v1243, 1.442695
      %v1247 = vpow.pop %v1246
      %v1248 = vadd.f32 %v1245, 1.0
      %v1249 = vadd.f32 %v1247, 1.0
      %v1250 = vrcp.pop %v1248
      %v1251 = vmul.f32 1.0, %v1250
      %v1252 = vrcp.pop %v1249
      %v1253 = vmul.f32 1.0, %v1252
      %v1254 = vadd.f32 %v1151, %v1193
      %v1255 = vadd.f32 %v1154, %v1197
      %v1256 = vxor.u32 %v1254, 2147483648
      %v1257 = vxor.u32 %v1255, 2147483648
      %v1258 = vmul.f32 %v1256, 1.442695
      %v1259 = vpow.pop %v1258
      %v1260 = vmul.f32 %v1257, 1.442695
      %v1261 = vpow.pop %v1260
      %v1262 = vadd.f32 %v1259, 1.0
      %v1263 = vadd.f32 %v1261, 1.0
      %v1264 = vrcp.pop %v1262
      %v1265 = vmul.f32 1.0, %v1264
      %v1266 = vrcp.pop %v1263
      %v1267 = vmul.f32 1.0, %v1266
      %v1268 = vadd.f32 %v1234, %v782
      %v1269 = vadd.f32 %v1237, %v782
      %v1270 = vmul.f32 %v1251, %v1268
      %v1271 = vmul.f32 %v1253, %v1269
      %v1272 = vadd.f32 %v1152, %v1270
      %v1273 = vadd.f32 %v1155, %v1271
      %v1274 = vtanh.pop %v1272
      %v1275 = vtanh.pop %v1273
      %v1276 = vsub.f32 1.0, %v1265
      %v1277 = vsub.f32 1.0, %v1267
      %v1278 = vmul.f32 %v1276, %v1274
      %v1279 = vmul.f32 %v1277, %v1275
      %v1280 = vmul.f32 %v1265, %v1136
      %v1281 = vmul.f32 %v1267, %v1137
      %v1282 = vadd.f32 %v1278, %v1280
      %v1283 = vadd.f32 %v1279, %v1281
      %s1284 = sadd.s32 %s106, 3
      %v1285 = vstv %s1284
      %vm1286 = vcmp.lt.s32.totalorder %v1285, %v494
      %vm1287 = vcmp.lt.s32.totalorder %v1285, %v495
      %v1288 = vsel %vm1286, 1, 0
      %v1289 = vsel %vm1287, 1, 0
      %1290 = vset.pattern.permute.xlu0 0
      %1291 = vperm.xlu0 %1290, %v1288
      %v1292 = vpop.permute.xlu0 %1291
      %1293 = vset.pattern.permute.xlu0 0
      %1294 = vperm.xlu0 %1293, %v1289
      %v1295 = vpop.permute.xlu0 %1294
      %vm1296 = vcmp.eq.s32.totalorder %v1292, 1
      %vm1297 = vcmp.eq.s32.totalorder %v1295, 1
      %v1298 = vsel %vm1296, %v1282, %v1136
      %v1299 = vsel %vm1297, %v1283, %v1137
      %v1300 = vpack.c.bf16 %v1299, %v1298
      %v1302 = vunpack.c.l.b16 %v1300
      %v1303 = vunpack.c.h.b16 %v1300
      %v1304 = vpack.c.b16 %v1302, %v1302
      %v1305 = vpack.c.b16 %v1303, %v1303
      %s1308 = scalar_lea.vmem [#allocation17], 24
      %1309 = vst [vmem:[%s1308] sm:$0xf] %v1304
      %1310 = vst [vmem:[%s1308 + $0x4] sm:$0xf] %v1305
      %s1311 = scalar_lea.vmem [#allocation2], 192
      %v1312 = vld [vmem:[%s1311] sm:$0xff]
      %v1313 = vld [vmem:[%s1311 + $0x8] sm:$0xff]
      %v1314 = vld [vmem:[%s1311 + $0x10] sm:$0xff]
      %v1315 = vld [vmem:[%s1311 + $0x18] sm:$0xff]
      %v1316 = vld [vmem:[%s1311 + $0x20] sm:$0xff]
      %v1317 = vld [vmem:[%s1311 + $0x28] sm:$0xff]
      %1318 = vmatprep.subr.bf16.mxu0 %v619
      %1319 = vmatpush1.bf16.msra.mxu0 %v618
      %1320 = vmatprep.subr.bf16.mxu0 %v622
      %1321 = vmatpush1.bf16.msra.mxu0 %v621
      %1322 = vmatprep.subr.bf16.mxu0 %v625
      %1323 = vmatpush1.bf16.msra.mxu0 %v624
      %1324 = vmatprep.subr.bf16.mxu0 %v628
      %1325 = vmatpush1.bf16.msra.mxu0 %v627
      %1326 = vmatprep.subr.bf16.mxu0 %v631
      %1327 = vmatpush1.bf16.msra.mxu0 %v630
      %1328 = vmatprep.subr.bf16.mxu0 %v634
      %1329 = vmatpush1.bf16.msra.mxu0 %v633
      %1330 = vmatprep.subr.bf16.mxu0 %v637
      %1331 = vmatpush1.bf16.msra.mxu0 %v636
      %1332 = vmatprep.subr.bf16.mxu0 %v640
      %1333 = vmatpush1.bf16.msra.mxu0 %v639
      %1334 = vmatprep.subr.bf16.mxu0 0
      %1335 = vmatpush1.bf16.msra.mxu0 0
      %1336 = vmatprep.subr.bf16.mxu0 0
      %1337 = vmatpush1.bf16.msra.mxu0 0
      %1338 = vmatprep.subr.bf16.mxu0 0
      %1339 = vmatpush1.bf16.msra.mxu0 0
      %1340 = vmatprep.subr.bf16.mxu0 0
      %1341 = vmatpush1.bf16.msra.mxu0 0
      %1342 = vmatprep.subr.bf16.mxu0 0
      %1343 = vmatpush1.bf16.msra.mxu0 0
      %1344 = vmatprep.subr.bf16.mxu0 0
      %1345 = vmatpush1.bf16.msra.mxu0 0
      %1346 = vmatprep.subr.bf16.mxu0 0
      %1347 = vmatpush1.bf16.msra.mxu0 0
      %1348 = vmatprep.subr.bf16.mxu0 0
      %1349 = vmatpush1.bf16.msra.mxu0 0
      %1350 = vmatprep.mubr.bf16.mxu0 0
      %1351 = vmatmul.mubr.bf16.gmra.mrb[0].mxu0 %v1300
      %v1352 = vpop.f32.mrb[0].mxu0
      %v1353 = vadd.f32 0.0, %v1352
      %v1354 = vpop.f32.mrb[0].mxu0
      %v1355 = vadd.f32 0.0, %v1354
      %v1356 = vpop.f32.mrb[0].mxu0
      %v1357 = vadd.f32 0.0, %v1356
      %v1358 = vpop.f32.mrb[0].mxu0
      %v1359 = vadd.f32 0.0, %v1358
      %1360 = vdwg.mxu0
      %1361 = vmatprep.subr.bf16.mxu0 0
      %1362 = vmatpush1.bf16.msra.mxu0 %v620
      %1363 = vmatprep.subr.bf16.mxu0 0
      %1364 = vmatpush1.bf16.msra.mxu0 %v623
      %1365 = vmatprep.subr.bf16.mxu0 0
      %1366 = vmatpush1.bf16.msra.mxu0 %v626
      %1367 = vmatprep.subr.bf16.mxu0 0
      %1368 = vmatpush1.bf16.msra.mxu0 %v629
      %1369 = vmatprep.subr.bf16.mxu0 0
      %1370 = vmatpush1.bf16.msra.mxu0 %v632
      %1371 = vmatprep.subr.bf16.mxu0 0
      %1372 = vmatpush1.bf16.msra.mxu0 %v635
      %1373 = vmatprep.subr.bf16.mxu0 0
      %1374 = vmatpush1.bf16.msra.mxu0 %v638
      %1375 = vmatprep.subr.bf16.mxu0 0
      %1376 = vmatpush1.bf16.msra.mxu0 %v641
      %1377 = vmatprep.subr.bf16.mxu0 0
      %1378 = vmatpush1.bf16.msra.mxu0 0
      %1379 = vmatprep.subr.bf16.mxu0 0
      %1380 = vmatpush1.bf16.msra.mxu0 0
      %1381 = vmatprep.subr.bf16.mxu0 0
      %1382 = vmatpush1.bf16.msra.mxu0 0
      %1383 = vmatprep.subr.bf16.mxu0 0
      %1384 = vmatpush1.bf16.msra.mxu0 0
      %1385 = vmatprep.subr.bf16.mxu0 0
      %1386 = vmatpush1.bf16.msra.mxu0 0
      %1387 = vmatprep.subr.bf16.mxu0 0
      %1388 = vmatpush1.bf16.msra.mxu0 0
      %1389 = vmatprep.subr.bf16.mxu0 0
      %1390 = vmatpush1.bf16.msra.mxu0 0
      %1391 = vmatprep.subr.bf16.mxu0 0
      %1392 = vmatpush1.bf16.msra.mxu0 0
      %1393 = vmatprep.mubr.bf16.mxu0 0
      %1394 = vmatmul.mubr.bf16.gmra.mrb[0].mxu0 %v1300
      %v1395 = vpop.f32.mrb[0].mxu0
      %v1396 = vadd.f32 0.0, %v1395
      %v1397 = vpop.f32.mrb[0].mxu0
      %v1398 = vpop.f32.mrb[0].mxu0
      %v1399 = vadd.f32 0.0, %v1398
      %v1400 = vpop.f32.mrb[0].mxu0
      %1401 = vdwg.mxu0
      %v1402 = vadd.f32 %v1312, %v1353
      %v1403 = vadd.f32 %v1315, %v1357
      %v1404 = vxor.u32 %v1402, 2147483648
      %v1405 = vxor.u32 %v1403, 2147483648
      %v1406 = vmul.f32 %v1404, 1.442695
      %v1407 = vpow.pop %v1406
      %v1408 = vmul.f32 %v1405, 1.442695
      %v1409 = vpow.pop %v1408
      %v1410 = vadd.f32 %v1407, 1.0
      %v1411 = vadd.f32 %v1409, 1.0
      %v1412 = vrcp.pop %v1410
      %v1413 = vmul.f32 1.0, %v1412
      %v1414 = vrcp.pop %v1411
      %v1415 = vmul.f32 1.0, %v1414
      %v1416 = vadd.f32 %v1313, %v1355
      %v1417 = vadd.f32 %v1316, %v1359
      %v1418 = vxor.u32 %v1416, 2147483648
      %v1419 = vxor.u32 %v1417, 2147483648
      %v1420 = vmul.f32 %v1418, 1.442695
      %v1421 = vpow.pop %v1420
      %v1422 = vmul.f32 %v1419, 1.442695
      %v1423 = vpow.pop %v1422
      %v1424 = vadd.f32 %v1421, 1.0
      %v1425 = vadd.f32 %v1423, 1.0
      %v1426 = vrcp.pop %v1424
      %v1427 = vmul.f32 1.0, %v1426
      %v1428 = vrcp.pop %v1425
      %v1429 = vmul.f32 1.0, %v1428
      %v1430 = vadd.f32 %v1396, %v782
      %v1431 = vadd.f32 %v1399, %v782
      %v1432 = vmul.f32 %v1413, %v1430
      %v1433 = vmul.f32 %v1415, %v1431
      %v1434 = vadd.f32 %v1314, %v1432
      %v1435 = vadd.f32 %v1317, %v1433
      %v1436 = vtanh.pop %v1434
      %v1437 = vtanh.pop %v1435
      %v1438 = vsub.f32 1.0, %v1427
      %v1439 = vsub.f32 1.0, %v1429
      %v1440 = vmul.f32 %v1438, %v1436
      %v1441 = vmul.f32 %v1439, %v1437
      %v1442 = vmul.f32 %v1427, %v1298
      %v1443 = vmul.f32 %v1429, %v1299
      %v1444 = vadd.f32 %v1440, %v1442
      %v1445 = vadd.f32 %v1441, %v1443
      %s1446 = sadd.s32 %s106, 4
      %v1447 = vstv %s1446
      %vm1448 = vcmp.lt.s32.totalorder %v1447, %v494
      %vm1449 = vcmp.lt.s32.totalorder %v1447, %v495
      %v1450 = vsel %vm1448, 1, 0
      %v1451 = vsel %vm1449, 1, 0
      %1452 = vset.pattern.permute.xlu0 0
      %1453 = vperm.xlu0 %1452, %v1450
      %v1454 = vpop.permute.xlu0 %1453
      %1455 = vset.pattern.permute.xlu0 0
      %1456 = vperm.xlu0 %1455, %v1451
      %v1457 = vpop.permute.xlu0 %1456
      %vm1458 = vcmp.eq.s32.totalorder %v1454, 1
      %vm1459 = vcmp.eq.s32.totalorder %v1457, 1
      %v1460 = vsel %vm1458, %v1444, %v1298
      %v1461 = vsel %vm1459, %v1445, %v1299
      %v1462 = vpack.c.bf16 %v1461, %v1460
      %v1464 = vunpack.c.l.b16 %v1462
      %v1465 = vunpack.c.h.b16 %v1462
      %v1466 = vpack.c.b16 %v1464, %v1464
      %v1467 = vpack.c.b16 %v1465, %v1465
      %s1470 = scalar_lea.vmem [#allocation17], 32
      %1471 = vst [vmem:[%s1470] sm:$0xf] %v1466
      %1472 = vst [vmem:[%s1470 + $0x4] sm:$0xf] %v1467
      %s1473 = scalar_lea.vmem [#allocation2], 240
      %v1474 = vld [vmem:[%s1473] sm:$0xff]
      %v1475 = vld [vmem:[%s1473 + $0x8] sm:$0xff]
      %v1476 = vld [vmem:[%s1473 + $0x10] sm:$0xff]
      %v1477 = vld [vmem:[%s1473 + $0x18] sm:$0xff]
      %v1478 = vld [vmem:[%s1473 + $0x20] sm:$0xff]
      %v1479 = vld [vmem:[%s1473 + $0x28] sm:$0xff]
      %1480 = vmatprep.subr.bf16.mxu0 %v619
      %1481 = vmatpush1.bf16.msra.mxu0 %v618
      %1482 = vmatprep.subr.bf16.mxu0 %v622
      %1483 = vmatpush1.bf16.msra.mxu0 %v621
      %1484 = vmatprep.subr.bf16.mxu0 %v625
      %1485 = vmatpush1.bf16.msra.mxu0 %v624
      %1486 = vmatprep.subr.bf16.mxu0 %v628
      %1487 = vmatpush1.bf16.msra.mxu0 %v627
      %1488 = vmatprep.subr.bf16.mxu0 %v631
      %1489 = vmatpush1.bf16.msra.mxu0 %v630
      %1490 = vmatprep.subr.bf16.mxu0 %v634
      %1491 = vmatpush1.bf16.msra.mxu0 %v633
      %1492 = vmatprep.subr.bf16.mxu0 %v637
      %1493 = vmatpush1.bf16.msra.mxu0 %v636
      %1494 = vmatprep.subr.bf16.mxu0 %v640
      %1495 = vmatpush1.bf16.msra.mxu0 %v639
      %1496 = vmatprep.subr.bf16.mxu0 0
      %1497 = vmatpush1.bf16.msra.mxu0 0
      %1498 = vmatprep.subr.bf16.mxu0 0
      %1499 = vmatpush1.bf16.msra.mxu0 0
      %1500 = vmatprep.subr.bf16.mxu0 0
      %1501 = vmatpush1.bf16.msra.mxu0 0
      %1502 = vmatprep.subr.bf16.mxu0 0
      %1503 = vmatpush1.bf16.msra.mxu0 0
      %1504 = vmatprep.subr.bf16.mxu0 0
      %1505 = vmatpush1.bf16.msra.mxu0 0
      %1506 = vmatprep.subr.bf16.mxu0 0
      %1507 = vmatpush1.bf16.msra.mxu0 0
      %1508 = vmatprep.subr.bf16.mxu0 0
      %1509 = vmatpush1.bf16.msra.mxu0 0
      %1510 = vmatprep.subr.bf16.mxu0 0
      %1511 = vmatpush1.bf16.msra.mxu0 0
      %1512 = vmatprep.mubr.bf16.mxu0 0
      %1513 = vmatmul.mubr.bf16.gmra.mrb[0].mxu0 %v1462
      %v1514 = vpop.f32.mrb[0].mxu0
      %v1515 = vadd.f32 0.0, %v1514
      %v1516 = vpop.f32.mrb[0].mxu0
      %v1517 = vadd.f32 0.0, %v1516
      %v1518 = vpop.f32.mrb[0].mxu0
      %v1519 = vadd.f32 0.0, %v1518
      %v1520 = vpop.f32.mrb[0].mxu0
      %v1521 = vadd.f32 0.0, %v1520
      %1522 = vdwg.mxu0
      %1523 = vmatprep.subr.bf16.mxu0 0
      %1524 = vmatpush1.bf16.msra.mxu0 %v620
      %1525 = vmatprep.subr.bf16.mxu0 0
      %1526 = vmatpush1.bf16.msra.mxu0 %v623
      %1527 = vmatprep.subr.bf16.mxu0 0
      %1528 = vmatpush1.bf16.msra.mxu0 %v626
      %1529 = vmatprep.subr.bf16.mxu0 0
      %1530 = vmatpush1.bf16.msra.mxu0 %v629
      %1531 = vmatprep.subr.bf16.mxu0 0
      %1532 = vmatpush1.bf16.msra.mxu0 %v632
      %1533 = vmatprep.subr.bf16.mxu0 0
      %1534 = vmatpush1.bf16.msra.mxu0 %v635
      %1535 = vmatprep.subr.bf16.mxu0 0
      %1536 = vmatpush1.bf16.msra.mxu0 %v638
      %1537 = vmatprep.subr.bf16.mxu0 0
      %1538 = vmatpush1.bf16.msra.mxu0 %v641
      %1539 = vmatprep.subr.bf16.mxu0 0
      %1540 = vmatpush1.bf16.msra.mxu0 0
      %1541 = vmatprep.subr.bf16.mxu0 0
      %1542 = vmatpush1.bf16.msra.mxu0 0
      %1543 = vmatprep.subr.bf16.mxu0 0
      %1544 = vmatpush1.bf16.msra.mxu0 0
      %1545 = vmatprep.subr.bf16.mxu0 0
      %1546 = vmatpush1.bf16.msra.mxu0 0
      %1547 = vmatprep.subr.bf16.mxu0 0
      %1548 = vmatpush1.bf16.msra.mxu0 0
      %1549 = vmatprep.subr.bf16.mxu0 0
      %1550 = vmatpush1.bf16.msra.mxu0 0
      %1551 = vmatprep.subr.bf16.mxu0 0
      %1552 = vmatpush1.bf16.msra.mxu0 0
      %1553 = vmatprep.subr.bf16.mxu0 0
      %1554 = vmatpush1.bf16.msra.mxu0 0
      %1555 = vmatprep.mubr.bf16.mxu0 0
      %1556 = vmatmul.mubr.bf16.gmra.mrb[0].mxu0 %v1462
      %v1557 = vpop.f32.mrb[0].mxu0
      %v1558 = vadd.f32 0.0, %v1557
      %v1559 = vpop.f32.mrb[0].mxu0
      %v1560 = vpop.f32.mrb[0].mxu0
      %v1561 = vadd.f32 0.0, %v1560
      %v1562 = vpop.f32.mrb[0].mxu0
      %1563 = vdwg.mxu0
      %v1564 = vadd.f32 %v1474, %v1515
      %v1565 = vadd.f32 %v1477, %v1519
      %v1566 = vxor.u32 %v1564, 2147483648
      %v1567 = vxor.u32 %v1565, 2147483648
      %v1568 = vmul.f32 %v1566, 1.442695
      %v1569 = vpow.pop %v1568
      %v1570 = vmul.f32 %v1567, 1.442695
      %v1571 = vpow.pop %v1570
      %v1572 = vadd.f32 %v1569, 1.0
      %v1573 = vadd.f32 %v1571, 1.0
      %v1574 = vrcp.pop %v1572
      %v1575 = vmul.f32 1.0, %v1574
      %v1576 = vrcp.pop %v1573
      %v1577 = vmul.f32 1.0, %v1576
      %v1578 = vadd.f32 %v1475, %v1517
      %v1579 = vadd.f32 %v1478, %v1521
      %v1580 = vxor.u32 %v1578, 2147483648
      %v1581 = vxor.u32 %v1579, 2147483648
      %v1582 = vmul.f32 %v1580, 1.442695
      %v1583 = vpow.pop %v1582
      %v1584 = vmul.f32 %v1581, 1.442695
      %v1585 = vpow.pop %v1584
      %v1586 = vadd.f32 %v1583, 1.0
      %v1587 = vadd.f32 %v1585, 1.0
      %v1588 = vrcp.pop %v1586
      %v1589 = vmul.f32 1.0, %v1588
      %v1590 = vrcp.pop %v1587
      %v1591 = vmul.f32 1.0, %v1590
      %v1592 = vadd.f32 %v1558, %v782
      %v1593 = vadd.f32 %v1561, %v782
      %v1594 = vmul.f32 %v1575, %v1592
      %v1595 = vmul.f32 %v1577, %v1593
      %v1596 = vadd.f32 %v1476, %v1594
      %v1597 = vadd.f32 %v1479, %v1595
      %v1598 = vtanh.pop %v1596
      %v1599 = vtanh.pop %v1597
      %v1600 = vsub.f32 1.0, %v1589
      %v1601 = vsub.f32 1.0, %v1591
      %v1602 = vmul.f32 %v1600, %v1598
      %v1603 = vmul.f32 %v1601, %v1599
      %v1604 = vmul.f32 %v1589, %v1460
      %v1605 = vmul.f32 %v1591, %v1461
      %v1606 = vadd.f32 %v1602, %v1604
      %v1607 = vadd.f32 %v1603, %v1605
      %s1608 = sadd.s32 %s106, 5
      %v1609 = vstv %s1608
      %vm1610 = vcmp.lt.s32.totalorder %v1609, %v494
      %vm1611 = vcmp.lt.s32.totalorder %v1609, %v495
      %v1612 = vsel %vm1610, 1, 0
      %v1613 = vsel %vm1611, 1, 0
      %1614 = vset.pattern.permute.xlu0 0
      %1615 = vperm.xlu0 %1614, %v1612
      %v1616 = vpop.permute.xlu0 %1615
      %1617 = vset.pattern.permute.xlu0 0
      %1618 = vperm.xlu0 %1617, %v1613
      %v1619 = vpop.permute.xlu0 %1618
      %vm1620 = vcmp.eq.s32.totalorder %v1616, 1
      %vm1621 = vcmp.eq.s32.totalorder %v1619, 1
      %v1622 = vsel %vm1620, %v1606, %v1460
      %v1623 = vsel %vm1621, %v1607, %v1461
      %v1624 = vpack.c.bf16 %v1623, %v1622
      %v1626 = vunpack.c.l.b16 %v1624
      %v1627 = vunpack.c.h.b16 %v1624
      %v1628 = vpack.c.b16 %v1626, %v1626
      %v1629 = vpack.c.b16 %v1627, %v1627
      %s1632 = scalar_lea.vmem [#allocation17], 40
      %1633 = vst [vmem:[%s1632] sm:$0xf] %v1628
      %1634 = vst [vmem:[%s1632 + $0x4] sm:$0xf] %v1629
      %s1635 = scalar_lea.vmem [#allocation2], 288
      %v1636 = vld [vmem:[%s1635] sm:$0xff]
      %v1637 = vld [vmem:[%s1635 + $0x8] sm:$0xff]
      %v1638 = vld [vmem:[%s1635 + $0x10] sm:$0xff]
      %v1639 = vld [vmem:[%s1635 + $0x18] sm:$0xff]
      %v1640 = vld [vmem:[%s1635 + $0x20] sm:$0xff]
      %v1641 = vld [vmem:[%s1635 + $0x28] sm:$0xff]
      %1642 = vmatprep.subr.bf16.mxu0 %v619
      %1643 = vmatpush1.bf16.msra.mxu0 %v618
      %1644 = vmatprep.subr.bf16.mxu0 %v622
      %1645 = vmatpush1.bf16.msra.mxu0 %v621
      %1646 = vmatprep.subr.bf16.mxu0 %v625
      %1647 = vmatpush1.bf16.msra.mxu0 %v624
      %1648 = vmatprep.subr.bf16.mxu0 %v628
      %1649 = vmatpush1.bf16.msra.mxu0 %v627
      %1650 = vmatprep.subr.bf16.mxu0 %v631
      %1651 = vmatpush1.bf16.msra.mxu0 %v630
      %1652 = vmatprep.subr.bf16.mxu0 %v634
      %1653 = vmatpush1.bf16.msra.mxu0 %v633
      %1654 = vmatprep.subr.bf16.mxu0 %v637
      %1655 = vmatpush1.bf16.msra.mxu0 %v636
      %1656 = vmatprep.subr.bf16.mxu0 %v640
      %1657 = vmatpush1.bf16.msra.mxu0 %v639
      %1658 = vmatprep.subr.bf16.mxu0 0
      %1659 = vmatpush1.bf16.msra.mxu0 0
      %1660 = vmatprep.subr.bf16.mxu0 0
      %1661 = vmatpush1.bf16.msra.mxu0 0
      %1662 = vmatprep.subr.bf16.mxu0 0
      %1663 = vmatpush1.bf16.msra.mxu0 0
      %1664 = vmatprep.subr.bf16.mxu0 0
      %1665 = vmatpush1.bf16.msra.mxu0 0
      %1666 = vmatprep.subr.bf16.mxu0 0
      %1667 = vmatpush1.bf16.msra.mxu0 0
      %1668 = vmatprep.subr.bf16.mxu0 0
      %1669 = vmatpush1.bf16.msra.mxu0 0
      %1670 = vmatprep.subr.bf16.mxu0 0
      %1671 = vmatpush1.bf16.msra.mxu0 0
      %1672 = vmatprep.subr.bf16.mxu0 0
      %1673 = vmatpush1.bf16.msra.mxu0 0
      %1674 = vmatprep.mubr.bf16.mxu0 0
      %1675 = vmatmul.mubr.bf16.gmra.mrb[0].mxu0 %v1624
      %v1676 = vpop.f32.mrb[0].mxu0
      %v1677 = vadd.f32 0.0, %v1676
      %v1678 = vpop.f32.mrb[0].mxu0
      %v1679 = vadd.f32 0.0, %v1678
      %v1680 = vpop.f32.mrb[0].mxu0
      %v1681 = vadd.f32 0.0, %v1680
      %v1682 = vpop.f32.mrb[0].mxu0
      %v1683 = vadd.f32 0.0, %v1682
      %1684 = vdwg.mxu0
      %1685 = vmatprep.subr.bf16.mxu0 0
      %1686 = vmatpush1.bf16.msra.mxu0 %v620
      %1687 = vmatprep.subr.bf16.mxu0 0
      %1688 = vmatpush1.bf16.msra.mxu0 %v623
      %1689 = vmatprep.subr.bf16.mxu0 0
      %1690 = vmatpush1.bf16.msra.mxu0 %v626
      %1691 = vmatprep.subr.bf16.mxu0 0
      %1692 = vmatpush1.bf16.msra.mxu0 %v629
      %1693 = vmatprep.subr.bf16.mxu0 0
      %1694 = vmatpush1.bf16.msra.mxu0 %v632
      %1695 = vmatprep.subr.bf16.mxu0 0
      %1696 = vmatpush1.bf16.msra.mxu0 %v635
      %1697 = vmatprep.subr.bf16.mxu0 0
      %1698 = vmatpush1.bf16.msra.mxu0 %v638
      %1699 = vmatprep.subr.bf16.mxu0 0
      %1700 = vmatpush1.bf16.msra.mxu0 %v641
      %1701 = vmatprep.subr.bf16.mxu0 0
      %1702 = vmatpush1.bf16.msra.mxu0 0
      %1703 = vmatprep.subr.bf16.mxu0 0
      %1704 = vmatpush1.bf16.msra.mxu0 0
      %1705 = vmatprep.subr.bf16.mxu0 0
      %1706 = vmatpush1.bf16.msra.mxu0 0
      %1707 = vmatprep.subr.bf16.mxu0 0
      %1708 = vmatpush1.bf16.msra.mxu0 0
      %1709 = vmatprep.subr.bf16.mxu0 0
      %1710 = vmatpush1.bf16.msra.mxu0 0
      %1711 = vmatprep.subr.bf16.mxu0 0
      %1712 = vmatpush1.bf16.msra.mxu0 0
      %1713 = vmatprep.subr.bf16.mxu0 0
      %1714 = vmatpush1.bf16.msra.mxu0 0
      %1715 = vmatprep.subr.bf16.mxu0 0
      %1716 = vmatpush1.bf16.msra.mxu0 0
      %1717 = vmatprep.mubr.bf16.mxu0 0
      %1718 = vmatmul.mubr.bf16.gmra.mrb[0].mxu0 %v1624
      %v1719 = vpop.f32.mrb[0].mxu0
      %v1720 = vadd.f32 0.0, %v1719
      %v1721 = vpop.f32.mrb[0].mxu0
      %v1722 = vpop.f32.mrb[0].mxu0
      %v1723 = vadd.f32 0.0, %v1722
      %v1724 = vpop.f32.mrb[0].mxu0
      %1725 = vdwg.mxu0
      %v1726 = vadd.f32 %v1636, %v1677
      %v1727 = vadd.f32 %v1639, %v1681
      %v1728 = vxor.u32 %v1726, 2147483648
      %v1729 = vxor.u32 %v1727, 2147483648
      %v1730 = vmul.f32 %v1728, 1.442695
      %v1731 = vpow.pop %v1730
      %v1732 = vmul.f32 %v1729, 1.442695
      %v1733 = vpow.pop %v1732
      %v1734 = vadd.f32 %v1731, 1.0
      %v1735 = vadd.f32 %v1733, 1.0
      %v1736 = vrcp.pop %v1734
      %v1737 = vmul.f32 1.0, %v1736
      %v1738 = vrcp.pop %v1735
      %v1739 = vmul.f32 1.0, %v1738
      %v1740 = vadd.f32 %v1637, %v1679
      %v1741 = vadd.f32 %v1640, %v1683
      %v1742 = vxor.u32 %v1740, 2147483648
      %v1743 = vxor.u32 %v1741, 2147483648
      %v1744 = vmul.f32 %v1742, 1.442695
      %v1745 = vpow.pop %v1744
      %v1746 = vmul.f32 %v1743, 1.442695
      %v1747 = vpow.pop %v1746
      %v1748 = vadd.f32 %v1745, 1.0
      %v1749 = vadd.f32 %v1747, 1.0
      %v1750 = vrcp.pop %v1748
      %v1751 = vmul.f32 1.0, %v1750
      %v1752 = vrcp.pop %v1749
      %v1753 = vmul.f32 1.0, %v1752
      %v1754 = vadd.f32 %v1720, %v782
      %v1755 = vadd.f32 %v1723, %v782
      %v1756 = vmul.f32 %v1737, %v1754
      %v1757 = vmul.f32 %v1739, %v1755
      %v1758 = vadd.f32 %v1638, %v1756
      %v1759 = vadd.f32 %v1641, %v1757
      %v1760 = vtanh.pop %v1758
      %v1761 = vtanh.pop %v1759
      %v1762 = vsub.f32 1.0, %v1751
      %v1763 = vsub.f32 1.0, %v1753
      %v1764 = vmul.f32 %v1762, %v1760
      %v1765 = vmul.f32 %v1763, %v1761
      %v1766 = vmul.f32 %v1751, %v1622
      %v1767 = vmul.f32 %v1753, %v1623
      %v1768 = vadd.f32 %v1764, %v1766
      %v1769 = vadd.f32 %v1765, %v1767
      %s1770 = sadd.s32 %s106, 6
      %v1771 = vstv %s1770
      %vm1772 = vcmp.lt.s32.totalorder %v1771, %v494
      %vm1773 = vcmp.lt.s32.totalorder %v1771, %v495
      %v1774 = vsel %vm1772, 1, 0
      %v1775 = vsel %vm1773, 1, 0
      %1776 = vset.pattern.permute.xlu0 0
      %1777 = vperm.xlu0 %1776, %v1774
      %v1778 = vpop.permute.xlu0 %1777
      %1779 = vset.pattern.permute.xlu0 0
      %1780 = vperm.xlu0 %1779, %v1775
      %v1781 = vpop.permute.xlu0 %1780
      %vm1782 = vcmp.eq.s32.totalorder %v1778, 1
      %vm1783 = vcmp.eq.s32.totalorder %v1781, 1
      %v1784 = vsel %vm1782, %v1768, %v1622
      %v1785 = vsel %vm1783, %v1769, %v1623
      %v1786 = vpack.c.bf16 %v1785, %v1784
      %v1788 = vunpack.c.l.b16 %v1786
      %v1789 = vunpack.c.h.b16 %v1786
      %v1790 = vpack.c.b16 %v1788, %v1788
      %v1791 = vpack.c.b16 %v1789, %v1789
      %s1794 = scalar_lea.vmem [#allocation17], 48
      %1795 = vst [vmem:[%s1794] sm:$0xf] %v1790
      %1796 = vst [vmem:[%s1794 + $0x4] sm:$0xf] %v1791
      %s1797 = scalar_lea.vmem [#allocation2], 336
      %v1798 = vld [vmem:[%s1797] sm:$0xff]
      %v1799 = vld [vmem:[%s1797 + $0x8] sm:$0xff]
      %v1800 = vld [vmem:[%s1797 + $0x10] sm:$0xff]
      %v1801 = vld [vmem:[%s1797 + $0x18] sm:$0xff]
      %v1802 = vld [vmem:[%s1797 + $0x20] sm:$0xff]
      %v1803 = vld [vmem:[%s1797 + $0x28] sm:$0xff]
      %1804 = vmatprep.subr.bf16.mxu0 %v619
      %1805 = vmatpush1.bf16.msra.mxu0 %v618
      %1806 = vmatprep.subr.bf16.mxu0 %v622
      %1807 = vmatpush1.bf16.msra.mxu0 %v621
      %1808 = vmatprep.subr.bf16.mxu0 %v625
      %1809 = vmatpush1.bf16.msra.mxu0 %v624
      %1810 = vmatprep.subr.bf16.mxu0 %v628
      %1811 = vmatpush1.bf16.msra.mxu0 %v627
      %1812 = vmatprep.subr.bf16.mxu0 %v631
      %1813 = vmatpush1.bf16.msra.mxu0 %v630
      %1814 = vmatprep.subr.bf16.mxu0 %v634
      %1815 = vmatpush1.bf16.msra.mxu0 %v633
      %1816 = vmatprep.subr.bf16.mxu0 %v637
      %1817 = vmatpush1.bf16.msra.mxu0 %v636
      %1818 = vmatprep.subr.bf16.mxu0 %v640
      %1819 = vmatpush1.bf16.msra.mxu0 %v639
      %1820 = vmatprep.subr.bf16.mxu0 0
      %1821 = vmatpush1.bf16.msra.mxu0 0
      %1822 = vmatprep.subr.bf16.mxu0 0
      %1823 = vmatpush1.bf16.msra.mxu0 0
      %1824 = vmatprep.subr.bf16.mxu0 0
      %1825 = vmatpush1.bf16.msra.mxu0 0
      %1826 = vmatprep.subr.bf16.mxu0 0
      %1827 = vmatpush1.bf16.msra.mxu0 0
      %1828 = vmatprep.subr.bf16.mxu0 0
      %1829 = vmatpush1.bf16.msra.mxu0 0
      %1830 = vmatprep.subr.bf16.mxu0 0
      %1831 = vmatpush1.bf16.msra.mxu0 0
      %1832 = vmatprep.subr.bf16.mxu0 0
      %1833 = vmatpush1.bf16.msra.mxu0 0
      %1834 = vmatprep.subr.bf16.mxu0 0
      %1835 = vmatpush1.bf16.msra.mxu0 0
      %1836 = vmatprep.mubr.bf16.mxu0 0
      %1837 = vmatmul.mubr.bf16.gmra.mrb[0].mxu0 %v1786
      %v1838 = vpop.f32.mrb[0].mxu0
      %v1839 = vadd.f32 0.0, %v1838
      %v1840 = vpop.f32.mrb[0].mxu0
      %v1841 = vadd.f32 0.0, %v1840
      %v1842 = vpop.f32.mrb[0].mxu0
      %v1843 = vadd.f32 0.0, %v1842
      %v1844 = vpop.f32.mrb[0].mxu0
      %v1845 = vadd.f32 0.0, %v1844
      %1846 = vdwg.mxu0
      %1847 = vmatprep.subr.bf16.mxu0 0
      %1848 = vmatpush1.bf16.msra.mxu0 %v620
      %1849 = vmatprep.subr.bf16.mxu0 0
      %1850 = vmatpush1.bf16.msra.mxu0 %v623
      %1851 = vmatprep.subr.bf16.mxu0 0
      %1852 = vmatpush1.bf16.msra.mxu0 %v626
      %1853 = vmatprep.subr.bf16.mxu0 0
      %1854 = vmatpush1.bf16.msra.mxu0 %v629
      %1855 = vmatprep.subr.bf16.mxu0 0
      %1856 = vmatpush1.bf16.msra.mxu0 %v632
      %1857 = vmatprep.subr.bf16.mxu0 0
      %1858 = vmatpush1.bf16.msra.mxu0 %v635
      %1859 = vmatprep.subr.bf16.mxu0 0
      %1860 = vmatpush1.bf16.msra.mxu0 %v638
      %1861 = vmatprep.subr.bf16.mxu0 0
      %1862 = vmatpush1.bf16.msra.mxu0 %v641
      %1863 = vmatprep.subr.bf16.mxu0 0
      %1864 = vmatpush1.bf16.msra.mxu0 0
      %1865 = vmatprep.subr.bf16.mxu0 0
      %1866 = vmatpush1.bf16.msra.mxu0 0
      %1867 = vmatprep.subr.bf16.mxu0 0
      %1868 = vmatpush1.bf16.msra.mxu0 0
      %1869 = vmatprep.subr.bf16.mxu0 0
      %1870 = vmatpush1.bf16.msra.mxu0 0
      %1871 = vmatprep.subr.bf16.mxu0 0
      %1872 = vmatpush1.bf16.msra.mxu0 0
      %1873 = vmatprep.subr.bf16.mxu0 0
      %1874 = vmatpush1.bf16.msra.mxu0 0
      %1875 = vmatprep.subr.bf16.mxu0 0
      %1876 = vmatpush1.bf16.msra.mxu0 0
      %1877 = vmatprep.subr.bf16.mxu0 0
      %1878 = vmatpush1.bf16.msra.mxu0 0
      %1879 = vmatprep.mubr.bf16.mxu0 0
      %1880 = vmatmul.mubr.bf16.gmra.mrb[0].mxu0 %v1786
      %v1881 = vpop.f32.mrb[0].mxu0
      %v1882 = vadd.f32 0.0, %v1881
      %v1883 = vpop.f32.mrb[0].mxu0
      %v1884 = vpop.f32.mrb[0].mxu0
      %v1885 = vadd.f32 0.0, %v1884
      %v1886 = vpop.f32.mrb[0].mxu0
      %1887 = vdwg.mxu0
      %v1888 = vadd.f32 %v1798, %v1839
      %v1889 = vadd.f32 %v1801, %v1843
      %v1890 = vxor.u32 %v1888, 2147483648
      %v1891 = vxor.u32 %v1889, 2147483648
      %v1892 = vmul.f32 %v1890, 1.442695
      %v1893 = vpow.pop %v1892
      %v1894 = vmul.f32 %v1891, 1.442695
      %v1895 = vpow.pop %v1894
      %v1896 = vadd.f32 %v1893, 1.0
      %v1897 = vadd.f32 %v1895, 1.0
      %v1898 = vrcp.pop %v1896
      %v1899 = vmul.f32 1.0, %v1898
      %v1900 = vrcp.pop %v1897
      %v1901 = vmul.f32 1.0, %v1900
      %v1902 = vadd.f32 %v1799, %v1841
      %v1903 = vadd.f32 %v1802, %v1845
      %v1904 = vxor.u32 %v1902, 2147483648
      %v1905 = vxor.u32 %v1903, 2147483648
      %v1906 = vmul.f32 %v1904, 1.442695
      %v1907 = vpow.pop %v1906
      %v1908 = vmul.f32 %v1905, 1.442695
      %v1909 = vpow.pop %v1908
      %v1910 = vadd.f32 %v1907, 1.0
      %v1911 = vadd.f32 %v1909, 1.0
      %v1912 = vrcp.pop %v1910
      %v1913 = vmul.f32 1.0, %v1912
      %v1914 = vrcp.pop %v1911
      %v1915 = vmul.f32 1.0, %v1914
      %v1916 = vadd.f32 %v1882, %v782
      %v1917 = vadd.f32 %v1885, %v782
      %v1918 = vmul.f32 %v1899, %v1916
      %v1919 = vmul.f32 %v1901, %v1917
      %v1920 = vadd.f32 %v1800, %v1918
      %v1921 = vadd.f32 %v1803, %v1919
      %v1922 = vtanh.pop %v1920
      %v1923 = vtanh.pop %v1921
      %v1924 = vsub.f32 1.0, %v1913
      %v1925 = vsub.f32 1.0, %v1915
      %v1926 = vmul.f32 %v1924, %v1922
      %v1927 = vmul.f32 %v1925, %v1923
      %v1928 = vmul.f32 %v1913, %v1784
      %v1929 = vmul.f32 %v1915, %v1785
      %v1930 = vadd.f32 %v1926, %v1928
      %v1931 = vadd.f32 %v1927, %v1929
      %s1932 = sadd.s32 %s106, 7
      %v1933 = vstv %s1932
      %vm1934 = vcmp.lt.s32.totalorder %v1933, %v494
      %vm1935 = vcmp.lt.s32.totalorder %v1933, %v495
      %v1936 = vsel %vm1934, 1, 0
      %v1937 = vsel %vm1935, 1, 0
      %1938 = vset.pattern.permute.xlu0 0
      %1939 = vperm.xlu0 %1938, %v1936
      %v1940 = vpop.permute.xlu0 %1939
      %1941 = vset.pattern.permute.xlu0 0
      %1942 = vperm.xlu0 %1941, %v1937
      %v1943 = vpop.permute.xlu0 %1942
      %vm1944 = vcmp.eq.s32.totalorder %v1940, 1
      %vm1945 = vcmp.eq.s32.totalorder %v1943, 1
      %v1946 = vsel %vm1944, %v1930, %v1784
      %v1947 = vsel %vm1945, %v1931, %v1785
      %v1948 = vpack.c.bf16 %v1947, %v1946
      %v1950 = vunpack.c.l.b16 %v1948
      %v1951 = vunpack.c.h.b16 %v1948
      %v1952 = vpack.c.b16 %v1950, %v1950
      %v1953 = vpack.c.b16 %v1951, %v1951
      %s1956 = scalar_lea.vmem [#allocation17], 56
      %1957 = vst [vmem:[%s1956] sm:$0xf] %v1952
      %1958 = vst [vmem:[%s1956 + $0x4] sm:$0xf] %v1953
      %1959 = vst [vmem:[#allocation3] sm:$0xff] %v1946
      %1960 = vst [vmem:[#allocation3 + $0x8] sm:$0xff] %v1947
    $region57: #{encoder_forward.2} parent=1 // pred_fallthru
      _
    %p1961 = scmp.ge.s32.totalorder %s106, %s113
    // Predicated region
    $region58: #{encoder_forward.2} parent=1 // pred_check
      %p1962 = pneg %p1961
    $region59: #{encoder_forward.2} parent=1 // pred_check_branch
      %1964 = sbr.rel (%p1962) target = $region61
    $region60: #{encoder_forward.2} parent=1 // pred_region
      %1965 = vst [vmem:[#allocation17] sm:$0xf] 0
      %1966 = vst [vmem:[#allocation17 + $0x4] sm:$0xf] 0
      %1967 = vst [vmem:[#allocation17 + $0x8] sm:$0xf] 0
      %1968 = vst [vmem:[#allocation17 + $0xc] sm:$0xf] 0
      %1969 = vst [vmem:[#allocation17 + $0x10] sm:$0xf] 0
      %1970 = vst [vmem:[#allocation17 + $0x14] sm:$0xf] 0
      %1971 = vst [vmem:[#allocation17 + $0x18] sm:$0xf] 0
      %1972 = vst [vmem:[#allocation17 + $0x1c] sm:$0xf] 0
      %1973 = vst [vmem:[#allocation17 + $0x20] sm:$0xf] 0
      %1974 = vst [vmem:[#allocation17 + $0x24] sm:$0xf] 0
      %1975 = vst [vmem:[#allocation17 + $0x28] sm:$0xf] 0
      %1976 = vst [vmem:[#allocation17 + $0x2c] sm:$0xf] 0
      %1977 = vst [vmem:[#allocation17 + $0x30] sm:$0xf] 0
      %1978 = vst [vmem:[#allocation17 + $0x34] sm:$0xf] 0
      %1979 = vst [vmem:[#allocation17 + $0x38] sm:$0xf] 0
      %1980 = vst [vmem:[#allocation17 + $0x3c] sm:$0xf] 0
    $region61: #{encoder_forward.2} parent=1 // pred_fallthru
      _
    // Predicated region
    $region62: #{encoder_forward.2} parent=1 // pred_check
      %p1981 = pneg %p107
    $region63: #{encoder_forward.2} parent=1 // pred_check_branch
      %1983 = sbr.rel (%p1981) target = $region65
    $region64: #{encoder_forward.2} parent=1 // pred_region
      %v1984 = vld [vmem:[#allocation3] sm:$0xff]
      %v1985 = vld [vmem:[#allocation3 + $0x8] sm:$0xff]
      %1986 = vst [vmem:[#allocation18] sm:$0xff] %v1984
      %1987 = vst [vmem:[#allocation18 + $0x8] sm:$0xff] %v1985
    $region65: #{encoder_forward.2} parent=1 // pred_fallthru
      _
    // Predicated region
    $region66: #{encoder_forward.2} parent=1 // pred_check
      _
    $region67: #{encoder_forward.2} parent=1 // pred_check_branch
      %1989 = sbr.rel (0) target = $region69
    $region68: #{encoder_forward.2} parent=1 // pred_region
      %s1991 = ssub.s32 1024, 1024
      %1992 = vsyncadd [#allocation8], %s1991
      %s1993 = sshll.u32 [#allocation17], 4
      %s1994 = int_to_ptr.vmem [resolvable:$true] %s1993
      %1999 = dma.vmem_to_hbm [thread:$0]  %s1994, 1024, %s7, [#allocation8], 64, 64, 4
    $region69: #{encoder_forward.2} parent=1 // pred_fallthru
      _
    // Predicated region
    $region70: #{encoder_forward.2} parent=1 // pred_check
      _
    $region71: #{encoder_forward.2} parent=1 // pred_check_branch
      %2001 = sbr.rel (0) target = $region73
    $region72: #{encoder_forward.2} parent=1 // pred_region
      %s2003 = ssub.s32 256, 256
      %2004 = vsyncadd [#allocation19], %s2003
      %s2005 = sshll.u32 [#allocation18], 4
      %s2006 = int_to_ptr.vmem [resolvable:$true] %s2005
      %2011 = dma.vmem_to_hbm [thread:$0]  %s2006, 256, %s8, [#allocation19], 128, 128, 8
    $region73: #{encoder_forward.2} parent=1 // pred_fallthru
      _
    // Predicated region
    $region74: #{encoder_forward.2} parent=1 // pred_check
      _
    $region75: #{encoder_forward.2} parent=1 // pred_check_branch
      %2013 = sbr.rel (0) target = $region77
    $region76: #{encoder_forward.2} parent=1 // pred_region
      %2014 = dma.done [#allocation8], 1024
    $region77: #{encoder_forward.2} parent=1 // pred_fallthru
      _
    // Predicated region
    $region78: #{encoder_forward.2} parent=1 // pred_check
      _
    $region79: #{encoder_forward.2} parent=1 // pred_check_branch
      %2016 = sbr.rel (0) target = $region81
    $region80: #{encoder_forward.2} parent=1 // pred_region
      %2017 = dma.done [#allocation19], 256
    $region81: #{encoder_forward.2} parent=1 // pred_fallthru
      _
    %2018 = vsyncpa [#allocation7], 1
    %2019 = vsyncpa [#allocation10], 1
    %2020 = vsyncpa [#allocation13], 1
    %2021 = vsyncpa [#allocation16], 1
    %2022 = vsyncpa [#allocation8], 1
    %2023 = vsyncpa [#allocation19], 1

// kernel: encoder_forward.3
$region0: #{encoder_forward.3}
  #allocation0 [shape = 'u32[]', space=smem, size = 0x4, offset = 0x4, fixed_abs, tag = 'smem constant byte address 0x4 - core index']
  #allocation1 [shape = 'u32[144,128]{1,0:T(1,128)}', space=vmem, size = 0x12000, scoped, tag = 'internal scratch']
  #allocation2 [shape = 'f32[8,16,384]{2,1,0:T(8,128)}', space=vmem, size = 0x30000, scoped, tag = 'scratch operand']
  #allocation3 [shape = 'f32[16,128]{1,0:T(8,128)}', space=vmem, size = 0x2000, scoped, tag = 'scratch operand']
  #allocation4 [shape = 's32[1]{0}', space=sflag, size = 0x4, scoped, tag = 'scoped memory for encoder_forward.3']
  #allocation5 [shape = 's32[1]{0:T(128)S(6)}', space=smem, size = 0x200, scoped, tag = 'prefetched SMEM operand 0']
  %s0 = inlined_call_operand.<no memory space> [shape: s32[1], index: 0, kind: input, shape index: {}]
  %s1 = inlined_call_operand.hbm [shape: s32[16,1], index: 1, kind: input, shape index: {}]
  %s2 = inlined_call_operand.hbm [shape: bf16[8,16,128], index: 2, kind: input, shape index: {}]
  %s3 = inlined_call_operand.hbm [shape: bf16[128,384], index: 3, kind: input, shape index: {}]
  %s4 = inlined_call_operand.hbm [shape: bf16[128,384], index: 4, kind: input, shape index: {}]
  %s5 = inlined_call_operand.hbm [shape: f32[1,384], index: 5, kind: input, shape index: {}]
  %s6 = inlined_call_operand.hbm [shape: f32[1,128], index: 6, kind: input, shape index: {}]
  %s7 = inlined_call_operand.hbm [shape: bf16[8,16,128], index: 7, kind: output, shape index: {0}]
  %s8 = inlined_call_operand.hbm [shape: f32[16,128], index: 8, kind: output, shape index: {1}]
  %9 = xla_tuple %s7, %s8
  %s10 = sld [smem:[#allocation0]]
  $region82: #{encoder_forward.3} parent=0
    _
  %s12 = ssub.s32 1, %s10
  %s13 = scalar_select 0, %s12, %s10
  %14 = sst [smem:[#allocation5]] %s0
  $region1: #{encoder_forward.3} parent=0
    #allocation6 [shape = 'u8[8192]{0}', space=vmem, size = 0x2000, scoped, tag = 'input window, operand 1, single buffered']
    #allocation7 [shape = 's32[1]{0}', space=sflag, size = 0x4, scoped, tag = 'scoped memory for encoder_forward.3']
    #allocation8 [shape = 's32[1]{0}', space=sflag, size = 0x4, scoped, tag = 'scoped memory for encoder_forward.3']
    #allocation9 [shape = 'u8[32768]{0}', space=vmem, size = 0x8000, scoped, tag = 'input window, operand 2, single buffered']
    #allocation10 [shape = 's32[1]{0}', space=sflag, size = 0x4, scoped, tag = 'scoped memory for encoder_forward.3']
    #allocation11 [shape = 'u8[98304]{0}', space=vmem, size = 0x18000, scoped, tag = 'input window, operand 3, single buffered']
    #allocation12 [shape = 'u8[98304]{0}', space=vmem, size = 0x18000, scoped, tag = 'input window, operand 4, single buffered']
    #allocation13 [shape = 's32[1]{0}', space=sflag, size = 0x4, scoped, tag = 'scoped memory for encoder_forward.3']
    #allocation14 [shape = 'u8[1536]{0}', space=vmem, size = 0x800, scoped, tag = 'input window, operand 5, single buffered']
    #allocation15 [shape = 'u8[512]{0}', space=vmem, size = 0x400, scoped, tag = 'input window, operand 6, single buffered']
    #allocation16 [shape = 's32[1]{0}', space=sflag, size = 0x4, scoped, tag = 'scoped memory for encoder_forward.3']
    #allocation17 [shape = 'u8[32768]{0}', space=vmem, size = 0x8000, scoped, tag = 'output window, operand 0, single buffered']
    #allocation18 [shape = 'u8[8192]{0}', space=vmem, size = 0x2000, scoped, tag = 'output window, operand 1, single buffered']
    #allocation19 [shape = 's32[1]{0}', space=sflag, size = 0x4, scoped, tag = 'scoped memory for encoder_forward.3']
    %15 = vsyncpa [#allocation7], 0
    %16 = vsyncpa [#allocation10], 0
    %17 = vsyncpa [#allocation13], 0
    %18 = vsyncpa [#allocation16], 0
    %19 = vsyncpa [#allocation8], 0
    %20 = vsyncpa [#allocation19], 0
    // Predicated region
    $region2: #{encoder_forward.3} parent=1 // pred_check
      _
    $region3: #{encoder_forward.3} parent=1 // pred_check_branch
      %22 = sbr.rel (0) target = $region5
    $region4: #{encoder_forward.3} parent=1 // pred_region
      %s24 = ssub.s32 256, 256
      %25 = vsyncadd [#allocation7], %s24
      %s26 = sshll.u32 [#allocation6], 4
      %s27 = int_to_ptr.vmem [resolvable:$true] %s26
      %32 = dma.hbm_to_vmem [thread:$0]  %s1, 256, %s27, [#allocation7], 128, 128, 8
    $region5: #{encoder_forward.3} parent=1 // pred_fallthru
      _
    // Predicated region
    $region6: #{encoder_forward.3} parent=1 // pred_check
      _
    $region7: #{encoder_forward.3} parent=1 // pred_check_branch
      %34 = sbr.rel (0) target = $region9
    $region8: #{encoder_forward.3} parent=1 // pred_region
      %s36 = ssub.s32 1024, 1024
      %37 = vsyncadd [#allocation10], %s36
      %s38 = sshll.u32 [#allocation9], 4
      %s39 = int_to_ptr.vmem [resolvable:$true] %s38
      %44 = dma.hbm_to_vmem [thread:$0]  %s2, 1024, %s39, [#allocation10], 64, 64, 4
    $region9: #{encoder_forward.3} parent=1 // pred_fallthru
      _
    // Predicated region
    $region10: #{encoder_forward.3} parent=1 // pred_check
      _
    $region11: #{encoder_forward.3} parent=1 // pred_check_branch
      %46 = sbr.rel (0) target = $region13
    $region12: #{encoder_forward.3} parent=1 // pred_region
      %s48 = ssub.s32 3072, 3072
      %49 = vsyncadd [#allocation10], %s48
      %s50 = sshll.u32 [#allocation11], 4
      %s51 = int_to_ptr.vmem [resolvable:$true] %s50
      %56 = dma.hbm_to_vmem [thread:$0]  %s3, 3072, %s51, [#allocation10], 192, 192, 12
    $region13: #{encoder_forward.3} parent=1 // pred_fallthru
      _
    // Predicated region
    $region14: #{encoder_forward.3} parent=1 // pred_check
      _
    $region15: #{encoder_forward.3} parent=1 // pred_check_branch
      %58 = sbr.rel (0) target = $region17
    $region16: #{encoder_forward.3} parent=1 // pred_region
      %s60 = ssub.s32 3072, 3072
      %61 = vsyncadd [#allocation13], %s60
      %s62 = sshll.u32 [#allocation12], 4
      %s63 = int_to_ptr.vmem [resolvable:$true] %s62
      %68 = dma.hbm_to_vmem [thread:$0]  %s4, 3072, %s63, [#allocation13], 192, 192, 12
    $region17: #{encoder_forward.3} parent=1 // pred_fallthru
      _
    // Predicated region
    $region18: #{encoder_forward.3} parent=1 // pred_check
      _
    $region19: #{encoder_forward.3} parent=1 // pred_check_branch
      %70 = sbr.rel (0) target = $region21
    $region20: #{encoder_forward.3} parent=1 // pred_region
      %s72 = ssub.s32 48, 48
      %73 = vsyncadd [#allocation13], %s72
      %s75 = sshll.u32 [#allocation14], 4
      %s76 = int_to_ptr.vmem [resolvable:$true] %s75
      %78 = dma.hbm_to_vmem [thread:$0]  %s5, 48, %s76, [#allocation13]
    $region21: #{encoder_forward.3} parent=1 // pred_fallthru
      _
    // Predicated region
    $region22: #{encoder_forward.3} parent=1 // pred_check
      _
    $region23: #{encoder_forward.3} parent=1 // pred_check_branch
      %80 = sbr.rel (0) target = $region25
    $region24: #{encoder_forward.3} parent=1 // pred_region
      %s82 = ssub.s32 16, 16
      %83 = vsyncadd [#allocation16], %s82
      %s85 = sshll.u32 [#allocation15], 4
      %s86 = int_to_ptr.vmem [resolvable:$true] %s85
      %88 = dma.hbm_to_vmem [thread:$0]  %s6, 16, %s86, [#allocation16]
    $region25: #{encoder_forward.3} parent=1 // pred_fallthru
      _
    // Predicated region
    $region26: #{encoder_forward.3} parent=1 // pred_check
      _
    $region27: #{encoder_forward.3} parent=1 // pred_check_branch
      %90 = sbr.rel (0) target = $region29
    $region28: #{encoder_forward.3} parent=1 // pred_region
      %91 = dma.done [#allocation7], 256
    $region29: #{encoder_forward.3} parent=1 // pred_fallthru
      _
    // Predicated region
    $region30: #{encoder_forward.3} parent=1 // pred_check
      _
    $region31: #{encoder_forward.3} parent=1 // pred_check_branch
      %93 = sbr.rel (0) target = $region33
    $region32: #{encoder_forward.3} parent=1 // pred_region
      %94 = dma.done [#allocation10], 1024
    $region33: #{encoder_forward.3} parent=1 // pred_fallthru
      _
    // Predicated region
    $region34: #{encoder_forward.3} parent=1 // pred_check
      _
    $region35: #{encoder_forward.3} parent=1 // pred_check_branch
      %96 = sbr.rel (0) target = $region37
    $region36: #{encoder_forward.3} parent=1 // pred_region
      %97 = dma.done [#allocation10], 3072
    $region37: #{encoder_forward.3} parent=1 // pred_fallthru
      _
    // Predicated region
    $region38: #{encoder_forward.3} parent=1 // pred_check
      _
    $region39: #{encoder_forward.3} parent=1 // pred_check_branch
      %99 = sbr.rel (0) target = $region41
    $region40: #{encoder_forward.3} parent=1 // pred_region
      %100 = dma.done [#allocation13], 3072
    $region41: #{encoder_forward.3} parent=1 // pred_fallthru
      _
    // Predicated region
    $region42: #{encoder_forward.3} parent=1 // pred_check
      _
    $region43: #{encoder_forward.3} parent=1 // pred_check_branch
      %102 = sbr.rel (0) target = $region45
    $region44: #{encoder_forward.3} parent=1 // pred_region
      %103 = dma.done [#allocation13], 48
    $region45: #{encoder_forward.3} parent=1 // pred_fallthru
      _
    // Predicated region
    $region46: #{encoder_forward.3} parent=1 // pred_check
      _
    $region47: #{encoder_forward.3} parent=1 // pred_check_branch
      %105 = sbr.rel (0) target = $region49
    $region48: #{encoder_forward.3} parent=1 // pred_region
      %106 = dma.done [#allocation16], 16
    $region49: #{encoder_forward.3} parent=1 // pred_fallthru
      _
    %s108 = smul.u32 0, 8
    %p109 = scmp.eq.s32.totalorder 0, 0
    // Predicated region
    $region50: #{encoder_forward.3} parent=1 // pred_check
      %p110 = pneg %p109
    $region51: #{encoder_forward.3} parent=1 // pred_check_branch
      %112 = sbr.rel (%p110) target = $region53
    $region52: #{encoder_forward.3} parent=1 // pred_region
      %113 = vst [vmem:[#allocation3] sm:$0xff] 0.0
      %114 = vst [vmem:[#allocation3 + $0x8] sm:$0xff] 0.0
    $region53: #{encoder_forward.3} parent=1 // pred_fallthru
      _
    %s115 = sld [smem:[#allocation5]]
    %p116 = scmp.lt.s32.totalorder %s108, %s115
    // Predicated region
    $region54: #{encoder_forward.3} parent=1 // pred_check
      %p117 = pneg %p116
    $region55: #{encoder_forward.3} parent=1 // pred_check_branch
      %119 = sbr.rel (%p117) target = $region57
    $region56: #{encoder_forward.3} parent=1 // pred_region
      %v120 = vld [vmem:[#allocation9] sm:$0xf]
      %v121 = vld [vmem:[#allocation9 + $0x4] sm:$0xf]
      %v122 = vld [vmem:[#allocation9 + $0x8] sm:$0xf]
      %v123 = vld [vmem:[#allocation9 + $0xc] sm:$0xf]
      %v124 = vld [vmem:[#allocation9 + $0x10] sm:$0xf]
      %v125 = vld [vmem:[#allocation9 + $0x14] sm:$0xf]
      %v126 = vld [vmem:[#allocation9 + $0x18] sm:$0xf]
      %v127 = vld [vmem:[#allocation9 + $0x1c] sm:$0xf]
      %v128 = vld [vmem:[#allocation9 + $0x20] sm:$0xf]
      %v129 = vld [vmem:[#allocation9 + $0x24] sm:$0xf]
      %v130 = vld [vmem:[#allocation9 + $0x28] sm:$0xf]
      %v131 = vld [vmem:[#allocation9 + $0x2c] sm:$0xf]
      %v132 = vld [vmem:[#allocation9 + $0x30] sm:$0xf]
      %v133 = vld [vmem:[#allocation9 + $0x34] sm:$0xf]
      %v134 = vld [vmem:[#allocation9 + $0x38] sm:$0xf]
      %v135 = vld [vmem:[#allocation9 + $0x3c] sm:$0xf]
      %v136 = vld [vmem:[#allocation11] sm:$0xff]
      %v137 = vld [vmem:[#allocation11 + $0x8] sm:$0xf]
      %v138 = vld [vmem:[#allocation11 + $0xc] sm:$0xff]
      %v139 = vld [vmem:[#allocation11 + $0x14] sm:$0xf]
      %v140 = vld [vmem:[#allocation11 + $0x18] sm:$0xff]
      %v141 = vld [vmem:[#allocation11 + $0x20] sm:$0xf]
      %v142 = vld [vmem:[#allocation11 + $0x24] sm:$0xff]
      %v143 = vld [vmem:[#allocation11 + $0x2c] sm:$0xf]
      %v144 = vld [vmem:[#allocation11 + $0x30] sm:$0xff]
      %v145 = vld [vmem:[#allocation11 + $0x38] sm:$0xf]
      %v146 = vld [vmem:[#allocation11 + $0x3c] sm:$0xff]
      %v147 = vld [vmem:[#allocation11 + $0x44] sm:$0xf]
      %v148 = vld [vmem:[#allocation11 + $0x48] sm:$0xff]
      %v149 = vld [vmem:[#allocation11 + $0x50] sm:$0xf]
      %v150 = vld [vmem:[#allocation11 + $0x54] sm:$0xff]
      %v151 = vld [vmem:[#allocation11 + $0x5c] sm:$0xf]
      %v152 = vld [vmem:[#allocation11 + $0x60] sm:$0xff]
      %v153 = vld [vmem:[#allocation11 + $0x68] sm:$0xf]
      %v154 = vld [vmem:[#allocation11 + $0x6c] sm:$0xff]
      %v155 = vld [vmem:[#allocation11 + $0x74] sm:$0xf]
      %v156 = vld [vmem:[#allocation11 + $0x78] sm:$0xff]
      %v157 = vld [vmem:[#allocation11 + $0x80] sm:$0xf]
      %v158 = vld [vmem:[#allocation11 + $0x84] sm:$0xff]
      %v159 = vld [vmem:[#allocation11 + $0x8c] sm:$0xf]
      %v160 = vld [vmem:[#allocation11 + $0x90] sm:$0xff]
      %v161 = vld [vmem:[#allocation11 + $0x98] sm:$0xf]
      %v162 = vld [vmem:[#allocation11 + $0x9c] sm:$0xff]
      %v163 = vld [vmem:[#allocation11 + $0xa4] sm:$0xf]
      %v164 = vld [vmem:[#allocation11 + $0xa8] sm:$0xff]
      %v165 = vld [vmem:[#allocation11 + $0xb0] sm:$0xf]
      %v166 = vld [vmem:[#allocation11 + $0xb4] sm:$0xff]
      %v167 = vld [vmem:[#allocation11 + $0xbc] sm:$0xf]
      %v168 = vld [vmem:[#allocation14] sm:$0x7]
      %v170 = vlaneseq
      %v171 = vshrl.u32 %v170, 7
      %v172 = vsub.s32 0, %v171
      %v173 = vrot.slane %v168, %v172
      %v174 = vlaneseq
      %v175 = vshrl.u32 %v174, 7
      %v176 = vsub.s32 1, %v175
      %v177 = vrot.slane %v168, %v176
      %v178 = vlaneseq
      %v179 = vshrl.u32 %v178, 7
      %v180 = vsub.s32 2, %v179
      %v181 = vrot.slane %v168, %v180
      %v201 = vunpack.c.l.b16 %v120
      %v202 = vunpack.c.l.b16 %v121
      %v203 = vunpack.c.l.b16 %v122
      %v204 = vunpack.c.l.b16 %v123
      %v205 = vunpack.c.l.b16 %v124
      %v206 = vunpack.c.l.b16 %v125
      %v207 = vunpack.c.l.b16 %v126
      %v208 = vunpack.c.l.b16 %v127
      %v209 = vunpack.c.l.b16 %v128
      %v210 = vunpack.c.l.b16 %v129
      %v211 = vunpack.c.l.b16 %v130
      %v212 = vunpack.c.l.b16 %v131
      %v213 = vunpack.c.l.b16 %v132
      %v214 = vunpack.c.l.b16 %v133
      %v215 = vunpack.c.l.b16 %v134
      %v216 = vunpack.c.l.b16 %v135
      %v217 = vpack.c.b16 %v202, %v201
      %v218 = vpack.c.b16 %v204, %v203
      %v219 = vpack.c.b16 %v206, %v205
      %v220 = vpack.c.b16 %v208, %v207
      %v221 = vpack.c.b16 %v210, %v209
      %v222 = vpack.c.b16 %v212, %v211
      %v223 = vpack.c.b16 %v214, %v213
      %v224 = vpack.c.b16 %v216, %v215
      %v265 = vunpack.c.l.b16 %v136
      %v266 = vunpack.c.h.b16 %v136
      %v267 = vunpack.c.l.b16 %v137
      %v268 = vunpack.c.l.b16 %v138
      %v269 = vunpack.c.h.b16 %v138
      %v270 = vunpack.c.l.b16 %v139
      %v271 = vunpack.c.l.b16 %v140
      %v272 = vunpack.c.h.b16 %v140
      %v273 = vunpack.c.l.b16 %v141
      %v274 = vunpack.c.l.b16 %v142
      %v275 = vunpack.c.h.b16 %v142
      %v276 = vunpack.c.l.b16 %v143
      %v277 = vunpack.c.l.b16 %v144
      %v278 = vunpack.c.h.b16 %v144
      %v279 = vunpack.c.l.b16 %v145
      %v280 = vunpack.c.l.b16 %v146
      %v281 = vunpack.c.h.b16 %v146
      %v282 = vunpack.c.l.b16 %v147
      %v283 = vunpack.c.l.b16 %v148
      %v284 = vunpack.c.h.b16 %v148
      %v285 = vunpack.c.l.b16 %v149
      %v286 = vunpack.c.l.b16 %v150
      %v287 = vunpack.c.h.b16 %v150
      %v288 = vunpack.c.l.b16 %v151
      %v289 = vunpack.c.l.b16 %v152
      %v290 = vunpack.c.h.b16 %v152
      %v291 = vunpack.c.l.b16 %v153
      %v292 = vunpack.c.l.b16 %v154
      %v293 = vunpack.c.h.b16 %v154
      %v294 = vunpack.c.l.b16 %v155
      %v295 = vunpack.c.l.b16 %v156
      %v296 = vunpack.c.h.b16 %v156
      %v297 = vunpack.c.l.b16 %v157
      %v298 = vunpack.c.l.b16 %v158
      %v299 = vunpack.c.h.b16 %v158
      %v300 = vunpack.c.l.b16 %v159
      %v301 = vunpack.c.l.b16 %v160
      %v302 = vunpack.c.h.b16 %v160
      %v303 = vunpack.c.l.b16 %v161
      %v304 = vunpack.c.l.b16 %v162
      %v305 = vunpack.c.h.b16 %v162
      %v306 = vunpack.c.l.b16 %v163
      %v307 = vunpack.c.l.b16 %v164
      %v308 = vunpack.c.h.b16 %v164
      %v309 = vunpack.c.l.b16 %v165
      %v310 = vunpack.c.l.b16 %v166
      %v311 = vunpack.c.h.b16 %v166
      %v312 = vunpack.c.l.b16 %v167
      %v313 = vpack.c.b16 %v268, %v265
      %v314 = vpack.c.b16 %v269, %v266
      %v315 = vpack.c.b16 %v270, %v267
      %v316 = vpack.c.b16 %v274, %v271
      %v317 = vpack.c.b16 %v275, %v272
      %v318 = vpack.c.b16 %v276, %v273
      %v319 = vpack.c.b16 %v280, %v277
      %v320 = vpack.c.b16 %v281, %v278
      %v321 = vpack.c.b16 %v282, %v279
      %v322 = vpack.c.b16 %v286, %v283
      %v323 = vpack.c.b16 %v287, %v284
      %v324 = vpack.c.b16 %v288, %v285
      %v325 = vpack.c.b16 %v292, %v289
      %v326 = vpack.c.b16 %v293, %v290
      %v327 = vpack.c.b16 %v294, %v291
      %v328 = vpack.c.b16 %v298, %v295
      %v329 = vpack.c.b16 %v299, %v296
      %v330 = vpack.c.b16 %v300, %v297
      %v331 = vpack.c.b16 %v304, %v301
      %v332 = vpack.c.b16 %v305, %v302
      %v333 = vpack.c.b16 %v306, %v303
      %v334 = vpack.c.b16 %v310, %v307
      %v335 = vpack.c.b16 %v311, %v308
      %v336 = vpack.c.b16 %v312, %v309
      %361 = vmatprep.subr.bf16.mxu0 %v314
      %362 = vmatpush1.bf16.msra.mxu0 %v313
      %363 = vmatprep.subr.bf16.mxu0 %v317
      %364 = vmatpush1.bf16.msra.mxu0 %v316
      %365 = vmatprep.subr.bf16.mxu0 %v320
      %366 = vmatpush1.bf16.msra.mxu0 %v319
      %367 = vmatprep.subr.bf16.mxu0 %v323
      %368 = vmatpush1.bf16.msra.mxu0 %v322
      %369 = vmatprep.subr.bf16.mxu0 %v326
      %370 = vmatpush1.bf16.msra.mxu0 %v325
      %371 = vmatprep.subr.bf16.mxu0 %v329
      %372 = vmatpush1.bf16.msra.mxu0 %v328
      %373 = vmatprep.subr.bf16.mxu0 %v332
      %374 = vmatpush1.bf16.msra.mxu0 %v331
      %375 = vmatprep.subr.bf16.mxu0 %v335
      %376 = vmatpush1.bf16.msra.mxu0 %v334
      %377 = vmatprep.subr.bf16.mxu0 0
      %378 = vmatpush1.bf16.msra.mxu0 0
      %379 = vmatprep.subr.bf16.mxu0 0
      %380 = vmatpush1.bf16.msra.mxu0 0
      %381 = vmatprep.subr.bf16.mxu0 0
      %382 = vmatpush1.bf16.msra.mxu0 0
      %383 = vmatprep.subr.bf16.mxu0 0
      %384 = vmatpush1.bf16.msra.mxu0 0
      %385 = vmatprep.subr.bf16.mxu0 0
      %386 = vmatpush1.bf16.msra.mxu0 0
      %387 = vmatprep.subr.bf16.mxu0 0
      %388 = vmatpush1.bf16.msra.mxu0 0
      %389 = vmatprep.subr.bf16.mxu0 0
      %390 = vmatpush1.bf16.msra.mxu0 0
      %391 = vmatprep.subr.bf16.mxu0 0
      %392 = vmatpush1.bf16.msra.mxu0 0
      %393 = vmatprep.mubr.bf16.mxu0 0
      %394 = vmatmul.mubr.bf16.gmra.mrb[0].mxu0 %v217
      %v395 = vpop.f32.mrb[0].mxu0
      %v396 = vadd.f32 %v173, %v395
      %v397 = vpop.f32.mrb[0].mxu0
      %v398 = vadd.f32 %v177, %v397
      %v399 = vpop.f32.mrb[0].mxu0
      %v400 = vadd.f32 %v173, %v399
      %v401 = vpop.f32.mrb[0].mxu0
      %v402 = vadd.f32 %v177, %v401
      %403 = vmatprep.mubr.bf16.mxu0 0
      %404 = vmatmul.mubr.bf16.gmra.mrb[0].mxu0 %v218
      %v405 = vpop.f32.mrb[0].mxu0
      %v406 = vadd.f32 %v173, %v405
      %v407 = vpop.f32.mrb[0].mxu0
      %v408 = vadd.f32 %v177, %v407
      %v409 = vpop.f32.mrb[0].mxu0
      %v410 = vadd.f32 %v173, %v409
      %v411 = vpop.f32.mrb[0].mxu0
      %v412 = vadd.f32 %v177, %v411
      %413 = vmatprep.mubr.bf16.mxu0 0
      %414 = vmatmul.mubr.bf16.gmra.mrb[0].mxu0 %v219
      %v415 = vpop.f32.mrb[0].mxu0
      %v416 = vadd.f32 %v173, %v415
      %v417 = vpop.f32.mrb[0].mxu0
      %v418 = vadd.f32 %v177, %v417
      %v419 = vpop.f32.mrb[0].mxu0
      %v420 = vadd.f32 %v173, %v419
      %v421 = vpop.f32.mrb[0].mxu0
      %v422 = vadd.f32 %v177, %v421
      %423 = vmatprep.mubr.bf16.mxu0 0
      %424 = vmatmul.mubr.bf16.gmra.mrb[0].mxu0 %v220
      %v425 = vpop.f32.mrb[0].mxu0
      %v426 = vadd.f32 %v173, %v425
      %v427 = vpop.f32.mrb[0].mxu0
      %v428 = vadd.f32 %v177, %v427
      %v429 = vpop.f32.mrb[0].mxu0
      %v430 = vadd.f32 %v173, %v429
      %v431 = vpop.f32.mrb[0].mxu0
      %v432 = vadd.f32 %v177, %v431
      %433 = vmatprep.mubr.bf16.mxu0 0
      %434 = vmatmul.mubr.bf16.gmra.mrb[0].mxu0 %v221
      %v435 = vpop.f32.mrb[0].mxu0
      %v436 = vadd.f32 %v173, %v435
      %v437 = vpop.f32.mrb[0].mxu0
      %v438 = vadd.f32 %v177, %v437
      %v439 = vpop.f32.mrb[0].mxu0
      %v440 = vadd.f32 %v173, %v439
      %v441 = vpop.f32.mrb[0].mxu0
      %v442 = vadd.f32 %v177, %v441
      %443 = vmatprep.mubr.bf16.mxu0 0
      %444 = vmatmul.mubr.bf16.gmra.mrb[0].mxu0 %v222
      %v445 = vpop.f32.mrb[0].mxu0
      %v446 = vadd.f32 %v173, %v445
      %v447 = vpop.f32.mrb[0].mxu0
      %v448 = vadd.f32 %v177, %v447
      %v449 = vpop.f32.mrb[0].mxu0
      %v450 = vadd.f32 %v173, %v449
      %v451 = vpop.f32.mrb[0].mxu0
      %v452 = vadd.f32 %v177, %v451
      %453 = vmatprep.mubr.bf16.mxu0 0
      %454 = vmatmul.mubr.bf16.gmra.mrb[0].mxu0 %v223
      %v455 = vpop.f32.mrb[0].mxu0
      %v456 = vadd.f32 %v173, %v455
      %v457 = vpop.f32.mrb[0].mxu0
      %v458 = vadd.f32 %v177, %v457
      %v459 = vpop.f32.mrb[0].mxu0
      %v460 = vadd.f32 %v173, %v459
      %v461 = vpop.f32.mrb[0].mxu0
      %v462 = vadd.f32 %v177, %v461
      %463 = vmatprep.mubr.bf16.mxu0 0
      %464 = vmatmul.mubr.bf16.gmra.mrb[0].mxu0 %v224
      %v465 = vpop.f32.mrb[0].mxu0
      %v466 = vadd.f32 %v173, %v465
      %v467 = vpop.f32.mrb[0].mxu0
      %v468 = vadd.f32 %v177, %v467
      %v469 = vpop.f32.mrb[0].mxu0
      %v470 = vadd.f32 %v173, %v469
      %v471 = vpop.f32.mrb[0].mxu0
      %v472 = vadd.f32 %v177, %v471
      %473 = vdwg.mxu0
      %474 = vmatprep.subr.bf16.mxu0 0
      %475 = vmatpush1.bf16.msra.mxu0 %v315
      %476 = vmatprep.subr.bf16.mxu0 0
      %477 = vmatpush1.bf16.msra.mxu0 %v318
      %478 = vmatprep.subr.bf16.mxu0 0
      %479 = vmatpush1.bf16.msra.mxu0 %v321
      %480 = vmatprep.subr.bf16.mxu0 0
      %481 = vmatpush1.bf16.msra.mxu0 %v324
      %482 = vmatprep.subr.bf16.mxu0 0
      %483 = vmatpush1.bf16.msra.mxu0 %v327
      %484 = vmatprep.subr.bf16.mxu0 0
      %485 = vmatpush1.bf16.msra.mxu0 %v330
      %486 = vmatprep.subr.bf16.mxu0 0
      %487 = vmatpush1.bf16.msra.mxu0 %v333
      %488 = vmatprep.subr.bf16.mxu0 0
      %489 = vmatpush1.bf16.msra.mxu0 %v336
      %490 = vmatprep.subr.bf16.mxu0 0
      %491 = vmatpush1.bf16.msra.mxu0 0
      %492 = vmatprep.subr.bf16.mxu0 0
      %493 = vmatpush1.bf16.msra.mxu0 0
      %494 = vmatprep.subr.bf16.mxu0 0
      %495 = vmatpush1.bf16.msra.mxu0 0
      %496 = vmatprep.subr.bf16.mxu0 0
      %497 = vmatpush1.bf16.msra.mxu0 0
      %498 = vmatprep.subr.bf16.mxu0 0
      %499 = vmatpush1.bf16.msra.mxu0 0
      %500 = vmatprep.subr.bf16.mxu0 0
      %501 = vmatpush1.bf16.msra.mxu0 0
      %502 = vmatprep.subr.bf16.mxu0 0
      %503 = vmatpush1.bf16.msra.mxu0 0
      %504 = vmatprep.subr.bf16.mxu0 0
      %505 = vmatpush1.bf16.msra.mxu0 0
      %506 = vmatprep.mubr.bf16.mxu0 0
      %507 = vmatmul.mubr.bf16.gmra.mrb[0].mxu0 %v217
      %v508 = vpop.f32.mrb[0].mxu0
      %v509 = vadd.f32 %v181, %v508
      %v510 = vpop.f32.mrb[0].mxu0
      %v511 = vpop.f32.mrb[0].mxu0
      %v512 = vadd.f32 %v181, %v511
      %v513 = vpop.f32.mrb[0].mxu0
      %514 = vmatprep.mubr.bf16.mxu0 0
      %515 = vmatmul.mubr.bf16.gmra.mrb[0].mxu0 %v218
      %v516 = vpop.f32.mrb[0].mxu0
      %v517 = vadd.f32 %v181, %v516
      %v518 = vpop.f32.mrb[0].mxu0
      %v519 = vpop.f32.mrb[0].mxu0
      %v520 = vadd.f32 %v181, %v519
      %v521 = vpop.f32.mrb[0].mxu0
      %522 = vmatprep.mubr.bf16.mxu0 0
      %523 = vmatmul.mubr.bf16.gmra.mrb[0].mxu0 %v219
      %v524 = vpop.f32.mrb[0].mxu0
      %v525 = vadd.f32 %v181, %v524
      %v526 = vpop.f32.mrb[0].mxu0
      %v527 = vpop.f32.mrb[0].mxu0
      %v528 = vadd.f32 %v181, %v527
      %v529 = vpop.f32.mrb[0].mxu0
      %530 = vmatprep.mubr.bf16.mxu0 0
      %531 = vmatmul.mubr.bf16.gmra.mrb[0].mxu0 %v220
      %v532 = vpop.f32.mrb[0].mxu0
      %v533 = vadd.f32 %v181, %v532
      %v534 = vpop.f32.mrb[0].mxu0
      %v535 = vpop.f32.mrb[0].mxu0
      %v536 = vadd.f32 %v181, %v535
      %v537 = vpop.f32.mrb[0].mxu0
      %538 = vmatprep.mubr.bf16.mxu0 0
      %539 = vmatmul.mubr.bf16.gmra.mrb[0].mxu0 %v221
      %v540 = vpop.f32.mrb[0].mxu0
      %v541 = vadd.f32 %v181, %v540
      %v542 = vpop.f32.mrb[0].mxu0
      %v543 = vpop.f32.mrb[0].mxu0
      %v544 = vadd.f32 %v181, %v543
      %v545 = vpop.f32.mrb[0].mxu0
      %546 = vmatprep.mubr.bf16.mxu0 0
      %547 = vmatmul.mubr.bf16.gmra.mrb[0].mxu0 %v222
      %v548 = vpop.f32.mrb[0].mxu0
      %v549 = vadd.f32 %v181, %v548
      %v550 = vpop.f32.mrb[0].mxu0
      %v551 = vpop.f32.mrb[0].mxu0
      %v552 = vadd.f32 %v181, %v551
      %v553 = vpop.f32.mrb[0].mxu0
      %554 = vmatprep.mubr.bf16.mxu0 0
      %555 = vmatmul.mubr.bf16.gmra.mrb[0].mxu0 %v223
      %v556 = vpop.f32.mrb[0].mxu0
      %v557 = vadd.f32 %v181, %v556
      %v558 = vpop.f32.mrb[0].mxu0
      %v559 = vpop.f32.mrb[0].mxu0
      %v560 = vadd.f32 %v181, %v559
      %v561 = vpop.f32.mrb[0].mxu0
      %562 = vmatprep.mubr.bf16.mxu0 0
      %563 = vmatmul.mubr.bf16.gmra.mrb[0].mxu0 %v224
      %v564 = vpop.f32.mrb[0].mxu0
      %v565 = vadd.f32 %v181, %v564
      %v566 = vpop.f32.mrb[0].mxu0
      %v567 = vpop.f32.mrb[0].mxu0
      %v568 = vadd.f32 %v181, %v567
      %v569 = vpop.f32.mrb[0].mxu0
      %570 = vdwg.mxu0
      %571 = vst [vmem:[#allocation2] sm:$0xff] %v396
      %572 = vst [vmem:[#allocation2 + $0x8] sm:$0xff] %v398
      %573 = vst [vmem:[#allocation2 + $0x10] sm:$0xff] %v509
      %574 = vst [vmem:[#allocation2 + $0x18] sm:$0xff] %v400
      %575 = vst [vmem:[#allocation2 + $0x20] sm:$0xff] %v402
      %576 = vst [vmem:[#allocation2 + $0x28] sm:$0xff] %v512
      %577 = vst [vmem:[#allocation2 + $0x30] sm:$0xff] %v406
      %578 = vst [vmem:[#allocation2 + $0x38] sm:$0xff] %v408
      %579 = vst [vmem:[#allocation2 + $0x40] sm:$0xff] %v517
      %580 = vst [vmem:[#allocation2 + $0x48] sm:$0xff] %v410
      %581 = vst [vmem:[#allocation2 + $0x50] sm:$0xff] %v412
      %582 = vst [vmem:[#allocation2 + $0x58] sm:$0xff] %v520
      %583 = vst [vmem:[#allocation2 + $0x60] sm:$0xff] %v416
      %584 = vst [vmem:[#allocation2 + $0x68] sm:$0xff] %v418
      %585 = vst [vmem:[#allocation2 + $0x70] sm:$0xff] %v525
      %586 = vst [vmem:[#allocation2 + $0x78] sm:$0xff] %v420
      %587 = vst [vmem:[#allocation2 + $0x80] sm:$0xff] %v422
      %588 = vst [vmem:[#allocation2 + $0x88] sm:$0xff] %v528
      %589 = vst [vmem:[#allocation2 + $0x90] sm:$0xff] %v426
      %590 = vst [vmem:[#allocation2 + $0x98] sm:$0xff] %v428
      %591 = vst [vmem:[#allocation2 + $0xa0] sm:$0xff] %v533
      %592 = vst [vmem:[#allocation2 + $0xa8] sm:$0xff] %v430
      %593 = vst [vmem:[#allocation2 + $0xb0] sm:$0xff] %v432
      %594 = vst [vmem:[#allocation2 + $0xb8] sm:$0xff] %v536
      %595 = vst [vmem:[#allocation2 + $0xc0] sm:$0xff] %v436
      %596 = vst [vmem:[#allocation2 + $0xc8] sm:$0xff] %v438
      %597 = vst [vmem:[#allocation2 + $0xd0] sm:$0xff] %v541
      %598 = vst [vmem:[#allocation2 + $0xd8] sm:$0xff] %v440
      %599 = vst [vmem:[#allocation2 + $0xe0] sm:$0xff] %v442
      %600 = vst [vmem:[#allocation2 + $0xe8] sm:$0xff] %v544
      %601 = vst [vmem:[#allocation2 + $0xf0] sm:$0xff] %v446
      %602 = vst [vmem:[#allocation2 + $0xf8] sm:$0xff] %v448
      %603 = vst [vmem:[#allocation2 + $0x100] sm:$0xff] %v549
      %604 = vst [vmem:[#allocation2 + $0x108] sm:$0xff] %v450
      %605 = vst [vmem:[#allocation2 + $0x110] sm:$0xff] %v452
      %606 = vst [vmem:[#allocation2 + $0x118] sm:$0xff] %v552
      %607 = vst [vmem:[#allocation2 + $0x120] sm:$0xff] %v456
      %608 = vst [vmem:[#allocation2 + $0x128] sm:$0xff] %v458
      %609 = vst [vmem:[#allocation2 + $0x130] sm:$0xff] %v557
      %610 = vst [vmem:[#allocation2 + $0x138] sm:$0xff] %v460
      %611 = vst [vmem:[#allocation2 + $0x140] sm:$0xff] %v462
      %612 = vst [vmem:[#allocation2 + $0x148] sm:$0xff] %v560
      %613 = vst [vmem:[#allocation2 + $0x150] sm:$0xff] %v466
      %614 = vst [vmem:[#allocation2 + $0x158] sm:$0xff] %v468
      %615 = vst [vmem:[#allocation2 + $0x160] sm:$0xff] %v565
      %616 = vst [vmem:[#allocation2 + $0x168] sm:$0xff] %v470
      %617 = vst [vmem:[#allocation2 + $0x170] sm:$0xff] %v472
      %618 = vst [vmem:[#allocation2 + $0x178] sm:$0xff] %v568
      %v619 = vld [vmem:[#allocation6] sm:$0xff]
      %v620 = vld [vmem:[#allocation6 + $0x8] sm:$0xff]
      %v621 = vld [vmem:[#allocation12] sm:$0xff]
      %v622 = vld [vmem:[#allocation12 + $0x8] sm:$0xf]
      %v623 = vld [vmem:[#allocation12 + $0xc] sm:$0xff]
      %v624 = vld [vmem:[#allocation12 + $0x14] sm:$0xf]
      %v625 = vld [vmem:[#allocation12 + $0x18] sm:$0xff]
      %v626 = vld [vmem:[#allocation12 + $0x20] sm:$0xf]
      %v627 = vld [vmem:[#allocation12 + $0x24] sm:$0xff]
      %v628 = vld [vmem:[#allocation12 + $0x2c] sm:$0xf]
      %v629 = vld [vmem:[#allocation12 + $0x30] sm:$0xff]
      %v630 = vld [vmem:[#allocation12 + $0x38] sm:$0xf]
      %v631 = vld [vmem:[#allocation12 + $0x3c] sm:$0xff]
      %v632 = vld [vmem:[#allocation12 + $0x44] sm:$0xf]
      %v633 = vld [vmem:[#allocation12 + $0x48] sm:$0xff]
      %v634 = vld [vmem:[#allocation12 + $0x50] sm:$0xf]
      %v635 = vld [vmem:[#allocation12 + $0x54] sm:$0xff]
      %v636 = vld [vmem:[#allocation12 + $0x5c] sm:$0xf]
      %v637 = vld [vmem:[#allocation12 + $0x60] sm:$0xff]
      %v638 = vld [vmem:[#allocation12 + $0x68] sm:$0xf]
      %v639 = vld [vmem:[#allocation12 + $0x6c] sm:$0xff]
      %v640 = vld [vmem:[#allocation12 + $0x74] sm:$0xf]
      %v641 = vld [vmem:[#allocation12 + $0x78] sm:$0xff]
      %v642 = vld [vmem:[#allocation12 + $0x80] sm:$0xf]
      %v643 = vld [vmem:[#allocation12 + $0x84] sm:$0xff]
      %v644 = vld [vmem:[#allocation12 + $0x8c] sm:$0xf]
      %v645 = vld [vmem:[#allocation12 + $0x90] sm:$0xff]
      %v646 = vld [vmem:[#allocation12 + $0x98] sm:$0xf]
      %v647 = vld [vmem:[#allocation12 + $0x9c] sm:$0xff]
      %v648 = vld [vmem:[#allocation12 + $0xa4] sm:$0xf]
      %v649 = vld [vmem:[#allocation12 + $0xa8] sm:$0xff]
      %v650 = vld [vmem:[#allocation12 + $0xb0] sm:$0xf]
      %v651 = vld [vmem:[#allocation12 + $0xb4] sm:$0xff]
      %v652 = vld [vmem:[#allocation12 + $0xbc] sm:$0xf]
      %v653 = vld [vmem:[#allocation15] sm:$0x1]
      %v654 = vld [vmem:[#allocation3] sm:$0xff]
      %v655 = vld [vmem:[#allocation3 + $0x8] sm:$0xff]
      %v656 = vld [vmem:[#allocation2] sm:$0xff]
      %v657 = vld [vmem:[#allocation2 + $0x8] sm:$0xff]
      %v658 = vld [vmem:[#allocation2 + $0x10] sm:$0xff]
      %v659 = vld [vmem:[#allocation2 + $0x18] sm:$0xff]
      %v660 = vld [vmem:[#allocation2 + $0x20] sm:$0xff]
      %v661 = vld [vmem:[#allocation2 + $0x28] sm:$0xff]
      %v662 = vpack.c.bf16 %v655, %v654
      %v695 = vunpack.c.l.b16 %v621
      %v696 = vunpack.c.h.b16 %v621
      %v697 = vunpack.c.l.b16 %v622
      %v698 = vunpack.c.l.b16 %v623
      %v699 = vunpack.c.h.b16 %v623
      %v700 = vunpack.c.l.b16 %v624
      %v701 = vunpack.c.l.b16 %v625
      %v702 = vunpack.c.h.b16 %v625
      %v703 = vunpack.c.l.b16 %v626
      %v704 = vunpack.c.l.b16 %v627
      %v705 = vunpack.c.h.b16 %v627
      %v706 = vunpack.c.l.b16 %v628
      %v707 = vunpack.c.l.b16 %v629
      %v708 = vunpack.c.h.b16 %v629
      %v709 = vunpack.c.l.b16 %v630
      %v710 = vunpack.c.l.b16 %v631
      %v711 = vunpack.c.h.b16 %v631
      %v712 = vunpack.c.l.b16 %v632
      %v713 = vunpack.c.l.b16 %v633
      %v714 = vunpack.c.h.b16 %v633
      %v715 = vunpack.c.l.b16 %v634
      %v716 = vunpack.c.l.b16 %v635
      %v717 = vunpack.c.h.b16 %v635
      %v718 = vunpack.c.l.b16 %v636
      %v719 = vunpack.c.l.b16 %v637
      %v720 = vunpack.c.h.b16 %v637
      %v721 = vunpack.c.l.b16 %v638
      %v722 = vunpack.c.l.b16 %v639
      %v723 = vunpack.c.h.b16 %v639
      %v724 = vunpack.c.l.b16 %v640
      %v725 = vunpack.c.l.b16 %v641
      %v726 = vunpack.c.h.b16 %v641
      %v727 = vunpack.c.l.b16 %v642
      %v728 = vunpack.c.l.b16 %v643
      %v729 = vunpack.c.h.b16 %v643
      %v730 = vunpack.c.l.b16 %v644
      %v731 = vunpack.c.l.b16 %v645
      %v732 = vunpack.c.h.b16 %v645
      %v733 = vunpack.c.l.b16 %v646
      %v734 = vunpack.c.l.b16 %v647
      %v735 = vunpack.c.h.b16 %v647
      %v736 = vunpack.c.l.b16 %v648
      %v737 = vunpack.c.l.b16 %v649
      %v738 = vunpack.c.h.b16 %v649
      %v739 = vunpack.c.l.b16 %v650
      %v740 = vunpack.c.l.b16 %v651
      %v741 = vunpack.c.h.b16 %v651
      %v742 = vunpack.c.l.b16 %v652
      %v743 = vpack.c.b16 %v698, %v695
      %v744 = vpack.c.b16 %v699, %v696
      %v745 = vpack.c.b16 %v700, %v697
      %v746 = vpack.c.b16 %v704, %v701
      %v747 = vpack.c.b16 %v705, %v702
      %v748 = vpack.c.b16 %v706, %v703
      %v749 = vpack.c.b16 %v710, %v707
      %v750 = vpack.c.b16 %v711, %v708
      %v751 = vpack.c.b16 %v712, %v709
      %v752 = vpack.c.b16 %v716, %v713
      %v753 = vpack.c.b16 %v717, %v714
      %v754 = vpack.c.b16 %v718, %v715
      %v755 = vpack.c.b16 %v722, %v719
      %v756 = vpack.c.b16 %v723, %v720
      %v757 = vpack.c.b16 %v724, %v721
      %v758 = vpack.c.b16 %v728, %v725
      %v759 = vpack.c.b16 %v729, %v726
      %v760 = vpack.c.b16 %v730, %v727
      %v761 = vpack.c.b16 %v734, %v731
      %v762 = vpack.c.b16 %v735, %v732
      %v763 = vpack.c.b16 %v736, %v733
      %v764 = vpack.c.b16 %v740, %v737
      %v765 = vpack.c.b16 %v741, %v738
      %v766 = vpack.c.b16 %v742, %v739
      %791 = vmatprep.subr.bf16.mxu0 %v744
      %792 = vmatpush1.bf16.msra.mxu0 %v743
      %793 = vmatprep.subr.bf16.mxu0 %v747
      %794 = vmatpush1.bf16.msra.mxu0 %v746
      %795 = vmatprep.subr.bf16.mxu0 %v750
      %796 = vmatpush1.bf16.msra.mxu0 %v749
      %797 = vmatprep.subr.bf16.mxu0 %v753
      %798 = vmatpush1.bf16.msra.mxu0 %v752
      %799 = vmatprep.subr.bf16.mxu0 %v756
      %800 = vmatpush1.bf16.msra.mxu0 %v755
      %801 = vmatprep.subr.bf16.mxu0 %v759
      %802 = vmatpush1.bf16.msra.mxu0 %v758
      %803 = vmatprep.subr.bf16.mxu0 %v762
      %804 = vmatpush1.bf16.msra.mxu0 %v761
      %805 = vmatprep.subr.bf16.mxu0 %v765
      %806 = vmatpush1.bf16.msra.mxu0 %v764
      %807 = vmatprep.subr.bf16.mxu0 0
      %808 = vmatpush1.bf16.msra.mxu0 0
      %809 = vmatprep.subr.bf16.mxu0 0
      %810 = vmatpush1.bf16.msra.mxu0 0
      %811 = vmatprep.subr.bf16.mxu0 0
      %812 = vmatpush1.bf16.msra.mxu0 0
      %813 = vmatprep.subr.bf16.mxu0 0
      %814 = vmatpush1.bf16.msra.mxu0 0
      %815 = vmatprep.subr.bf16.mxu0 0
      %816 = vmatpush1.bf16.msra.mxu0 0
      %817 = vmatprep.subr.bf16.mxu0 0
      %818 = vmatpush1.bf16.msra.mxu0 0
      %819 = vmatprep.subr.bf16.mxu0 0
      %820 = vmatpush1.bf16.msra.mxu0 0
      %821 = vmatprep.subr.bf16.mxu0 0
      %822 = vmatpush1.bf16.msra.mxu0 0
      %823 = vmatprep.mubr.bf16.mxu0 0
      %824 = vmatmul.mubr.bf16.gmra.mrb[0].mxu0 %v662
      %v825 = vpop.f32.mrb[0].mxu0
      %v826 = vadd.f32 0.0, %v825
      %v827 = vpop.f32.mrb[0].mxu0
      %v828 = vadd.f32 0.0, %v827
      %v829 = vpop.f32.mrb[0].mxu0
      %v830 = vadd.f32 0.0, %v829
      %v831 = vpop.f32.mrb[0].mxu0
      %v832 = vadd.f32 0.0, %v831
      %833 = vdwg.mxu0
      %834 = vmatprep.subr.bf16.mxu0 0
      %835 = vmatpush1.bf16.msra.mxu0 %v745
      %836 = vmatprep.subr.bf16.mxu0 0
      %837 = vmatpush1.bf16.msra.mxu0 %v748
      %838 = vmatprep.subr.bf16.mxu0 0
      %839 = vmatpush1.bf16.msra.mxu0 %v751
      %840 = vmatprep.subr.bf16.mxu0 0
      %841 = vmatpush1.bf16.msra.mxu0 %v754
      %842 = vmatprep.subr.bf16.mxu0 0
      %843 = vmatpush1.bf16.msra.mxu0 %v757
      %844 = vmatprep.subr.bf16.mxu0 0
      %845 = vmatpush1.bf16.msra.mxu0 %v760
      %846 = vmatprep.subr.bf16.mxu0 0
      %847 = vmatpush1.bf16.msra.mxu0 %v763
      %848 = vmatprep.subr.bf16.mxu0 0
      %849 = vmatpush1.bf16.msra.mxu0 %v766
      %850 = vmatprep.subr.bf16.mxu0 0
      %851 = vmatpush1.bf16.msra.mxu0 0
      %852 = vmatprep.subr.bf16.mxu0 0
      %853 = vmatpush1.bf16.msra.mxu0 0
      %854 = vmatprep.subr.bf16.mxu0 0
      %855 = vmatpush1.bf16.msra.mxu0 0
      %856 = vmatprep.subr.bf16.mxu0 0
      %857 = vmatpush1.bf16.msra.mxu0 0
      %858 = vmatprep.subr.bf16.mxu0 0
      %859 = vmatpush1.bf16.msra.mxu0 0
      %860 = vmatprep.subr.bf16.mxu0 0
      %861 = vmatpush1.bf16.msra.mxu0 0
      %862 = vmatprep.subr.bf16.mxu0 0
      %863 = vmatpush1.bf16.msra.mxu0 0
      %864 = vmatprep.subr.bf16.mxu0 0
      %865 = vmatpush1.bf16.msra.mxu0 0
      %866 = vmatprep.mubr.bf16.mxu0 0
      %867 = vmatmul.mubr.bf16.gmra.mrb[0].mxu0 %v662
      %v868 = vpop.f32.mrb[0].mxu0
      %v869 = vadd.f32 0.0, %v868
      %v870 = vpop.f32.mrb[0].mxu0
      %v871 = vpop.f32.mrb[0].mxu0
      %v872 = vadd.f32 0.0, %v871
      %v873 = vpop.f32.mrb[0].mxu0
      %874 = vdwg.mxu0
      %v875 = vadd.f32 %v656, %v826
      %v876 = vadd.f32 %v659, %v830
      %v877 = vxor.u32 %v875, 2147483648
      %v878 = vxor.u32 %v876, 2147483648
      %v879 = vmul.f32 %v877, 1.442695
      %v880 = vpow.pop %v879
      %v881 = vmul.f32 %v878, 1.442695
      %v882 = vpow.pop %v881
      %v883 = vadd.f32 %v880, 1.0
      %v884 = vadd.f32 %v882, 1.0
      %v885 = vrcp.pop %v883
      %v886 = vmul.f32 1.0, %v885
      %v887 = vrcp.pop %v884
      %v888 = vmul.f32 1.0, %v887
      %v889 = vadd.f32 %v657, %v828
      %v890 = vadd.f32 %v660, %v832
      %v891 = vxor.u32 %v889, 2147483648
      %v892 = vxor.u32 %v890, 2147483648
      %v893 = vmul.f32 %v891, 1.442695
      %v894 = vpow.pop %v893
      %v895 = vmul.f32 %v892, 1.442695
      %v896 = vpow.pop %v895
      %v897 = vadd.f32 %v894, 1.0
      %v898 = vadd.f32 %v896, 1.0
      %v899 = vrcp.pop %v897
      %v900 = vmul.f32 1.0, %v899
      %v901 = vrcp.pop %v898
      %v902 = vmul.f32 1.0, %v901
      %v904 = vlaneseq
      %v905 = vshrl.u32 %v904, 7
      %v906 = vsub.s32 0, %v905
      %v907 = vrot.slane %v653, %v906
      %v909 = vadd.f32 %v869, %v907
      %v910 = vadd.f32 %v872, %v907
      %v911 = vmul.f32 %v886, %v909
      %v912 = vmul.f32 %v888, %v910
      %v913 = vadd.f32 %v658, %v911
      %v914 = vadd.f32 %v661, %v912
      %v915 = vtanh.pop %v913
      %v916 = vtanh.pop %v914
      %v917 = vsub.f32 1.0, %v900
      %v918 = vsub.f32 1.0, %v902
      %v919 = vmul.f32 %v917, %v915
      %v920 = vmul.f32 %v918, %v916
      %v921 = vmul.f32 %v900, %v654
      %v922 = vmul.f32 %v902, %v655
      %v923 = vadd.f32 %v919, %v921
      %v924 = vadd.f32 %v920, %v922
      %v925 = vstv %s108
      %vm926 = vcmp.lt.s32.totalorder %v925, %v619
      %vm927 = vcmp.lt.s32.totalorder %v925, %v620
      %v928 = vsel %vm926, 1, 0
      %v929 = vsel %vm927, 1, 0
      %930 = vset.pattern.permute.xlu0 0
      %931 = vperm.xlu0 %930, %v928
      %v932 = vpop.permute.xlu0 %931
      %933 = vset.pattern.permute.xlu0 0
      %934 = vperm.xlu0 %933, %v929
      %v935 = vpop.permute.xlu0 %934
      %vm936 = vcmp.eq.s32.totalorder %v932, 1
      %vm937 = vcmp.eq.s32.totalorder %v935, 1
      %v938 = vsel %vm936, %v923, %v654
      %v939 = vsel %vm937, %v924, %v655
      %v940 = vpack.c.bf16 %v939, %v938
      %v942 = vunpack.c.l.b16 %v940
      %v943 = vunpack.c.h.b16 %v940
      %v944 = vpack.c.b16 %v942, %v942
      %v945 = vpack.c.b16 %v943, %v943
      %948 = vst [vmem:[#allocation17] sm:$0xf] %v944
      %949 = vst [vmem:[#allocation17 + $0x4] sm:$0xf] %v945
      %s950 = scalar_lea.vmem [#allocation2], 48
      %v951 = vld [vmem:[%s950] sm:$0xff]
      %v952 = vld [vmem:[%s950 + $0x8] sm:$0xff]
      %v953 = vld [vmem:[%s950 + $0x10] sm:$0xff]
      %v954 = vld [vmem:[%s950 + $0x18] sm:$0xff]
      %v955 = vld [vmem:[%s950 + $0x20] sm:$0xff]
      %v956 = vld [vmem:[%s950 + $0x28] sm:$0xff]
      %957 = vmatprep.subr.bf16.mxu0 %v744
      %958 = vmatpush1.bf16.msra.mxu0 %v743
      %959 = vmatprep.subr.bf16.mxu0 %v747
      %960 = vmatpush1.bf16.msra.mxu0 %v746
      %961 = vmatprep.subr.bf16.mxu0 %v750
      %962 = vmatpush1.bf16.msra.mxu0 %v749
      %963 = vmatprep.subr.bf16.mxu0 %v753
      %964 = vmatpush1.bf16.msra.mxu0 %v752
      %965 = vmatprep.subr.bf16.mxu0 %v756
      %966 = vmatpush1.bf16.msra.mxu0 %v755
      %967 = vmatprep.subr.bf16.mxu0 %v759
      %968 = vmatpush1.bf16.msra.mxu0 %v758
      %969 = vmatprep.subr.bf16.mxu0 %v762
      %970 = vmatpush1.bf16.msra.mxu0 %v761
      %971 = vmatprep.subr.bf16.mxu0 %v765
      %972 = vmatpush1.bf16.msra.mxu0 %v764
      %973 = vmatprep.subr.bf16.mxu0 0
      %974 = vmatpush1.bf16.msra.mxu0 0
      %975 = vmatprep.subr.bf16.mxu0 0
      %976 = vmatpush1.bf16.msra.mxu0 0
      %977 = vmatprep.subr.bf16.mxu0 0
      %978 = vmatpush1.bf16.msra.mxu0 0
      %979 = vmatprep.subr.bf16.mxu0 0
      %980 = vmatpush1.bf16.msra.mxu0 0
      %981 = vmatprep.subr.bf16.mxu0 0
      %982 = vmatpush1.bf16.msra.mxu0 0
      %983 = vmatprep.subr.bf16.mxu0 0
      %984 = vmatpush1.bf16.msra.mxu0 0
      %985 = vmatprep.subr.bf16.mxu0 0
      %986 = vmatpush1.bf16.msra.mxu0 0
      %987 = vmatprep.subr.bf16.mxu0 0
      %988 = vmatpush1.bf16.msra.mxu0 0
      %989 = vmatprep.mubr.bf16.mxu0 0
      %990 = vmatmul.mubr.bf16.gmra.mrb[0].mxu0 %v940
      %v991 = vpop.f32.mrb[0].mxu0
      %v992 = vadd.f32 0.0, %v991
      %v993 = vpop.f32.mrb[0].mxu0
      %v994 = vadd.f32 0.0, %v993
      %v995 = vpop.f32.mrb[0].mxu0
      %v996 = vadd.f32 0.0, %v995
      %v997 = vpop.f32.mrb[0].mxu0
      %v998 = vadd.f32 0.0, %v997
      %999 = vdwg.mxu0
      %1000 = vmatprep.subr.bf16.mxu0 0
      %1001 = vmatpush1.bf16.msra.mxu0 %v745
      %1002 = vmatprep.subr.bf16.mxu0 0
      %1003 = vmatpush1.bf16.msra.mxu0 %v748
      %1004 = vmatprep.subr.bf16.mxu0 0
      %1005 = vmatpush1.bf16.msra.mxu0 %v751
      %1006 = vmatprep.subr.bf16.mxu0 0
      %1007 = vmatpush1.bf16.msra.mxu0 %v754
      %1008 = vmatprep.subr.bf16.mxu0 0
      %1009 = vmatpush1.bf16.msra.mxu0 %v757
      %1010 = vmatprep.subr.bf16.mxu0 0
      %1011 = vmatpush1.bf16.msra.mxu0 %v760
      %1012 = vmatprep.subr.bf16.mxu0 0
      %1013 = vmatpush1.bf16.msra.mxu0 %v763
      %1014 = vmatprep.subr.bf16.mxu0 0
      %1015 = vmatpush1.bf16.msra.mxu0 %v766
      %1016 = vmatprep.subr.bf16.mxu0 0
      %1017 = vmatpush1.bf16.msra.mxu0 0
      %1018 = vmatprep.subr.bf16.mxu0 0
      %1019 = vmatpush1.bf16.msra.mxu0 0
      %1020 = vmatprep.subr.bf16.mxu0 0
      %1021 = vmatpush1.bf16.msra.mxu0 0
      %1022 = vmatprep.subr.bf16.mxu0 0
      %1023 = vmatpush1.bf16.msra.mxu0 0
      %1024 = vmatprep.subr.bf16.mxu0 0
      %1025 = vmatpush1.bf16.msra.mxu0 0
      %1026 = vmatprep.subr.bf16.mxu0 0
      %1027 = vmatpush1.bf16.msra.mxu0 0
      %1028 = vmatprep.subr.bf16.mxu0 0
      %1029 = vmatpush1.bf16.msra.mxu0 0
      %1030 = vmatprep.subr.bf16.mxu0 0
      %1031 = vmatpush1.bf16.msra.mxu0 0
      %1032 = vmatprep.mubr.bf16.mxu0 0
      %1033 = vmatmul.mubr.bf16.gmra.mrb[0].mxu0 %v940
      %v1034 = vpop.f32.mrb[0].mxu0
      %v1035 = vadd.f32 0.0, %v1034
      %v1036 = vpop.f32.mrb[0].mxu0
      %v1037 = vpop.f32.mrb[0].mxu0
      %v1038 = vadd.f32 0.0, %v1037
      %v1039 = vpop.f32.mrb[0].mxu0
      %1040 = vdwg.mxu0
      %v1041 = vadd.f32 %v951, %v992
      %v1042 = vadd.f32 %v954, %v996
      %v1043 = vxor.u32 %v1041, 2147483648
      %v1044 = vxor.u32 %v1042, 2147483648
      %v1045 = vmul.f32 %v1043, 1.442695
      %v1046 = vpow.pop %v1045
      %v1047 = vmul.f32 %v1044, 1.442695
      %v1048 = vpow.pop %v1047
      %v1049 = vadd.f32 %v1046, 1.0
      %v1050 = vadd.f32 %v1048, 1.0
      %v1051 = vrcp.pop %v1049
      %v1052 = vmul.f32 1.0, %v1051
      %v1053 = vrcp.pop %v1050
      %v1054 = vmul.f32 1.0, %v1053
      %v1055 = vadd.f32 %v952, %v994
      %v1056 = vadd.f32 %v955, %v998
      %v1057 = vxor.u32 %v1055, 2147483648
      %v1058 = vxor.u32 %v1056, 2147483648
      %v1059 = vmul.f32 %v1057, 1.442695
      %v1060 = vpow.pop %v1059
      %v1061 = vmul.f32 %v1058, 1.442695
      %v1062 = vpow.pop %v1061
      %v1063 = vadd.f32 %v1060, 1.0
      %v1064 = vadd.f32 %v1062, 1.0
      %v1065 = vrcp.pop %v1063
      %v1066 = vmul.f32 1.0, %v1065
      %v1067 = vrcp.pop %v1064
      %v1068 = vmul.f32 1.0, %v1067
      %v1069 = vadd.f32 %v1035, %v907
      %v1070 = vadd.f32 %v1038, %v907
      %v1071 = vmul.f32 %v1052, %v1069
      %v1072 = vmul.f32 %v1054, %v1070
      %v1073 = vadd.f32 %v953, %v1071
      %v1074 = vadd.f32 %v956, %v1072
      %v1075 = vtanh.pop %v1073
      %v1076 = vtanh.pop %v1074
      %v1077 = vsub.f32 1.0, %v1066
      %v1078 = vsub.f32 1.0, %v1068
      %v1079 = vmul.f32 %v1077, %v1075
      %v1080 = vmul.f32 %v1078, %v1076
      %v1081 = vmul.f32 %v1066, %v938
      %v1082 = vmul.f32 %v1068, %v939
      %v1083 = vadd.f32 %v1079, %v1081
      %v1084 = vadd.f32 %v1080, %v1082
      %s1085 = sadd.s32 %s108, 1
      %v1086 = vstv %s1085
      %vm1087 = vcmp.lt.s32.totalorder %v1086, %v619
      %vm1088 = vcmp.lt.s32.totalorder %v1086, %v620
      %v1089 = vsel %vm1087, 1, 0
      %v1090 = vsel %vm1088, 1, 0
      %1091 = vset.pattern.permute.xlu0 0
      %1092 = vperm.xlu0 %1091, %v1089
      %v1093 = vpop.permute.xlu0 %1092
      %1094 = vset.pattern.permute.xlu0 0
      %1095 = vperm.xlu0 %1094, %v1090
      %v1096 = vpop.permute.xlu0 %1095
      %vm1097 = vcmp.eq.s32.totalorder %v1093, 1
      %vm1098 = vcmp.eq.s32.totalorder %v1096, 1
      %v1099 = vsel %vm1097, %v1083, %v938
      %v1100 = vsel %vm1098, %v1084, %v939
      %v1101 = vpack.c.bf16 %v1100, %v1099
      %v1103 = vunpack.c.l.b16 %v1101
      %v1104 = vunpack.c.h.b16 %v1101
      %v1105 = vpack.c.b16 %v1103, %v1103
      %v1106 = vpack.c.b16 %v1104, %v1104
      %s1109 = scalar_lea.vmem [#allocation17], 8
      %1110 = vst [vmem:[%s1109] sm:$0xf] %v1105
      %1111 = vst [vmem:[%s1109 + $0x4] sm:$0xf] %v1106
      %s1112 = scalar_lea.vmem [#allocation2], 96
      %v1113 = vld [vmem:[%s1112] sm:$0xff]
      %v1114 = vld [vmem:[%s1112 + $0x8] sm:$0xff]
      %v1115 = vld [vmem:[%s1112 + $0x10] sm:$0xff]
      %v1116 = vld [vmem:[%s1112 + $0x18] sm:$0xff]
      %v1117 = vld [vmem:[%s1112 + $0x20] sm:$0xff]
      %v1118 = vld [vmem:[%s1112 + $0x28] sm:$0xff]
      %1119 = vmatprep.subr.bf16.mxu0 %v744
      %1120 = vmatpush1.bf16.msra.mxu0 %v743
      %1121 = vmatprep.subr.bf16.mxu0 %v747
      %1122 = vmatpush1.bf16.msra.mxu0 %v746
      %1123 = vmatprep.subr.bf16.mxu0 %v750
      %1124 = vmatpush1.bf16.msra.mxu0 %v749
      %1125 = vmatprep.subr.bf16.mxu0 %v753
      %1126 = vmatpush1.bf16.msra.mxu0 %v752
      %1127 = vmatprep.subr.bf16.mxu0 %v756
      %1128 = vmatpush1.bf16.msra.mxu0 %v755
      %1129 = vmatprep.subr.bf16.mxu0 %v759
      %1130 = vmatpush1.bf16.msra.mxu0 %v758
      %1131 = vmatprep.subr.bf16.mxu0 %v762
      %1132 = vmatpush1.bf16.msra.mxu0 %v761
      %1133 = vmatprep.subr.bf16.mxu0 %v765
      %1134 = vmatpush1.bf16.msra.mxu0 %v764
      %1135 = vmatprep.subr.bf16.mxu0 0
      %1136 = vmatpush1.bf16.msra.mxu0 0
      %1137 = vmatprep.subr.bf16.mxu0 0
      %1138 = vmatpush1.bf16.msra.mxu0 0
      %1139 = vmatprep.subr.bf16.mxu0 0
      %1140 = vmatpush1.bf16.msra.mxu0 0
      %1141 = vmatprep.subr.bf16.mxu0 0
      %1142 = vmatpush1.bf16.msra.mxu0 0
      %1143 = vmatprep.subr.bf16.mxu0 0
      %1144 = vmatpush1.bf16.msra.mxu0 0
      %1145 = vmatprep.subr.bf16.mxu0 0
      %1146 = vmatpush1.bf16.msra.mxu0 0
      %1147 = vmatprep.subr.bf16.mxu0 0
      %1148 = vmatpush1.bf16.msra.mxu0 0
      %1149 = vmatprep.subr.bf16.mxu0 0
      %1150 = vmatpush1.bf16.msra.mxu0 0
      %1151 = vmatprep.mubr.bf16.mxu0 0
      %1152 = vmatmul.mubr.bf16.gmra.mrb[0].mxu0 %v1101
      %v1153 = vpop.f32.mrb[0].mxu0
      %v1154 = vadd.f32 0.0, %v1153
      %v1155 = vpop.f32.mrb[0].mxu0
      %v1156 = vadd.f32 0.0, %v1155
      %v1157 = vpop.f32.mrb[0].mxu0
      %v1158 = vadd.f32 0.0, %v1157
      %v1159 = vpop.f32.mrb[0].mxu0
      %v1160 = vadd.f32 0.0, %v1159
      %1161 = vdwg.mxu0
      %1162 = vmatprep.subr.bf16.mxu0 0
      %1163 = vmatpush1.bf16.msra.mxu0 %v745
      %1164 = vmatprep.subr.bf16.mxu0 0
      %1165 = vmatpush1.bf16.msra.mxu0 %v748
      %1166 = vmatprep.subr.bf16.mxu0 0
      %1167 = vmatpush1.bf16.msra.mxu0 %v751
      %1168 = vmatprep.subr.bf16.mxu0 0
      %1169 = vmatpush1.bf16.msra.mxu0 %v754
      %1170 = vmatprep.subr.bf16.mxu0 0
      %1171 = vmatpush1.bf16.msra.mxu0 %v757
      %1172 = vmatprep.subr.bf16.mxu0 0
      %1173 = vmatpush1.bf16.msra.mxu0 %v760
      %1174 = vmatprep.subr.bf16.mxu0 0
      %1175 = vmatpush1.bf16.msra.mxu0 %v763
      %1176 = vmatprep.subr.bf16.mxu0 0
      %1177 = vmatpush1.bf16.msra.mxu0 %v766
      %1178 = vmatprep.subr.bf16.mxu0 0
      %1179 = vmatpush1.bf16.msra.mxu0 0
      %1180 = vmatprep.subr.bf16.mxu0 0
      %1181 = vmatpush1.bf16.msra.mxu0 0
      %1182 = vmatprep.subr.bf16.mxu0 0
      %1183 = vmatpush1.bf16.msra.mxu0 0
      %1184 = vmatprep.subr.bf16.mxu0 0
      %1185 = vmatpush1.bf16.msra.mxu0 0
      %1186 = vmatprep.subr.bf16.mxu0 0
      %1187 = vmatpush1.bf16.msra.mxu0 0
      %1188 = vmatprep.subr.bf16.mxu0 0
      %1189 = vmatpush1.bf16.msra.mxu0 0
      %1190 = vmatprep.subr.bf16.mxu0 0
      %1191 = vmatpush1.bf16.msra.mxu0 0
      %1192 = vmatprep.subr.bf16.mxu0 0
      %1193 = vmatpush1.bf16.msra.mxu0 0
      %1194 = vmatprep.mubr.bf16.mxu0 0
      %1195 = vmatmul.mubr.bf16.gmra.mrb[0].mxu0 %v1101
      %v1196 = vpop.f32.mrb[0].mxu0
      %v1197 = vadd.f32 0.0, %v1196
      %v1198 = vpop.f32.mrb[0].mxu0
      %v1199 = vpop.f32.mrb[0].mxu0
      %v1200 = vadd.f32 0.0, %v1199
      %v1201 = vpop.f32.mrb[0].mxu0
      %1202 = vdwg.mxu0
      %v1203 = vadd.f32 %v1113, %v1154
      %v1204 = vadd.f32 %v1116, %v1158
      %v1205 = vxor.u32 %v1203, 2147483648
      %v1206 = vxor.u32 %v1204, 2147483648
      %v1207 = vmul.f32 %v1205, 1.442695
      %v1208 = vpow.pop %v1207
      %v1209 = vmul.f32 %v1206, 1.442695
      %v1210 = vpow.pop %v1209
      %v1211 = vadd.f32 %v1208, 1.0
      %v1212 = vadd.f32 %v1210, 1.0
      %v1213 = vrcp.pop %v1211
      %v1214 = vmul.f32 1.0, %v1213
      %v1215 = vrcp.pop %v1212
      %v1216 = vmul.f32 1.0, %v1215
      %v1217 = vadd.f32 %v1114, %v1156
      %v1218 = vadd.f32 %v1117, %v1160
      %v1219 = vxor.u32 %v1217, 2147483648
      %v1220 = vxor.u32 %v1218, 2147483648
      %v1221 = vmul.f32 %v1219, 1.442695
      %v1222 = vpow.pop %v1221
      %v1223 = vmul.f32 %v1220, 1.442695
      %v1224 = vpow.pop %v1223
      %v1225 = vadd.f32 %v1222, 1.0
      %v1226 = vadd.f32 %v1224, 1.0
      %v1227 = vrcp.pop %v1225
      %v1228 = vmul.f32 1.0, %v1227
      %v1229 = vrcp.pop %v1226
      %v1230 = vmul.f32 1.0, %v1229
      %v1231 = vadd.f32 %v1197, %v907
      %v1232 = vadd.f32 %v1200, %v907
      %v1233 = vmul.f32 %v1214, %v1231
      %v1234 = vmul.f32 %v1216, %v1232
      %v1235 = vadd.f32 %v1115, %v1233
      %v1236 = vadd.f32 %v1118, %v1234
      %v1237 = vtanh.pop %v1235
      %v1238 = vtanh.pop %v1236
      %v1239 = vsub.f32 1.0, %v1228
      %v1240 = vsub.f32 1.0, %v1230
      %v1241 = vmul.f32 %v1239, %v1237
      %v1242 = vmul.f32 %v1240, %v1238
      %v1243 = vmul.f32 %v1228, %v1099
      %v1244 = vmul.f32 %v1230, %v1100
      %v1245 = vadd.f32 %v1241, %v1243
      %v1246 = vadd.f32 %v1242, %v1244
      %s1247 = sadd.s32 %s108, 2
      %v1248 = vstv %s1247
      %vm1249 = vcmp.lt.s32.totalorder %v1248, %v619
      %vm1250 = vcmp.lt.s32.totalorder %v1248, %v620
      %v1251 = vsel %vm1249, 1, 0
      %v1252 = vsel %vm1250, 1, 0
      %1253 = vset.pattern.permute.xlu0 0
      %1254 = vperm.xlu0 %1253, %v1251
      %v1255 = vpop.permute.xlu0 %1254
      %1256 = vset.pattern.permute.xlu0 0
      %1257 = vperm.xlu0 %1256, %v1252
      %v1258 = vpop.permute.xlu0 %1257
      %vm1259 = vcmp.eq.s32.totalorder %v1255, 1
      %vm1260 = vcmp.eq.s32.totalorder %v1258, 1
      %v1261 = vsel %vm1259, %v1245, %v1099
      %v1262 = vsel %vm1260, %v1246, %v1100
      %v1263 = vpack.c.bf16 %v1262, %v1261
      %v1265 = vunpack.c.l.b16 %v1263
      %v1266 = vunpack.c.h.b16 %v1263
      %v1267 = vpack.c.b16 %v1265, %v1265
      %v1268 = vpack.c.b16 %v1266, %v1266
      %s1271 = scalar_lea.vmem [#allocation17], 16
      %1272 = vst [vmem:[%s1271] sm:$0xf] %v1267
      %1273 = vst [vmem:[%s1271 + $0x4] sm:$0xf] %v1268
      %s1274 = scalar_lea.vmem [#allocation2], 144
      %v1275 = vld [vmem:[%s1274] sm:$0xff]
      %v1276 = vld [vmem:[%s1274 + $0x8] sm:$0xff]
      %v1277 = vld [vmem:[%s1274 + $0x10] sm:$0xff]
      %v1278 = vld [vmem:[%s1274 + $0x18] sm:$0xff]
      %v1279 = vld [vmem:[%s1274 + $0x20] sm:$0xff]
      %v1280 = vld [vmem:[%s1274 + $0x28] sm:$0xff]
      %1281 = vmatprep.subr.bf16.mxu0 %v744
      %1282 = vmatpush1.bf16.msra.mxu0 %v743
      %1283 = vmatprep.subr.bf16.mxu0 %v747
      %1284 = vmatpush1.bf16.msra.mxu0 %v746
      %1285 = vmatprep.subr.bf16.mxu0 %v750
      %1286 = vmatpush1.bf16.msra.mxu0 %v749
      %1287 = vmatprep.subr.bf16.mxu0 %v753
      %1288 = vmatpush1.bf16.msra.mxu0 %v752
      %1289 = vmatprep.subr.bf16.mxu0 %v756
      %1290 = vmatpush1.bf16.msra.mxu0 %v755
      %1291 = vmatprep.subr.bf16.mxu0 %v759
      %1292 = vmatpush1.bf16.msra.mxu0 %v758
      %1293 = vmatprep.subr.bf16.mxu0 %v762
      %1294 = vmatpush1.bf16.msra.mxu0 %v761
      %1295 = vmatprep.subr.bf16.mxu0 %v765
      %1296 = vmatpush1.bf16.msra.mxu0 %v764
      %1297 = vmatprep.subr.bf16.mxu0 0
      %1298 = vmatpush1.bf16.msra.mxu0 0
      %1299 = vmatprep.subr.bf16.mxu0 0
      %1300 = vmatpush1.bf16.msra.mxu0 0
      %1301 = vmatprep.subr.bf16.mxu0 0
      %1302 = vmatpush1.bf16.msra.mxu0 0
      %1303 = vmatprep.subr.bf16.mxu0 0
      %1304 = vmatpush1.bf16.msra.mxu0 0
      %1305 = vmatprep.subr.bf16.mxu0 0
      %1306 = vmatpush1.bf16.msra.mxu0 0
      %1307 = vmatprep.subr.bf16.mxu0 0
      %1308 = vmatpush1.bf16.msra.mxu0 0
      %1309 = vmatprep.subr.bf16.mxu0 0
      %1310 = vmatpush1.bf16.msra.mxu0 0
      %1311 = vmatprep.subr.bf16.mxu0 0
      %1312 = vmatpush1.bf16.msra.mxu0 0
      %1313 = vmatprep.mubr.bf16.mxu0 0
      %1314 = vmatmul.mubr.bf16.gmra.mrb[0].mxu0 %v1263
      %v1315 = vpop.f32.mrb[0].mxu0
      %v1316 = vadd.f32 0.0, %v1315
      %v1317 = vpop.f32.mrb[0].mxu0
      %v1318 = vadd.f32 0.0, %v1317
      %v1319 = vpop.f32.mrb[0].mxu0
      %v1320 = vadd.f32 0.0, %v1319
      %v1321 = vpop.f32.mrb[0].mxu0
      %v1322 = vadd.f32 0.0, %v1321
      %1323 = vdwg.mxu0
      %1324 = vmatprep.subr.bf16.mxu0 0
      %1325 = vmatpush1.bf16.msra.mxu0 %v745
      %1326 = vmatprep.subr.bf16.mxu0 0
      %1327 = vmatpush1.bf16.msra.mxu0 %v748
      %1328 = vmatprep.subr.bf16.mxu0 0
      %1329 = vmatpush1.bf16.msra.mxu0 %v751
      %1330 = vmatprep.subr.bf16.mxu0 0
      %1331 = vmatpush1.bf16.msra.mxu0 %v754
      %1332 = vmatprep.subr.bf16.mxu0 0
      %1333 = vmatpush1.bf16.msra.mxu0 %v757
      %1334 = vmatprep.subr.bf16.mxu0 0
      %1335 = vmatpush1.bf16.msra.mxu0 %v760
      %1336 = vmatprep.subr.bf16.mxu0 0
      %1337 = vmatpush1.bf16.msra.mxu0 %v763
      %1338 = vmatprep.subr.bf16.mxu0 0
      %1339 = vmatpush1.bf16.msra.mxu0 %v766
      %1340 = vmatprep.subr.bf16.mxu0 0
      %1341 = vmatpush1.bf16.msra.mxu0 0
      %1342 = vmatprep.subr.bf16.mxu0 0
      %1343 = vmatpush1.bf16.msra.mxu0 0
      %1344 = vmatprep.subr.bf16.mxu0 0
      %1345 = vmatpush1.bf16.msra.mxu0 0
      %1346 = vmatprep.subr.bf16.mxu0 0
      %1347 = vmatpush1.bf16.msra.mxu0 0
      %1348 = vmatprep.subr.bf16.mxu0 0
      %1349 = vmatpush1.bf16.msra.mxu0 0
      %1350 = vmatprep.subr.bf16.mxu0 0
      %1351 = vmatpush1.bf16.msra.mxu0 0
      %1352 = vmatprep.subr.bf16.mxu0 0
      %1353 = vmatpush1.bf16.msra.mxu0 0
      %1354 = vmatprep.subr.bf16.mxu0 0
      %1355 = vmatpush1.bf16.msra.mxu0 0
      %1356 = vmatprep.mubr.bf16.mxu0 0
      %1357 = vmatmul.mubr.bf16.gmra.mrb[0].mxu0 %v1263
      %v1358 = vpop.f32.mrb[0].mxu0
      %v1359 = vadd.f32 0.0, %v1358
      %v1360 = vpop.f32.mrb[0].mxu0
      %v1361 = vpop.f32.mrb[0].mxu0
      %v1362 = vadd.f32 0.0, %v1361
      %v1363 = vpop.f32.mrb[0].mxu0
      %1364 = vdwg.mxu0
      %v1365 = vadd.f32 %v1275, %v1316
      %v1366 = vadd.f32 %v1278, %v1320
      %v1367 = vxor.u32 %v1365, 2147483648
      %v1368 = vxor.u32 %v1366, 2147483648
      %v1369 = vmul.f32 %v1367, 1.442695
      %v1370 = vpow.pop %v1369
      %v1371 = vmul.f32 %v1368, 1.442695
      %v1372 = vpow.pop %v1371
      %v1373 = vadd.f32 %v1370, 1.0
      %v1374 = vadd.f32 %v1372, 1.0
      %v1375 = vrcp.pop %v1373
      %v1376 = vmul.f32 1.0, %v1375
      %v1377 = vrcp.pop %v1374
      %v1378 = vmul.f32 1.0, %v1377
      %v1379 = vadd.f32 %v1276, %v1318
      %v1380 = vadd.f32 %v1279, %v1322
      %v1381 = vxor.u32 %v1379, 2147483648
      %v1382 = vxor.u32 %v1380, 2147483648
      %v1383 = vmul.f32 %v1381, 1.442695
      %v1384 = vpow.pop %v1383
      %v1385 = vmul.f32 %v1382, 1.442695
      %v1386 = vpow.pop %v1385
      %v1387 = vadd.f32 %v1384, 1.0
      %v1388 = vadd.f32 %v1386, 1.0
      %v1389 = vrcp.pop %v1387
      %v1390 = vmul.f32 1.0, %v1389
      %v1391 = vrcp.pop %v1388
      %v1392 = vmul.f32 1.0, %v1391
      %v1393 = vadd.f32 %v1359, %v907
      %v1394 = vadd.f32 %v1362, %v907
      %v1395 = vmul.f32 %v1376, %v1393
      %v1396 = vmul.f32 %v1378, %v1394
      %v1397 = vadd.f32 %v1277, %v1395
      %v1398 = vadd.f32 %v1280, %v1396
      %v1399 = vtanh.pop %v1397
      %v1400 = vtanh.pop %v1398
      %v1401 = vsub.f32 1.0, %v1390
      %v1402 = vsub.f32 1.0, %v1392
      %v1403 = vmul.f32 %v1401, %v1399
      %v1404 = vmul.f32 %v1402, %v1400
      %v1405 = vmul.f32 %v1390, %v1261
      %v1406 = vmul.f32 %v1392, %v1262
      %v1407 = vadd.f32 %v1403, %v1405
      %v1408 = vadd.f32 %v1404, %v1406
      %s1409 = sadd.s32 %s108, 3
      %v1410 = vstv %s1409
      %vm1411 = vcmp.lt.s32.totalorder %v1410, %v619
      %vm1412 = vcmp.lt.s32.totalorder %v1410, %v620
      %v1413 = vsel %vm1411, 1, 0
      %v1414 = vsel %vm1412, 1, 0
      %1415 = vset.pattern.permute.xlu0 0
      %1416 = vperm.xlu0 %1415, %v1413
      %v1417 = vpop.permute.xlu0 %1416
      %1418 = vset.pattern.permute.xlu0 0
      %1419 = vperm.xlu0 %1418, %v1414
      %v1420 = vpop.permute.xlu0 %1419
      %vm1421 = vcmp.eq.s32.totalorder %v1417, 1
      %vm1422 = vcmp.eq.s32.totalorder %v1420, 1
      %v1423 = vsel %vm1421, %v1407, %v1261
      %v1424 = vsel %vm1422, %v1408, %v1262
      %v1425 = vpack.c.bf16 %v1424, %v1423
      %v1427 = vunpack.c.l.b16 %v1425
      %v1428 = vunpack.c.h.b16 %v1425
      %v1429 = vpack.c.b16 %v1427, %v1427
      %v1430 = vpack.c.b16 %v1428, %v1428
      %s1433 = scalar_lea.vmem [#allocation17], 24
      %1434 = vst [vmem:[%s1433] sm:$0xf] %v1429
      %1435 = vst [vmem:[%s1433 + $0x4] sm:$0xf] %v1430
      %s1436 = scalar_lea.vmem [#allocation2], 192
      %v1437 = vld [vmem:[%s1436] sm:$0xff]
      %v1438 = vld [vmem:[%s1436 + $0x8] sm:$0xff]
      %v1439 = vld [vmem:[%s1436 + $0x10] sm:$0xff]
      %v1440 = vld [vmem:[%s1436 + $0x18] sm:$0xff]
      %v1441 = vld [vmem:[%s1436 + $0x20] sm:$0xff]
      %v1442 = vld [vmem:[%s1436 + $0x28] sm:$0xff]
      %1443 = vmatprep.subr.bf16.mxu0 %v744
      %1444 = vmatpush1.bf16.msra.mxu0 %v743
      %1445 = vmatprep.subr.bf16.mxu0 %v747
      %1446 = vmatpush1.bf16.msra.mxu0 %v746
      %1447 = vmatprep.subr.bf16.mxu0 %v750
      %1448 = vmatpush1.bf16.msra.mxu0 %v749
      %1449 = vmatprep.subr.bf16.mxu0 %v753
      %1450 = vmatpush1.bf16.msra.mxu0 %v752
      %1451 = vmatprep.subr.bf16.mxu0 %v756
      %1452 = vmatpush1.bf16.msra.mxu0 %v755
      %1453 = vmatprep.subr.bf16.mxu0 %v759
      %1454 = vmatpush1.bf16.msra.mxu0 %v758
      %1455 = vmatprep.subr.bf16.mxu0 %v762
      %1456 = vmatpush1.bf16.msra.mxu0 %v761
      %1457 = vmatprep.subr.bf16.mxu0 %v765
      %1458 = vmatpush1.bf16.msra.mxu0 %v764
      %1459 = vmatprep.subr.bf16.mxu0 0
      %1460 = vmatpush1.bf16.msra.mxu0 0
      %1461 = vmatprep.subr.bf16.mxu0 0
      %1462 = vmatpush1.bf16.msra.mxu0 0
      %1463 = vmatprep.subr.bf16.mxu0 0
      %1464 = vmatpush1.bf16.msra.mxu0 0
      %1465 = vmatprep.subr.bf16.mxu0 0
      %1466 = vmatpush1.bf16.msra.mxu0 0
      %1467 = vmatprep.subr.bf16.mxu0 0
      %1468 = vmatpush1.bf16.msra.mxu0 0
      %1469 = vmatprep.subr.bf16.mxu0 0
      %1470 = vmatpush1.bf16.msra.mxu0 0
      %1471 = vmatprep.subr.bf16.mxu0 0
      %1472 = vmatpush1.bf16.msra.mxu0 0
      %1473 = vmatprep.subr.bf16.mxu0 0
      %1474 = vmatpush1.bf16.msra.mxu0 0
      %1475 = vmatprep.mubr.bf16.mxu0 0
      %1476 = vmatmul.mubr.bf16.gmra.mrb[0].mxu0 %v1425
      %v1477 = vpop.f32.mrb[0].mxu0
      %v1478 = vadd.f32 0.0, %v1477
      %v1479 = vpop.f32.mrb[0].mxu0
      %v1480 = vadd.f32 0.0, %v1479
      %v1481 = vpop.f32.mrb[0].mxu0
      %v1482 = vadd.f32 0.0, %v1481
      %v1483 = vpop.f32.mrb[0].mxu0
      %v1484 = vadd.f32 0.0, %v1483
      %1485 = vdwg.mxu0
      %1486 = vmatprep.subr.bf16.mxu0 0
      %1487 = vmatpush1.bf16.msra.mxu0 %v745
      %1488 = vmatprep.subr.bf16.mxu0 0
      %1489 = vmatpush1.bf16.msra.mxu0 %v748
      %1490 = vmatprep.subr.bf16.mxu0 0
      %1491 = vmatpush1.bf16.msra.mxu0 %v751
      %1492 = vmatprep.subr.bf16.mxu0 0
      %1493 = vmatpush1.bf16.msra.mxu0 %v754
      %1494 = vmatprep.subr.bf16.mxu0 0
      %1495 = vmatpush1.bf16.msra.mxu0 %v757
      %1496 = vmatprep.subr.bf16.mxu0 0
      %1497 = vmatpush1.bf16.msra.mxu0 %v760
      %1498 = vmatprep.subr.bf16.mxu0 0
      %1499 = vmatpush1.bf16.msra.mxu0 %v763
      %1500 = vmatprep.subr.bf16.mxu0 0
      %1501 = vmatpush1.bf16.msra.mxu0 %v766
      %1502 = vmatprep.subr.bf16.mxu0 0
      %1503 = vmatpush1.bf16.msra.mxu0 0
      %1504 = vmatprep.subr.bf16.mxu0 0
      %1505 = vmatpush1.bf16.msra.mxu0 0
      %1506 = vmatprep.subr.bf16.mxu0 0
      %1507 = vmatpush1.bf16.msra.mxu0 0
      %1508 = vmatprep.subr.bf16.mxu0 0
      %1509 = vmatpush1.bf16.msra.mxu0 0
      %1510 = vmatprep.subr.bf16.mxu0 0
      %1511 = vmatpush1.bf16.msra.mxu0 0
      %1512 = vmatprep.subr.bf16.mxu0 0
      %1513 = vmatpush1.bf16.msra.mxu0 0
      %1514 = vmatprep.subr.bf16.mxu0 0
      %1515 = vmatpush1.bf16.msra.mxu0 0
      %1516 = vmatprep.subr.bf16.mxu0 0
      %1517 = vmatpush1.bf16.msra.mxu0 0
      %1518 = vmatprep.mubr.bf16.mxu0 0
      %1519 = vmatmul.mubr.bf16.gmra.mrb[0].mxu0 %v1425
      %v1520 = vpop.f32.mrb[0].mxu0
      %v1521 = vadd.f32 0.0, %v1520
      %v1522 = vpop.f32.mrb[0].mxu0
      %v1523 = vpop.f32.mrb[0].mxu0
      %v1524 = vadd.f32 0.0, %v1523
      %v1525 = vpop.f32.mrb[0].mxu0
      %1526 = vdwg.mxu0
      %v1527 = vadd.f32 %v1437, %v1478
      %v1528 = vadd.f32 %v1440, %v1482
      %v1529 = vxor.u32 %v1527, 2147483648
      %v1530 = vxor.u32 %v1528, 2147483648
      %v1531 = vmul.f32 %v1529, 1.442695
      %v1532 = vpow.pop %v1531
      %v1533 = vmul.f32 %v1530, 1.442695
      %v1534 = vpow.pop %v1533
      %v1535 = vadd.f32 %v1532, 1.0
      %v1536 = vadd.f32 %v1534, 1.0
      %v1537 = vrcp.pop %v1535
      %v1538 = vmul.f32 1.0, %v1537
      %v1539 = vrcp.pop %v1536
      %v1540 = vmul.f32 1.0, %v1539
      %v1541 = vadd.f32 %v1438, %v1480
      %v1542 = vadd.f32 %v1441, %v1484
      %v1543 = vxor.u32 %v1541, 2147483648
      %v1544 = vxor.u32 %v1542, 2147483648
      %v1545 = vmul.f32 %v1543, 1.442695
      %v1546 = vpow.pop %v1545
      %v1547 = vmul.f32 %v1544, 1.442695
      %v1548 = vpow.pop %v1547
      %v1549 = vadd.f32 %v1546, 1.0
      %v1550 = vadd.f32 %v1548, 1.0
      %v1551 = vrcp.pop %v1549
      %v1552 = vmul.f32 1.0, %v1551
      %v1553 = vrcp.pop %v1550
      %v1554 = vmul.f32 1.0, %v1553
      %v1555 = vadd.f32 %v1521, %v907
      %v1556 = vadd.f32 %v1524, %v907
      %v1557 = vmul.f32 %v1538, %v1555
      %v1558 = vmul.f32 %v1540, %v1556
      %v1559 = vadd.f32 %v1439, %v1557
      %v1560 = vadd.f32 %v1442, %v1558
      %v1561 = vtanh.pop %v1559
      %v1562 = vtanh.pop %v1560
      %v1563 = vsub.f32 1.0, %v1552
      %v1564 = vsub.f32 1.0, %v1554
      %v1565 = vmul.f32 %v1563, %v1561
      %v1566 = vmul.f32 %v1564, %v1562
      %v1567 = vmul.f32 %v1552, %v1423
      %v1568 = vmul.f32 %v1554, %v1424
      %v1569 = vadd.f32 %v1565, %v1567
      %v1570 = vadd.f32 %v1566, %v1568
      %s1571 = sadd.s32 %s108, 4
      %v1572 = vstv %s1571
      %vm1573 = vcmp.lt.s32.totalorder %v1572, %v619
      %vm1574 = vcmp.lt.s32.totalorder %v1572, %v620
      %v1575 = vsel %vm1573, 1, 0
      %v1576 = vsel %vm1574, 1, 0
      %1577 = vset.pattern.permute.xlu0 0
      %1578 = vperm.xlu0 %1577, %v1575
      %v1579 = vpop.permute.xlu0 %1578
      %1580 = vset.pattern.permute.xlu0 0
      %1581 = vperm.xlu0 %1580, %v1576
      %v1582 = vpop.permute.xlu0 %1581
      %vm1583 = vcmp.eq.s32.totalorder %v1579, 1
      %vm1584 = vcmp.eq.s32.totalorder %v1582, 1
      %v1585 = vsel %vm1583, %v1569, %v1423
      %v1586 = vsel %vm1584, %v1570, %v1424
      %v1587 = vpack.c.bf16 %v1586, %v1585
      %v1589 = vunpack.c.l.b16 %v1587
      %v1590 = vunpack.c.h.b16 %v1587
      %v1591 = vpack.c.b16 %v1589, %v1589
      %v1592 = vpack.c.b16 %v1590, %v1590
      %s1595 = scalar_lea.vmem [#allocation17], 32
      %1596 = vst [vmem:[%s1595] sm:$0xf] %v1591
      %1597 = vst [vmem:[%s1595 + $0x4] sm:$0xf] %v1592
      %s1598 = scalar_lea.vmem [#allocation2], 240
      %v1599 = vld [vmem:[%s1598] sm:$0xff]
      %v1600 = vld [vmem:[%s1598 + $0x8] sm:$0xff]
      %v1601 = vld [vmem:[%s1598 + $0x10] sm:$0xff]
      %v1602 = vld [vmem:[%s1598 + $0x18] sm:$0xff]
      %v1603 = vld [vmem:[%s1598 + $0x20] sm:$0xff]
      %v1604 = vld [vmem:[%s1598 + $0x28] sm:$0xff]
      %1605 = vmatprep.subr.bf16.mxu0 %v744
      %1606 = vmatpush1.bf16.msra.mxu0 %v743
      %1607 = vmatprep.subr.bf16.mxu0 %v747
      %1608 = vmatpush1.bf16.msra.mxu0 %v746
      %1609 = vmatprep.subr.bf16.mxu0 %v750
      %1610 = vmatpush1.bf16.msra.mxu0 %v749
      %1611 = vmatprep.subr.bf16.mxu0 %v753
      %1612 = vmatpush1.bf16.msra.mxu0 %v752
      %1613 = vmatprep.subr.bf16.mxu0 %v756
      %1614 = vmatpush1.bf16.msra.mxu0 %v755
      %1615 = vmatprep.subr.bf16.mxu0 %v759
      %1616 = vmatpush1.bf16.msra.mxu0 %v758
      %1617 = vmatprep.subr.bf16.mxu0 %v762
      %1618 = vmatpush1.bf16.msra.mxu0 %v761
      %1619 = vmatprep.subr.bf16.mxu0 %v765
      %1620 = vmatpush1.bf16.msra.mxu0 %v764
      %1621 = vmatprep.subr.bf16.mxu0 0
      %1622 = vmatpush1.bf16.msra.mxu0 0
      %1623 = vmatprep.subr.bf16.mxu0 0
      %1624 = vmatpush1.bf16.msra.mxu0 0
      %1625 = vmatprep.subr.bf16.mxu0 0
      %1626 = vmatpush1.bf16.msra.mxu0 0
      %1627 = vmatprep.subr.bf16.mxu0 0
      %1628 = vmatpush1.bf16.msra.mxu0 0
      %1629 = vmatprep.subr.bf16.mxu0 0
      %1630 = vmatpush1.bf16.msra.mxu0 0
      %1631 = vmatprep.subr.bf16.mxu0 0
      %1632 = vmatpush1.bf16.msra.mxu0 0
      %1633 = vmatprep.subr.bf16.mxu0 0
      %1634 = vmatpush1.bf16.msra.mxu0 0
      %1635 = vmatprep.subr.bf16.mxu0 0
      %1636 = vmatpush1.bf16.msra.mxu0 0
      %1637 = vmatprep.mubr.bf16.mxu0 0
      %1638 = vmatmul.mubr.bf16.gmra.mrb[0].mxu0 %v1587
      %v1639 = vpop.f32.mrb[0].mxu0
      %v1640 = vadd.f32 0.0, %v1639
      %v1641 = vpop.f32.mrb[0].mxu0
      %v1642 = vadd.f32 0.0, %v1641
      %v1643 = vpop.f32.mrb[0].mxu0
      %v1644 = vadd.f32 0.0, %v1643
      %v1645 = vpop.f32.mrb[0].mxu0
      %v1646 = vadd.f32 0.0, %v1645
      %1647 = vdwg.mxu0
      %1648 = vmatprep.subr.bf16.mxu0 0
      %1649 = vmatpush1.bf16.msra.mxu0 %v745
      %1650 = vmatprep.subr.bf16.mxu0 0
      %1651 = vmatpush1.bf16.msra.mxu0 %v748
      %1652 = vmatprep.subr.bf16.mxu0 0
      %1653 = vmatpush1.bf16.msra.mxu0 %v751
      %1654 = vmatprep.subr.bf16.mxu0 0
      %1655 = vmatpush1.bf16.msra.mxu0 %v754
      %1656 = vmatprep.subr.bf16.mxu0 0
      %1657 = vmatpush1.bf16.msra.mxu0 %v757
      %1658 = vmatprep.subr.bf16.mxu0 0
      %1659 = vmatpush1.bf16.msra.mxu0 %v760
      %1660 = vmatprep.subr.bf16.mxu0 0
      %1661 = vmatpush1.bf16.msra.mxu0 %v763
      %1662 = vmatprep.subr.bf16.mxu0 0
      %1663 = vmatpush1.bf16.msra.mxu0 %v766
      %1664 = vmatprep.subr.bf16.mxu0 0
      %1665 = vmatpush1.bf16.msra.mxu0 0
      %1666 = vmatprep.subr.bf16.mxu0 0
      %1667 = vmatpush1.bf16.msra.mxu0 0
      %1668 = vmatprep.subr.bf16.mxu0 0
      %1669 = vmatpush1.bf16.msra.mxu0 0
      %1670 = vmatprep.subr.bf16.mxu0 0
      %1671 = vmatpush1.bf16.msra.mxu0 0
      %1672 = vmatprep.subr.bf16.mxu0 0
      %1673 = vmatpush1.bf16.msra.mxu0 0
      %1674 = vmatprep.subr.bf16.mxu0 0
      %1675 = vmatpush1.bf16.msra.mxu0 0
      %1676 = vmatprep.subr.bf16.mxu0 0
      %1677 = vmatpush1.bf16.msra.mxu0 0
      %1678 = vmatprep.subr.bf16.mxu0 0
      %1679 = vmatpush1.bf16.msra.mxu0 0
      %1680 = vmatprep.mubr.bf16.mxu0 0
      %1681 = vmatmul.mubr.bf16.gmra.mrb[0].mxu0 %v1587
      %v1682 = vpop.f32.mrb[0].mxu0
      %v1683 = vadd.f32 0.0, %v1682
      %v1684 = vpop.f32.mrb[0].mxu0
      %v1685 = vpop.f32.mrb[0].mxu0
      %v1686 = vadd.f32 0.0, %v1685
      %v1687 = vpop.f32.mrb[0].mxu0
      %1688 = vdwg.mxu0
      %v1689 = vadd.f32 %v1599, %v1640
      %v1690 = vadd.f32 %v1602, %v1644
      %v1691 = vxor.u32 %v1689, 2147483648
      %v1692 = vxor.u32 %v1690, 2147483648
      %v1693 = vmul.f32 %v1691, 1.442695
      %v1694 = vpow.pop %v1693
      %v1695 = vmul.f32 %v1692, 1.442695
      %v1696 = vpow.pop %v1695
      %v1697 = vadd.f32 %v1694, 1.0
      %v1698 = vadd.f32 %v1696, 1.0
      %v1699 = vrcp.pop %v1697
      %v1700 = vmul.f32 1.0, %v1699
      %v1701 = vrcp.pop %v1698
      %v1702 = vmul.f32 1.0, %v1701
      %v1703 = vadd.f32 %v1600, %v1642
      %v1704 = vadd.f32 %v1603, %v1646
      %v1705 = vxor.u32 %v1703, 2147483648
      %v1706 = vxor.u32 %v1704, 2147483648
      %v1707 = vmul.f32 %v1705, 1.442695
      %v1708 = vpow.pop %v1707
      %v1709 = vmul.f32 %v1706, 1.442695
      %v1710 = vpow.pop %v1709
      %v1711 = vadd.f32 %v1708, 1.0
      %v1712 = vadd.f32 %v1710, 1.0
      %v1713 = vrcp.pop %v1711
      %v1714 = vmul.f32 1.0, %v1713
      %v1715 = vrcp.pop %v1712
      %v1716 = vmul.f32 1.0, %v1715
      %v1717 = vadd.f32 %v1683, %v907
      %v1718 = vadd.f32 %v1686, %v907
      %v1719 = vmul.f32 %v1700, %v1717
      %v1720 = vmul.f32 %v1702, %v1718
      %v1721 = vadd.f32 %v1601, %v1719
      %v1722 = vadd.f32 %v1604, %v1720
      %v1723 = vtanh.pop %v1721
      %v1724 = vtanh.pop %v1722
      %v1725 = vsub.f32 1.0, %v1714
      %v1726 = vsub.f32 1.0, %v1716
      %v1727 = vmul.f32 %v1725, %v1723
      %v1728 = vmul.f32 %v1726, %v1724
      %v1729 = vmul.f32 %v1714, %v1585
      %v1730 = vmul.f32 %v1716, %v1586
      %v1731 = vadd.f32 %v1727, %v1729
      %v1732 = vadd.f32 %v1728, %v1730
      %s1733 = sadd.s32 %s108, 5
      %v1734 = vstv %s1733
      %vm1735 = vcmp.lt.s32.totalorder %v1734, %v619
      %vm1736 = vcmp.lt.s32.totalorder %v1734, %v620
      %v1737 = vsel %vm1735, 1, 0
      %v1738 = vsel %vm1736, 1, 0
      %1739 = vset.pattern.permute.xlu0 0
      %1740 = vperm.xlu0 %1739, %v1737
      %v1741 = vpop.permute.xlu0 %1740
      %1742 = vset.pattern.permute.xlu0 0
      %1743 = vperm.xlu0 %1742, %v1738
      %v1744 = vpop.permute.xlu0 %1743
      %vm1745 = vcmp.eq.s32.totalorder %v1741, 1
      %vm1746 = vcmp.eq.s32.totalorder %v1744, 1
      %v1747 = vsel %vm1745, %v1731, %v1585
      %v1748 = vsel %vm1746, %v1732, %v1586
      %v1749 = vpack.c.bf16 %v1748, %v1747
      %v1751 = vunpack.c.l.b16 %v1749
      %v1752 = vunpack.c.h.b16 %v1749
      %v1753 = vpack.c.b16 %v1751, %v1751
      %v1754 = vpack.c.b16 %v1752, %v1752
      %s1757 = scalar_lea.vmem [#allocation17], 40
      %1758 = vst [vmem:[%s1757] sm:$0xf] %v1753
      %1759 = vst [vmem:[%s1757 + $0x4] sm:$0xf] %v1754
      %s1760 = scalar_lea.vmem [#allocation2], 288
      %v1761 = vld [vmem:[%s1760] sm:$0xff]
      %v1762 = vld [vmem:[%s1760 + $0x8] sm:$0xff]
      %v1763 = vld [vmem:[%s1760 + $0x10] sm:$0xff]
      %v1764 = vld [vmem:[%s1760 + $0x18] sm:$0xff]
      %v1765 = vld [vmem:[%s1760 + $0x20] sm:$0xff]
      %v1766 = vld [vmem:[%s1760 + $0x28] sm:$0xff]
      %1767 = vmatprep.subr.bf16.mxu0 %v744
      %1768 = vmatpush1.bf16.msra.mxu0 %v743
      %1769 = vmatprep.subr.bf16.mxu0 %v747
      %1770 = vmatpush1.bf16.msra.mxu0 %v746
      %1771 = vmatprep.subr.bf16.mxu0 %v750
      %1772 = vmatpush1.bf16.msra.mxu0 %v749
      %1773 = vmatprep.subr.bf16.mxu0 %v753
      %1774 = vmatpush1.bf16.msra.mxu0 %v752
      %1775 = vmatprep.subr.bf16.mxu0 %v756
      %1776 = vmatpush1.bf16.msra.mxu0 %v755
      %1777 = vmatprep.subr.bf16.mxu0 %v759
      %1778 = vmatpush1.bf16.msra.mxu0 %v758
      %1779 = vmatprep.subr.bf16.mxu0 %v762
      %1780 = vmatpush1.bf16.msra.mxu0 %v761
      %1781 = vmatprep.subr.bf16.mxu0 %v765
      %1782 = vmatpush1.bf16.msra.mxu0 %v764
      %1783 = vmatprep.subr.bf16.mxu0 0
      %1784 = vmatpush1.bf16.msra.mxu0 0
      %1785 = vmatprep.subr.bf16.mxu0 0
      %1786 = vmatpush1.bf16.msra.mxu0 0
      %1787 = vmatprep.subr.bf16.mxu0 0
      %1788 = vmatpush1.bf16.msra.mxu0 0
      %1789 = vmatprep.subr.bf16.mxu0 0
      %1790 = vmatpush1.bf16.msra.mxu0 0
      %1791 = vmatprep.subr.bf16.mxu0 0
      %1792 = vmatpush1.bf16.msra.mxu0 0
      %1793 = vmatprep.subr.bf16.mxu0 0
      %1794 = vmatpush1.bf16.msra.mxu0 0
      %1795 = vmatprep.subr.bf16.mxu0 0
      %1796 = vmatpush1.bf16.msra.mxu0 0
      %1797 = vmatprep.subr.bf16.mxu0 0
      %1798 = vmatpush1.bf16.msra.mxu0 0
      %1799 = vmatprep.mubr.bf16.mxu0 0
      %1800 = vmatmul.mubr.bf16.gmra.mrb[0].mxu0 %v1749
      %v1801 = vpop.f32.mrb[0].mxu0
      %v1802 = vadd.f32 0.0, %v1801
      %v1803 = vpop.f32.mrb[0].mxu0
      %v1804 = vadd.f32 0.0, %v1803
      %v1805 = vpop.f32.mrb[0].mxu0
      %v1806 = vadd.f32 0.0, %v1805
      %v1807 = vpop.f32.mrb[0].mxu0
      %v1808 = vadd.f32 0.0, %v1807
      %1809 = vdwg.mxu0
      %1810 = vmatprep.subr.bf16.mxu0 0
      %1811 = vmatpush1.bf16.msra.mxu0 %v745
      %1812 = vmatprep.subr.bf16.mxu0 0
      %1813 = vmatpush1.bf16.msra.mxu0 %v748
      %1814 = vmatprep.subr.bf16.mxu0 0
      %1815 = vmatpush1.bf16.msra.mxu0 %v751
      %1816 = vmatprep.subr.bf16.mxu0 0
      %1817 = vmatpush1.bf16.msra.mxu0 %v754
      %1818 = vmatprep.subr.bf16.mxu0 0
      %1819 = vmatpush1.bf16.msra.mxu0 %v757
      %1820 = vmatprep.subr.bf16.mxu0 0
      %1821 = vmatpush1.bf16.msra.mxu0 %v760
      %1822 = vmatprep.subr.bf16.mxu0 0
      %1823 = vmatpush1.bf16.msra.mxu0 %v763
      %1824 = vmatprep.subr.bf16.mxu0 0
      %1825 = vmatpush1.bf16.msra.mxu0 %v766
      %1826 = vmatprep.subr.bf16.mxu0 0
      %1827 = vmatpush1.bf16.msra.mxu0 0
      %1828 = vmatprep.subr.bf16.mxu0 0
      %1829 = vmatpush1.bf16.msra.mxu0 0
      %1830 = vmatprep.subr.bf16.mxu0 0
      %1831 = vmatpush1.bf16.msra.mxu0 0
      %1832 = vmatprep.subr.bf16.mxu0 0
      %1833 = vmatpush1.bf16.msra.mxu0 0
      %1834 = vmatprep.subr.bf16.mxu0 0
      %1835 = vmatpush1.bf16.msra.mxu0 0
      %1836 = vmatprep.subr.bf16.mxu0 0
      %1837 = vmatpush1.bf16.msra.mxu0 0
      %1838 = vmatprep.subr.bf16.mxu0 0
      %1839 = vmatpush1.bf16.msra.mxu0 0
      %1840 = vmatprep.subr.bf16.mxu0 0
      %1841 = vmatpush1.bf16.msra.mxu0 0
      %1842 = vmatprep.mubr.bf16.mxu0 0
      %1843 = vmatmul.mubr.bf16.gmra.mrb[0].mxu0 %v1749
      %v1844 = vpop.f32.mrb[0].mxu0
      %v1845 = vadd.f32 0.0, %v1844
      %v1846 = vpop.f32.mrb[0].mxu0
      %v1847 = vpop.f32.mrb[0].mxu0
      %v1848 = vadd.f32 0.0, %v1847
      %v1849 = vpop.f32.mrb[0].mxu0
      %1850 = vdwg.mxu0
      %v1851 = vadd.f32 %v1761, %v1802
      %v1852 = vadd.f32 %v1764, %v1806
      %v1853 = vxor.u32 %v1851, 2147483648
      %v1854 = vxor.u32 %v1852, 2147483648
      %v1855 = vmul.f32 %v1853, 1.442695
      %v1856 = vpow.pop %v1855
      %v1857 = vmul.f32 %v1854, 1.442695
      %v1858 = vpow.pop %v1857
      %v1859 = vadd.f32 %v1856, 1.0
      %v1860 = vadd.f32 %v1858, 1.0
      %v1861 = vrcp.pop %v1859
      %v1862 = vmul.f32 1.0, %v1861
      %v1863 = vrcp.pop %v1860
      %v1864 = vmul.f32 1.0, %v1863
      %v1865 = vadd.f32 %v1762, %v1804
      %v1866 = vadd.f32 %v1765, %v1808
      %v1867 = vxor.u32 %v1865, 2147483648
      %v1868 = vxor.u32 %v1866, 2147483648
      %v1869 = vmul.f32 %v1867, 1.442695
      %v1870 = vpow.pop %v1869
      %v1871 = vmul.f32 %v1868, 1.442695
      %v1872 = vpow.pop %v1871
      %v1873 = vadd.f32 %v1870, 1.0
      %v1874 = vadd.f32 %v1872, 1.0
      %v1875 = vrcp.pop %v1873
      %v1876 = vmul.f32 1.0, %v1875
      %v1877 = vrcp.pop %v1874
      %v1878 = vmul.f32 1.0, %v1877
      %v1879 = vadd.f32 %v1845, %v907
      %v1880 = vadd.f32 %v1848, %v907
      %v1881 = vmul.f32 %v1862, %v1879
      %v1882 = vmul.f32 %v1864, %v1880
      %v1883 = vadd.f32 %v1763, %v1881
      %v1884 = vadd.f32 %v1766, %v1882
      %v1885 = vtanh.pop %v1883
      %v1886 = vtanh.pop %v1884
      %v1887 = vsub.f32 1.0, %v1876
      %v1888 = vsub.f32 1.0, %v1878
      %v1889 = vmul.f32 %v1887, %v1885
      %v1890 = vmul.f32 %v1888, %v1886
      %v1891 = vmul.f32 %v1876, %v1747
      %v1892 = vmul.f32 %v1878, %v1748
      %v1893 = vadd.f32 %v1889, %v1891
      %v1894 = vadd.f32 %v1890, %v1892
      %s1895 = sadd.s32 %s108, 6
      %v1896 = vstv %s1895
      %vm1897 = vcmp.lt.s32.totalorder %v1896, %v619
      %vm1898 = vcmp.lt.s32.totalorder %v1896, %v620
      %v1899 = vsel %vm1897, 1, 0
      %v1900 = vsel %vm1898, 1, 0
      %1901 = vset.pattern.permute.xlu0 0
      %1902 = vperm.xlu0 %1901, %v1899
      %v1903 = vpop.permute.xlu0 %1902
      %1904 = vset.pattern.permute.xlu0 0
      %1905 = vperm.xlu0 %1904, %v1900
      %v1906 = vpop.permute.xlu0 %1905
      %vm1907 = vcmp.eq.s32.totalorder %v1903, 1
      %vm1908 = vcmp.eq.s32.totalorder %v1906, 1
      %v1909 = vsel %vm1907, %v1893, %v1747
      %v1910 = vsel %vm1908, %v1894, %v1748
      %v1911 = vpack.c.bf16 %v1910, %v1909
      %v1913 = vunpack.c.l.b16 %v1911
      %v1914 = vunpack.c.h.b16 %v1911
      %v1915 = vpack.c.b16 %v1913, %v1913
      %v1916 = vpack.c.b16 %v1914, %v1914
      %s1919 = scalar_lea.vmem [#allocation17], 48
      %1920 = vst [vmem:[%s1919] sm:$0xf] %v1915
      %1921 = vst [vmem:[%s1919 + $0x4] sm:$0xf] %v1916
      %s1922 = scalar_lea.vmem [#allocation2], 336
      %v1923 = vld [vmem:[%s1922] sm:$0xff]
      %v1924 = vld [vmem:[%s1922 + $0x8] sm:$0xff]
      %v1925 = vld [vmem:[%s1922 + $0x10] sm:$0xff]
      %v1926 = vld [vmem:[%s1922 + $0x18] sm:$0xff]
      %v1927 = vld [vmem:[%s1922 + $0x20] sm:$0xff]
      %v1928 = vld [vmem:[%s1922 + $0x28] sm:$0xff]
      %1929 = vmatprep.subr.bf16.mxu0 %v744
      %1930 = vmatpush1.bf16.msra.mxu0 %v743
      %1931 = vmatprep.subr.bf16.mxu0 %v747
      %1932 = vmatpush1.bf16.msra.mxu0 %v746
      %1933 = vmatprep.subr.bf16.mxu0 %v750
      %1934 = vmatpush1.bf16.msra.mxu0 %v749
      %1935 = vmatprep.subr.bf16.mxu0 %v753
      %1936 = vmatpush1.bf16.msra.mxu0 %v752
      %1937 = vmatprep.subr.bf16.mxu0 %v756
      %1938 = vmatpush1.bf16.msra.mxu0 %v755
      %1939 = vmatprep.subr.bf16.mxu0 %v759
      %1940 = vmatpush1.bf16.msra.mxu0 %v758
      %1941 = vmatprep.subr.bf16.mxu0 %v762
      %1942 = vmatpush1.bf16.msra.mxu0 %v761
      %1943 = vmatprep.subr.bf16.mxu0 %v765
      %1944 = vmatpush1.bf16.msra.mxu0 %v764
      %1945 = vmatprep.subr.bf16.mxu0 0
      %1946 = vmatpush1.bf16.msra.mxu0 0
      %1947 = vmatprep.subr.bf16.mxu0 0
      %1948 = vmatpush1.bf16.msra.mxu0 0
      %1949 = vmatprep.subr.bf16.mxu0 0
      %1950 = vmatpush1.bf16.msra.mxu0 0
      %1951 = vmatprep.subr.bf16.mxu0 0
      %1952 = vmatpush1.bf16.msra.mxu0 0
      %1953 = vmatprep.subr.bf16.mxu0 0
      %1954 = vmatpush1.bf16.msra.mxu0 0
      %1955 = vmatprep.subr.bf16.mxu0 0
      %1956 = vmatpush1.bf16.msra.mxu0 0
      %1957 = vmatprep.subr.bf16.mxu0 0
      %1958 = vmatpush1.bf16.msra.mxu0 0
      %1959 = vmatprep.subr.bf16.mxu0 0
      %1960 = vmatpush1.bf16.msra.mxu0 0
      %1961 = vmatprep.mubr.bf16.mxu0 0
      %1962 = vmatmul.mubr.bf16.gmra.mrb[0].mxu0 %v1911
      %v1963 = vpop.f32.mrb[0].mxu0
      %v1964 = vadd.f32 0.0, %v1963
      %v1965 = vpop.f32.mrb[0].mxu0
      %v1966 = vadd.f32 0.0, %v1965
      %v1967 = vpop.f32.mrb[0].mxu0
      %v1968 = vadd.f32 0.0, %v1967
      %v1969 = vpop.f32.mrb[0].mxu0
      %v1970 = vadd.f32 0.0, %v1969
      %1971 = vdwg.mxu0
      %1972 = vmatprep.subr.bf16.mxu0 0
      %1973 = vmatpush1.bf16.msra.mxu0 %v745
      %1974 = vmatprep.subr.bf16.mxu0 0
      %1975 = vmatpush1.bf16.msra.mxu0 %v748
      %1976 = vmatprep.subr.bf16.mxu0 0
      %1977 = vmatpush1.bf16.msra.mxu0 %v751
      %1978 = vmatprep.subr.bf16.mxu0 0
      %1979 = vmatpush1.bf16.msra.mxu0 %v754
      %1980 = vmatprep.subr.bf16.mxu0 0
      %1981 = vmatpush1.bf16.msra.mxu0 %v757
      %1982 = vmatprep.subr.bf16.mxu0 0
      %1983 = vmatpush1.bf16.msra.mxu0 %v760
      %1984 = vmatprep.subr.bf16.mxu0 0
      %1985 = vmatpush1.bf16.msra.mxu0 %v763
      %1986 = vmatprep.subr.bf16.mxu0 0
      %1987 = vmatpush1.bf16.msra.mxu0 %v766
      %1988 = vmatprep.subr.bf16.mxu0 0
      %1989 = vmatpush1.bf16.msra.mxu0 0
      %1990 = vmatprep.subr.bf16.mxu0 0
      %1991 = vmatpush1.bf16.msra.mxu0 0
      %1992 = vmatprep.subr.bf16.mxu0 0
      %1993 = vmatpush1.bf16.msra.mxu0 0
      %1994 = vmatprep.subr.bf16.mxu0 0
      %1995 = vmatpush1.bf16.msra.mxu0 0
      %1996 = vmatprep.subr.bf16.mxu0 0
      %1997 = vmatpush1.bf16.msra.mxu0 0
      %1998 = vmatprep.subr.bf16.mxu0 0
      %1999 = vmatpush1.bf16.msra.mxu0 0
      %2000 = vmatprep.subr.bf16.mxu0 0
      %2001 = vmatpush1.bf16.msra.mxu0 0
      %2002 = vmatprep.subr.bf16.mxu0 0
      %2003 = vmatpush1.bf16.msra.mxu0 0
      %2004 = vmatprep.mubr.bf16.mxu0 0
      %2005 = vmatmul.mubr.bf16.gmra.mrb[0].mxu0 %v1911
      %v2006 = vpop.f32.mrb[0].mxu0
      %v2007 = vadd.f32 0.0, %v2006
      %v2008 = vpop.f32.mrb[0].mxu0
      %v2009 = vpop.f32.mrb[0].mxu0
      %v2010 = vadd.f32 0.0, %v2009
      %v2011 = vpop.f32.mrb[0].mxu0
      %2012 = vdwg.mxu0
      %v2013 = vadd.f32 %v1923, %v1964
      %v2014 = vadd.f32 %v1926, %v1968
      %v2015 = vxor.u32 %v2013, 2147483648
      %v2016 = vxor.u32 %v2014, 2147483648
      %v2017 = vmul.f32 %v2015, 1.442695
      %v2018 = vpow.pop %v2017
      %v2019 = vmul.f32 %v2016, 1.442695
      %v2020 = vpow.pop %v2019
      %v2021 = vadd.f32 %v2018, 1.0
      %v2022 = vadd.f32 %v2020, 1.0
      %v2023 = vrcp.pop %v2021
      %v2024 = vmul.f32 1.0, %v2023
      %v2025 = vrcp.pop %v2022
      %v2026 = vmul.f32 1.0, %v2025
      %v2027 = vadd.f32 %v1924, %v1966
      %v2028 = vadd.f32 %v1927, %v1970
      %v2029 = vxor.u32 %v2027, 2147483648
      %v2030 = vxor.u32 %v2028, 2147483648
      %v2031 = vmul.f32 %v2029, 1.442695
      %v2032 = vpow.pop %v2031
      %v2033 = vmul.f32 %v2030, 1.442695
      %v2034 = vpow.pop %v2033
      %v2035 = vadd.f32 %v2032, 1.0
      %v2036 = vadd.f32 %v2034, 1.0
      %v2037 = vrcp.pop %v2035
      %v2038 = vmul.f32 1.0, %v2037
      %v2039 = vrcp.pop %v2036
      %v2040 = vmul.f32 1.0, %v2039
      %v2041 = vadd.f32 %v2007, %v907
      %v2042 = vadd.f32 %v2010, %v907
      %v2043 = vmul.f32 %v2024, %v2041
      %v2044 = vmul.f32 %v2026, %v2042
      %v2045 = vadd.f32 %v1925, %v2043
      %v2046 = vadd.f32 %v1928, %v2044
      %v2047 = vtanh.pop %v2045
      %v2048 = vtanh.pop %v2046
      %v2049 = vsub.f32 1.0, %v2038
      %v2050 = vsub.f32 1.0, %v2040
      %v2051 = vmul.f32 %v2049, %v2047
      %v2052 = vmul.f32 %v2050, %v2048
      %v2053 = vmul.f32 %v2038, %v1909
      %v2054 = vmul.f32 %v2040, %v1910
      %v2055 = vadd.f32 %v2051, %v2053
      %v2056 = vadd.f32 %v2052, %v2054
      %s2057 = sadd.s32 %s108, 7
      %v2058 = vstv %s2057
      %vm2059 = vcmp.lt.s32.totalorder %v2058, %v619
      %vm2060 = vcmp.lt.s32.totalorder %v2058, %v620
      %v2061 = vsel %vm2059, 1, 0
      %v2062 = vsel %vm2060, 1, 0
      %2063 = vset.pattern.permute.xlu0 0
      %2064 = vperm.xlu0 %2063, %v2061
      %v2065 = vpop.permute.xlu0 %2064
      %2066 = vset.pattern.permute.xlu0 0
      %2067 = vperm.xlu0 %2066, %v2062
      %v2068 = vpop.permute.xlu0 %2067
      %vm2069 = vcmp.eq.s32.totalorder %v2065, 1
      %vm2070 = vcmp.eq.s32.totalorder %v2068, 1
      %v2071 = vsel %vm2069, %v2055, %v1909
      %v2072 = vsel %vm2070, %v2056, %v1910
      %v2073 = vpack.c.bf16 %v2072, %v2071
      %v2075 = vunpack.c.l.b16 %v2073
      %v2076 = vunpack.c.h.b16 %v2073
      %v2077 = vpack.c.b16 %v2075, %v2075
      %v2078 = vpack.c.b16 %v2076, %v2076
      %s2081 = scalar_lea.vmem [#allocation17], 56
      %2082 = vst [vmem:[%s2081] sm:$0xf] %v2077
      %2083 = vst [vmem:[%s2081 + $0x4] sm:$0xf] %v2078
      %2084 = vst [vmem:[#allocation3] sm:$0xff] %v2071
      %2085 = vst [vmem:[#allocation3 + $0x8] sm:$0xff] %v2072
    $region57: #{encoder_forward.3} parent=1 // pred_fallthru
      _
    %p2086 = scmp.ge.s32.totalorder %s108, %s115
    // Predicated region
    $region58: #{encoder_forward.3} parent=1 // pred_check
      %p2087 = pneg %p2086
    $region59: #{encoder_forward.3} parent=1 // pred_check_branch
      %2089 = sbr.rel (%p2087) target = $region61
    $region60: #{encoder_forward.3} parent=1 // pred_region
      %2090 = vst [vmem:[#allocation17] sm:$0xf] 0
      %2091 = vst [vmem:[#allocation17 + $0x4] sm:$0xf] 0
      %2092 = vst [vmem:[#allocation17 + $0x8] sm:$0xf] 0
      %2093 = vst [vmem:[#allocation17 + $0xc] sm:$0xf] 0
      %2094 = vst [vmem:[#allocation17 + $0x10] sm:$0xf] 0
      %2095 = vst [vmem:[#allocation17 + $0x14] sm:$0xf] 0
      %2096 = vst [vmem:[#allocation17 + $0x18] sm:$0xf] 0
      %2097 = vst [vmem:[#allocation17 + $0x1c] sm:$0xf] 0
      %2098 = vst [vmem:[#allocation17 + $0x20] sm:$0xf] 0
      %2099 = vst [vmem:[#allocation17 + $0x24] sm:$0xf] 0
      %2100 = vst [vmem:[#allocation17 + $0x28] sm:$0xf] 0
      %2101 = vst [vmem:[#allocation17 + $0x2c] sm:$0xf] 0
      %2102 = vst [vmem:[#allocation17 + $0x30] sm:$0xf] 0
      %2103 = vst [vmem:[#allocation17 + $0x34] sm:$0xf] 0
      %2104 = vst [vmem:[#allocation17 + $0x38] sm:$0xf] 0
      %2105 = vst [vmem:[#allocation17 + $0x3c] sm:$0xf] 0
    $region61: #{encoder_forward.3} parent=1 // pred_fallthru
      _
    // Predicated region
    $region62: #{encoder_forward.3} parent=1 // pred_check
      %p2106 = pneg %p109
    $region63: #{encoder_forward.3} parent=1 // pred_check_branch
      %2108 = sbr.rel (%p2106) target = $region65
    $region64: #{encoder_forward.3} parent=1 // pred_region
      %v2109 = vld [vmem:[#allocation3] sm:$0xff]
      %v2110 = vld [vmem:[#allocation3 + $0x8] sm:$0xff]
      %2111 = vst [vmem:[#allocation18] sm:$0xff] %v2109
      %2112 = vst [vmem:[#allocation18 + $0x8] sm:$0xff] %v2110
    $region65: #{encoder_forward.3} parent=1 // pred_fallthru
      _
    // Predicated region
    $region66: #{encoder_forward.3} parent=1 // pred_check
      _
    $region67: #{encoder_forward.3} parent=1 // pred_check_branch
      %2114 = sbr.rel (0) target = $region69
    $region68: #{encoder_forward.3} parent=1 // pred_region
      %s2116 = ssub.s32 1024, 1024
      %2117 = vsyncadd [#allocation8], %s2116
      %s2118 = sshll.u32 [#allocation17], 4
      %s2119 = int_to_ptr.vmem [resolvable:$true] %s2118
      %2124 = dma.vmem_to_hbm [thread:$0]  %s2119, 1024, %s7, [#allocation8], 64, 64, 4
    $region69: #{encoder_forward.3} parent=1 // pred_fallthru
      _
    // Predicated region
    $region70: #{encoder_forward.3} parent=1 // pred_check
      _
    $region71: #{encoder_forward.3} parent=1 // pred_check_branch
      %2126 = sbr.rel (0) target = $region73
    $region72: #{encoder_forward.3} parent=1 // pred_region
      %s2128 = ssub.s32 256, 256
      %2129 = vsyncadd [#allocation19], %s2128
      %s2130 = sshll.u32 [#allocation18], 4
      %s2131 = int_to_ptr.vmem [resolvable:$true] %s2130
      %2136 = dma.vmem_to_hbm [thread:$0]  %s2131, 256, %s8, [#allocation19], 128, 128, 8
    $region73: #{encoder_forward.3} parent=1 // pred_fallthru
      _
    // Predicated region
    $region74: #{encoder_forward.3} parent=1 // pred_check
      _
    $region75: #{encoder_forward.3} parent=1 // pred_check_branch
      %2138 = sbr.rel (0) target = $region77
    $region76: #{encoder_forward.3} parent=1 // pred_region
      %2139 = dma.done [#allocation8], 1024
    $region77: #{encoder_forward.3} parent=1 // pred_fallthru
      _
    // Predicated region
    $region78: #{encoder_forward.3} parent=1 // pred_check
      _
    $region79: #{encoder_forward.3} parent=1 // pred_check_branch
      %2141 = sbr.rel (0) target = $region81
    $region80: #{encoder_forward.3} parent=1 // pred_region
      %2142 = dma.done [#allocation19], 256
    $region81: #{encoder_forward.3} parent=1 // pred_fallthru
      _
    %2143 = vsyncpa [#allocation7], 1
    %2144 = vsyncpa [#allocation10], 1
    %2145 = vsyncpa [#allocation13], 1
    %2146 = vsyncpa [#allocation16], 1
    %2147 = vsyncpa [#allocation8], 1
    %2148 = vsyncpa [#allocation19], 1

</llo_original>
